<compile_context>
chip_gen: v7x
topology: tpu7x:2x2x1
jax: 0.10.0
libtpu: 0.0.40
codegen_flags: <defaults>
</compile_context>

<pallas_src>
import math
import jax
import jax.numpy as jnp
from jax.experimental import pallas as pl
from jax.experimental.pallas import tpu as pltpu

# ---------------- synthetic BERT config (small, deterministic) ----------------
VOCAB = 50
TYPE_VOCAB = 2
MAX_POS = 16
HIDDEN = 32
NUM_HEADS = 4
HEAD_DIM = HIDDEN // NUM_HEADS
FFN = 64
NUM_LAYERS = 2
NUM_CLASSES = 2
LN_EPS = 1e-12


# ------------------------------- fused kernel ---------------------------------
def bert_fused_kernel(valid_ref,                       # SMEM (B,) int32 [scalar prefetch]
                      x_ref,                           # (1, S, H) f32 summed embeddings
                      emb_g_ref, emb_b_ref,            # (1, H) f32 x2
                      qkv_w_ref, qkv_b_ref,            # (L, H, 3H) bf16, (L, 1, 3H) f32
                      wo_ref, bo_ref,                  # (L, NH, hd, H) bf16, (L, 1, H) f32
                      ln1_g_ref, ln1_b_ref,            # (L, 1, H) f32 x2
                      w1_ref, b1_ref,                  # (L, H, F) bf16, (L, 1, F) f32
                      w2_ref, b2_ref,                  # (L, F, H) bf16, (L, 1, H) f32
                      ln2_g_ref, ln2_b_ref,            # (L, 1, H) f32 x2
                      pool_w_ref, pool_b_ref,          # (H, H) bf16, (1, H) f32
                      cls_w_ref, cls_b_ref,            # (H, C) bf16, (1, C) f32
                      out_ref):                        # (1, 1, C) f32
    b = pl.program_id(0)
    S = x_ref.shape[1]
    H = x_ref.shape[2]
    L = qkv_w_ref.shape[0]
    NH = NUM_HEADS
    hd = H // NH
    bf16 = jnp.bfloat16
    f32 = jnp.float32

    def layernorm(v, g, beta):
        mu = jnp.mean(v, axis=-1, keepdims=True)
        var = jnp.mean((v - mu) ** 2, axis=-1, keepdims=True)
        return (v - mu) * jax.lax.rsqrt(var + LN_EPS) * g + beta

    # ---- additive key-padding bias (1, 1, S) from the SMEM valid_length scalar.
    # (valid_length >= 1 assumed; fully-masked rows are out of contract.)
    kpos = jax.lax.broadcasted_iota(jnp.int32, (1, 1, S), 2)
    bias = jnp.where(kpos < valid_ref[b], 0.0, -1e9).astype(f32)

    # ---- embedding LayerNorm (LN-only path, no residual) ----
    x = layernorm(x_ref[0], emb_g_ref[...], emb_b_ref[...])           # (S, H) f32

    # ---- encoder layers, fully unrolled; activations never leave the chip ----
    for l in range(L):
        # fused QKV projection; 1/sqrt(hd) is folded into the Q weights at init
        qkv = jnp.dot(x.astype(bf16), qkv_w_ref[l],
                      preferred_element_type=f32) + qkv_b_ref[l]      # (S, 3H)
        # head-batched layout (3*NH, S, hd): one relayout instead of 12 lane slices
        qkv_h = pltpu.einshape("sgd->gsd", qkv.reshape(S, 3 * NH, hd))
        q3 = qkv_h[0:NH].astype(bf16)                                 # (NH, S, hd)
        k3 = qkv_h[NH:2 * NH].astype(bf16)
        v3 = qkv_h[2 * NH:3 * NH].astype(bf16)

        # batched q.k^T over heads (no cross-batch work, no per-head loop)
        s = jax.lax.dot_general(q3, k3, (((2,), (2,)), ((0,), (0,))),
                                preferred_element_type=f32)           # (NH, S, S)
        p = jnp.exp(s + bias)                     # masked keys -> exp(-1e9) == 0
        p = p * pl.reciprocal(jnp.sum(p, axis=-1, keepdims=True), approx=True)
        ctx = jax.lax.dot_general(p.astype(bf16), v3,
                                  (((2,), (1,)), ((0,), (0,))),
                                  preferred_element_type=f32)         # (NH, S, hd)

        # output projection: batched (NH, S, hd) @ (NH, hd, H), merge = sum over heads
        proj = jax.lax.dot_general(ctx.astype(bf16), wo_ref[l],
                                   (((2,), (1,)), ((0,), (0,))),
                                   preferred_element_type=f32)        # (NH, S, H)
        attn = jnp.sum(proj, axis=0) + bo_ref[l]
        x = layernorm(x + attn, ln1_g_ref[l], ln1_b_ref[l])

        # feed-forward (tanh-approx GELU; elementwise math stays f32)
        hdn = jnp.dot(x.astype(bf16), w1_ref[l],
                      preferred_element_type=f32) + b1_ref[l]
        hdn = jax.nn.gelu(hdn, approximate=True)
        ffo = jnp.dot(hdn.astype(bf16), w2_ref[l],
                      preferred_element_type=f32) + b2_ref[l]
        x = layernorm(x + ffo, ln2_g_ref[l], ln2_b_ref[l])

    # ---- pooler on the [CLS] row (static row 0 of this batch's block) ----
    cls_tok = x[0:1, :]                                               # (1, H)
    pooled = jnp.tanh(jnp.dot(cls_tok.astype(bf16), pool_w_ref[...],
                              preferred_element_type=f32) + pool_b_ref[...])

    # dropout(dr_rate) is identity at inference (eval mode)
    # (output last dim is NUM_CLASSES=2 -> masked store; 16 B payload, low priority)
    logits = jnp.dot(pooled.astype(bf16), cls_w_ref[...],
                     preferred_element_type=f32) + cls_b_ref[...]     # (1, C)
    out_ref[0] = logits


# --------------------------------- wrapper ------------------------------------
@jax.jit
def bert_classifier_forward(params, token_ids, valid_length, segment_ids):
    B, S = token_ids.shape

    # TODO(synk): embedding table gathers stay in plain-JAX glue (no clean
    # Pallas gather path worth it at tiny vocab sizes); everything downstream
    # runs in the single fused Pallas kernel.
    x = (params["word_emb"][token_ids]
         + params["pos_emb"][jnp.arange(S)][None, :, :]
         + params["type_emb"][segment_ids])                           # (B, S, H) f32

    bf16 = jnp.bfloat16
    # MXU weights in bf16; Wo pre-reshaped to per-head (NH, hd, H) blocks.
    qkv_w = params["qkv_w"].astype(bf16)
    wo_h = params["wo"].reshape(NUM_LAYERS, NUM_HEADS, HEAD_DIM, HIDDEN).astype(bf16)
    w1 = params["w1"].astype(bf16)
    w2 = params["w2"].astype(bf16)
    pool_w = params["pool_w"].astype(bf16)
    cls_w = params["cls_w"].astype(bf16)

    in_arrays = [
        x,
        params["emb_ln_g"], params["emb_ln_b"],
        qkv_w, params["qkv_b"],
        wo_h, params["bo"],
        params["ln1_g"], params["ln1_b"],
        w1, params["b1"],
        w2, params["b2"],
        params["ln2_g"], params["ln2_b"],
        pool_w, params["pool_b"],
        cls_w, params["cls_b"],
    ]

    def _full(shape):
        nd = len(shape)
        return pl.BlockSpec(shape, lambda b, *_: (0,) * nd)

    in_specs = [pl.BlockSpec((1, S, HIDDEN), lambda b, *_: (b, 0, 0))]
    in_specs += [_full(a.shape) for a in in_arrays[1:]]

    grid_spec = pltpu.PrefetchScalarGridSpec(
        num_scalar_prefetch=1,                 # valid_length -> SMEM
        grid=(B,),                             # batch axis -> both TCs on v7x
        in_specs=in_specs,
        out_specs=pl.BlockSpec((1, 1, NUM_CLASSES), lambda b, *_: (b, 0, 0)),
    )

    logits = pl.pallas_call(
        bert_fused_kernel,
        grid_spec=grid_spec,
        out_shape=jax.ShapeDtypeStruct((B, 1, NUM_CLASSES), jnp.float32),
        compiler_params=pltpu.CompilerParams(
            dimension_semantics=("parallel",)),
    )(valid_length.astype(jnp.int32), *in_arrays)
    return logits.reshape(B, NUM_CLASSES)


# ------------------------------ parameter init --------------------------------
def init_params(key):
    def dense(key, fan_in, fan_out):
        return 0.02 * jax.random.normal(key, (fan_in, fan_out), jnp.float32)

    keys = iter(jax.random.split(key, 64))
    L, H, F, C = NUM_LAYERS, HIDDEN, FFN, NUM_CLASSES
    p = {
        "word_emb": 0.02 * jax.random.normal(next(keys), (VOCAB, H), jnp.float32),
        "pos_emb": 0.02 * jax.random.normal(next(keys), (MAX_POS, H), jnp.float32),
        "type_emb": 0.02 * jax.random.normal(next(keys), (TYPE_VOCAB, H), jnp.float32),
        "emb_ln_g": jnp.ones((1, H), jnp.float32),
        "emb_ln_b": jnp.zeros((1, H), jnp.float32),
    }
    qkv_w, wo, w1, w2 = [], [], [], []
    inv_sqrt_hd = 1.0 / math.sqrt(HEAD_DIM)
    for _ in range(L):
        # 1/sqrt(head_dim) attention scale folded into the Q projection (free).
        wq = dense(next(keys), H, H) * inv_sqrt_hd
        wk = dense(next(keys), H, H)
        wv = dense(next(keys), H, H)
        qkv_w.append(jnp.concatenate([wq, wk, wv], axis=1))   # fused QKV weight
        wo.append(dense(next(keys), H, H))
        w1.append(dense(next(keys), H, F))
        w2.append(dense(next(keys), F, H))
    p["qkv_w"] = jnp.stack(qkv_w)                             # (L, H, 3H)
    p["qkv_b"] = jnp.zeros((L, 1, 3 * H), jnp.float32)
    p["wo"] = jnp.stack(wo)                                   # (L, H, H)
    p["bo"] = jnp.zeros((L, 1, H), jnp.float32)
    p["ln1_g"] = jnp.ones((L, 1, H), jnp.float32)
    p["ln1_b"] = jnp.zeros((L, 1, H), jnp.float32)
    p["w1"] = jnp.stack(w1)
    p["b1"] = jnp.zeros((L, 1, F), jnp.float32)
    p["w2"] = jnp.stack(w2)
    p["b2"] = jnp.zeros((L, 1, H), jnp.float32)
    p["ln2_g"] = jnp.ones((L, 1, H), jnp.float32)
    p["ln2_b"] = jnp.zeros((L, 1, H), jnp.float32)
    p["pool_w"] = dense(next(keys), H, H)
    p["pool_b"] = jnp.zeros((1, H), jnp.float32)
    p["cls_w"] = dense(next(keys), H, C)
    p["cls_b"] = jnp.zeros((1, C), jnp.float32)
    return p


# ----------------------------------- main --------------------------------------
if __name__ == "__main__":
    key = jax.random.PRNGKey(0)
    k_tok, k_seg, k_par = jax.random.split(key, 3)

    B, S = 2, 8
    token_ids = jax.random.randint(k_tok, (B, S), 0, VOCAB, dtype=jnp.int32)
    segment_ids = jax.random.randint(k_seg, (B, S), 0, TYPE_VOCAB, dtype=jnp.int32)
    valid_length = jnp.array([5, 8], dtype=jnp.int32)   # >= 1 per kernel contract

    params = init_params(k_par)

    logits = bert_classifier_forward(params, token_ids, valid_length, segment_ids)
    logits = jax.block_until_ready(logits)
    assert logits.shape == (B, NUM_CLASSES)
    print("KERNEL_OK")
</pallas_src>

<mosaic_0001>
module attributes {stable_mosaic.version = 11 : i64} {
  func.func @bert_fused_kernel(%arg0: i32, %arg1: memref<2xi32, #tpu.memory_space<smem>>, %arg2: memref<1x8x32xf32, #tpu.memory_space<vmem>>, %arg3: memref<1x32xf32, #tpu.memory_space<vmem>>, %arg4: memref<1x32xf32, #tpu.memory_space<vmem>>, %arg5: memref<2x32x96xbf16, #tpu.memory_space<vmem>>, %arg6: memref<2x1x96xf32, #tpu.memory_space<vmem>>, %arg7: memref<2x4x8x32xbf16, #tpu.memory_space<vmem>>, %arg8: memref<2x1x32xf32, #tpu.memory_space<vmem>>, %arg9: memref<2x1x32xf32, #tpu.memory_space<vmem>>, %arg10: memref<2x1x32xf32, #tpu.memory_space<vmem>>, %arg11: memref<2x32x64xbf16, #tpu.memory_space<vmem>>, %arg12: memref<2x1x64xf32, #tpu.memory_space<vmem>>, %arg13: memref<2x64x32xbf16, #tpu.memory_space<vmem>>, %arg14: memref<2x1x32xf32, #tpu.memory_space<vmem>>, %arg15: memref<2x1x32xf32, #tpu.memory_space<vmem>>, %arg16: memref<2x1x32xf32, #tpu.memory_space<vmem>>, %arg17: memref<32x32xbf16, #tpu.memory_space<vmem>>, %arg18: memref<1x32xf32, #tpu.memory_space<vmem>>, %arg19: memref<32x2xbf16, #tpu.memory_space<vmem>>, %arg20: memref<1x2xf32, #tpu.memory_space<vmem>>, %arg21: memref<1x1x2xf32, #tpu.memory_space<vmem>>) attributes {dimension_semantics = [#tpu.dimension_semantics<parallel>], iteration_bounds = array<i64: 2>, scalar_prefetch = 1 : i64, scratch_operands = 0 : i64, tpu.core_type = #tpu.core_type<tc>, window_params = [{transform_indices = @transform_0, window_bounds = array<i64: 1, 8, 32>}, {pipeline_mode = #tpu.pipeline_mode<synchronous>, transform_indices = @transform_1, window_bounds = array<i64: 1, 32>}, {pipeline_mode = #tpu.pipeline_mode<synchronous>, transform_indices = @transform_2, window_bounds = array<i64: 1, 32>}, {pipeline_mode = #tpu.pipeline_mode<synchronous>, transform_indices = @transform_3, window_bounds = array<i64: 2, 32, 96>}, {pipeline_mode = #tpu.pipeline_mode<synchronous>, transform_indices = @transform_4, window_bounds = array<i64: 2, 1, 96>}, {pipeline_mode = #tpu.pipeline_mode<synchronous>, transform_indices = @transform_5, window_bounds = array<i64: 2, 4, 8, 32>}, {pipeline_mode = #tpu.pipeline_mode<synchronous>, transform_indices = @transform_6, window_bounds = array<i64: 2, 1, 32>}, {pipeline_mode = #tpu.pipeline_mode<synchronous>, transform_indices = @transform_7, window_bounds = array<i64: 2, 1, 32>}, {pipeline_mode = #tpu.pipeline_mode<synchronous>, transform_indices = @transform_8, window_bounds = array<i64: 2, 1, 32>}, {pipeline_mode = #tpu.pipeline_mode<synchronous>, transform_indices = @transform_9, window_bounds = array<i64: 2, 32, 64>}, {pipeline_mode = #tpu.pipeline_mode<synchronous>, transform_indices = @transform_10, window_bounds = array<i64: 2, 1, 64>}, {pipeline_mode = #tpu.pipeline_mode<synchronous>, transform_indices = @transform_11, window_bounds = array<i64: 2, 64, 32>}, {pipeline_mode = #tpu.pipeline_mode<synchronous>, transform_indices = @transform_12, window_bounds = array<i64: 2, 1, 32>}, {pipeline_mode = #tpu.pipeline_mode<synchronous>, transform_indices = @transform_13, window_bounds = array<i64: 2, 1, 32>}, {pipeline_mode = #tpu.pipeline_mode<synchronous>, transform_indices = @transform_14, window_bounds = array<i64: 2, 1, 32>}, {pipeline_mode = #tpu.pipeline_mode<synchronous>, transform_indices = @transform_15, window_bounds = array<i64: 32, 32>}, {pipeline_mode = #tpu.pipeline_mode<synchronous>, transform_indices = @transform_16, window_bounds = array<i64: 1, 32>}, {pipeline_mode = #tpu.pipeline_mode<synchronous>, transform_indices = @transform_17, window_bounds = array<i64: 32, 2>}, {pipeline_mode = #tpu.pipeline_mode<synchronous>, transform_indices = @transform_18, window_bounds = array<i64: 1, 2>}, {transform_indices = @transform_19, window_bounds = array<i64: 1, 1, 2>}]} {
    %0 = tpu.iota {dimensions = array<i32: 2>} : vector<1x1x8xi32>
    %1 = arith.index_cast %arg0 : i32 to index
    %2 = memref.load %arg1[%1] : memref<2xi32, #tpu.memory_space<smem>>
    %3 = vector.broadcast %2 : i32 to vector<1x1x8xi32>
    %4 = arith.cmpi slt, %0, %3 : vector<1x1x8xi32>
    %cst = arith.constant 0.000000e+00 : f32
    %cst_0 = arith.constant -1.000000e+09 : f32
    %5 = vector.broadcast %cst : f32 to vector<1x1x8xf32>
    %6 = vector.broadcast %cst_0 : f32 to vector<1x1x8xf32>
    %7 = arith.select %4, %5, %6 : vector<1x1x8xi1>, vector<1x1x8xf32>
    %c0 = arith.constant 0 : index
    %c0_1 = arith.constant 0 : index
    %c0_2 = arith.constant 0 : index
    %8 = vector.load %arg2[%c0, %c0_1, %c0_2] : memref<1x8x32xf32, #tpu.memory_space<vmem>>, vector<1x8x32xf32>
    %9 = vector.shape_cast %8 : vector<1x8x32xf32> to vector<8x32xf32>
    %c0_3 = arith.constant 0 : index
    %c0_4 = arith.constant 0 : index
    %10 = vector.load %arg3[%c0_3, %c0_4] : memref<1x32xf32, #tpu.memory_space<vmem>>, vector<1x32xf32>
    %c0_5 = arith.constant 0 : index
    %c0_6 = arith.constant 0 : index
    %11 = vector.load %arg4[%c0_5, %c0_6] : memref<1x32xf32, #tpu.memory_space<vmem>>, vector<1x32xf32>
    %cst_7 = arith.constant dense<0.000000e+00> : vector<8xf32>
    %12 = vector.multi_reduction <add>, %9, %cst_7 [1] : vector<8x32xf32> to vector<8xf32>
    %13 = vector.shape_cast %12 : vector<8xf32> to vector<8x1xf32>
    %cst_8 = arith.constant 3.200000e+01 : f32
    %14 = vector.broadcast %cst_8 : f32 to vector<8x1xf32>
    %15 = arith.divf %13, %14 : vector<8x1xf32>
    %16 = vector.broadcast %15 : vector<8x1xf32> to vector<8x32xf32>
    %17 = arith.subf %9, %16 : vector<8x32xf32>
    %18 = arith.mulf %17, %17 : vector<8x32xf32>
    %cst_9 = arith.constant dense<0.000000e+00> : vector<8xf32>
    %19 = vector.multi_reduction <add>, %18, %cst_9 [1] : vector<8x32xf32> to vector<8xf32>
    %20 = vector.shape_cast %19 : vector<8xf32> to vector<8x1xf32>
    %cst_10 = arith.constant 3.200000e+01 : f32
    %21 = vector.broadcast %cst_10 : f32 to vector<8x1xf32>
    %22 = arith.divf %20, %21 : vector<8x1xf32>
    %23 = vector.broadcast %15 : vector<8x1xf32> to vector<8x32xf32>
    %24 = arith.subf %9, %23 : vector<8x32xf32>
    %cst_11 = arith.constant 9.99999996E-13 : f32
    %25 = vector.broadcast %cst_11 : f32 to vector<8x1xf32>
    %26 = arith.addf %22, %25 : vector<8x1xf32>
    %27 = math.rsqrt %26 : vector<8x1xf32>
    %28 = vector.broadcast %27 : vector<8x1xf32> to vector<8x32xf32>
    %29 = arith.mulf %24, %28 : vector<8x32xf32>
    %30 = vector.broadcast %10 : vector<1x32xf32> to vector<8x32xf32>
    %31 = arith.mulf %29, %30 : vector<8x32xf32>
    %32 = vector.broadcast %11 : vector<1x32xf32> to vector<8x32xf32>
    %33 = arith.addf %31, %32 : vector<8x32xf32>
    %34 = arith.truncf %33 : vector<8x32xf32> to vector<8x32xbf16>
    %c0_12 = arith.constant 0 : index
    %c0_13 = arith.constant 0 : index
    %c0_14 = arith.constant 0 : index
    %35 = vector.load %arg5[%c0_12, %c0_13, %c0_14] : memref<2x32x96xbf16, #tpu.memory_space<vmem>>, vector<1x32x96xbf16>
    %36 = vector.shape_cast %35 : vector<1x32x96xbf16> to vector<32x96xbf16>
    %cst_15 = arith.constant dense<0.000000e+00> : vector<8x96xf32>
    %37 = tpu.matmul %34, %36, %cst_15 {dimension_numbers = #tpu.dot_dimension_numbers<[1], [0], [0], [1], [0, 0, 1, 1], [], []>} : vector<8x32xbf16>, vector<32x96xbf16>, vector<8x96xf32> -> vector<8x96xf32>
    %c0_16 = arith.constant 0 : index
    %c0_17 = arith.constant 0 : index
    %c0_18 = arith.constant 0 : index
    %38 = vector.load %arg6[%c0_16, %c0_17, %c0_18] : memref<2x1x96xf32, #tpu.memory_space<vmem>>, vector<1x1x96xf32>
    %39 = vector.shape_cast %38 : vector<1x1x96xf32> to vector<1x96xf32>
    %40 = vector.broadcast %39 : vector<1x96xf32> to vector<8x96xf32>
    %41 = arith.addf %37, %40 : vector<8x96xf32>
    %42 = vector.shape_cast %41 : vector<8x96xf32> to vector<8x12x8xf32>
    %43 = tpu.transpose %42, [1, 0, 2] : vector<8x12x8xf32> -> vector<12x8x8xf32>
    %44 = vector.extract_strided_slice %43 {offsets = [0, 0, 0], sizes = [4, 8, 8], strides = [1, 1, 1]} : vector<12x8x8xf32> to vector<4x8x8xf32>
    %45 = arith.truncf %44 : vector<4x8x8xf32> to vector<4x8x8xbf16>
    %46 = vector.extract_strided_slice %43 {offsets = [4, 0, 0], sizes = [4, 8, 8], strides = [1, 1, 1]} : vector<12x8x8xf32> to vector<4x8x8xf32>
    %47 = arith.truncf %46 : vector<4x8x8xf32> to vector<4x8x8xbf16>
    %48 = vector.extract_strided_slice %43 {offsets = [8, 0, 0], sizes = [4, 8, 8], strides = [1, 1, 1]} : vector<12x8x8xf32> to vector<4x8x8xf32>
    %49 = arith.truncf %48 : vector<4x8x8xf32> to vector<4x8x8xbf16>
    %cst_19 = arith.constant dense<0.000000e+00> : vector<4x8x8xf32>
    %50 = tpu.matmul %45, %47, %cst_19 {dimension_numbers = #tpu.dot_dimension_numbers<[2], [2], [1], [1], [0, 0, 0, 1, 1, 1], [0], [0]>} : vector<4x8x8xbf16>, vector<4x8x8xbf16>, vector<4x8x8xf32> -> vector<4x8x8xf32>
    %51 = vector.broadcast %7 : vector<1x1x8xf32> to vector<4x8x8xf32>
    %52 = arith.addf %50, %51 : vector<4x8x8xf32>
    %53 = math.exp %52 : vector<4x8x8xf32>
    %cst_20 = arith.constant dense<0.000000e+00> : vector<4x8xf32>
    %54 = vector.multi_reduction <add>, %53, %cst_20 [2] : vector<4x8x8xf32> to vector<4x8xf32>
    %55 = vector.shape_cast %54 : vector<4x8xf32> to vector<4x8x1xf32>
    %56 = tpu.reciprocal %55 {approx = true} : vector<4x8x1xf32> -> vector<4x8x1xf32>
    %57 = vector.broadcast %56 : vector<4x8x1xf32> to vector<4x8x8xf32>
    %58 = arith.mulf %53, %57 : vector<4x8x8xf32>
    %59 = arith.truncf %58 : vector<4x8x8xf32> to vector<4x8x8xbf16>
    %cst_21 = arith.constant dense<0.000000e+00> : vector<4x8x8xf32>
    %60 = tpu.matmul %59, %49, %cst_21 {dimension_numbers = #tpu.dot_dimension_numbers<[2], [1], [1], [2], [0, 0, 0, 1, 1, 2], [0], [0]>} : vector<4x8x8xbf16>, vector<4x8x8xbf16>, vector<4x8x8xf32> -> vector<4x8x8xf32>
    %61 = arith.truncf %60 : vector<4x8x8xf32> to vector<4x8x8xbf16>
    %c0_22 = arith.constant 0 : index
    %c0_23 = arith.constant 0 : index
    %c0_24 = arith.constant 0 : index
    %c0_25 = arith.constant 0 : index
    %62 = vector.load %arg7[%c0_22, %c0_23, %c0_24, %c0_25] : memref<2x4x8x32xbf16, #tpu.memory_space<vmem>>, vector<1x4x8x32xbf16>
    %63 = vector.shape_cast %62 : vector<1x4x8x32xbf16> to vector<4x8x32xbf16>
    %cst_26 = arith.constant dense<0.000000e+00> : vector<4x8x32xf32>
    %64 = tpu.matmul %61, %63, %cst_26 {dimension_numbers = #tpu.dot_dimension_numbers<[2], [1], [1], [2], [0, 0, 0, 1, 1, 2], [0], [0]>} : vector<4x8x8xbf16>, vector<4x8x32xbf16>, vector<4x8x32xf32> -> vector<4x8x32xf32>
    %cst_27 = arith.constant dense<0.000000e+00> : vector<8x32xf32>
    %65 = vector.multi_reduction <add>, %64, %cst_27 [0] : vector<4x8x32xf32> to vector<8x32xf32>
    %c0_28 = arith.constant 0 : index
    %c0_29 = arith.constant 0 : index
    %c0_30 = arith.constant 0 : index
    %66 = vector.load %arg8[%c0_28, %c0_29, %c0_30] : memref<2x1x32xf32, #tpu.memory_space<vmem>>, vector<1x1x32xf32>
    %67 = vector.shape_cast %66 : vector<1x1x32xf32> to vector<1x32xf32>
    %68 = vector.broadcast %67 : vector<1x32xf32> to vector<8x32xf32>
    %69 = arith.addf %65, %68 : vector<8x32xf32>
    %70 = arith.addf %33, %69 : vector<8x32xf32>
    %c0_31 = arith.constant 0 : index
    %c0_32 = arith.constant 0 : index
    %c0_33 = arith.constant 0 : index
    %71 = vector.load %arg9[%c0_31, %c0_32, %c0_33] : memref<2x1x32xf32, #tpu.memory_space<vmem>>, vector<1x1x32xf32>
    %72 = vector.shape_cast %71 : vector<1x1x32xf32> to vector<1x32xf32>
    %c0_34 = arith.constant 0 : index
    %c0_35 = arith.constant 0 : index
    %c0_36 = arith.constant 0 : index
    %73 = vector.load %arg10[%c0_34, %c0_35, %c0_36] : memref<2x1x32xf32, #tpu.memory_space<vmem>>, vector<1x1x32xf32>
    %74 = vector.shape_cast %73 : vector<1x1x32xf32> to vector<1x32xf32>
    %cst_37 = arith.constant dense<0.000000e+00> : vector<8xf32>
    %75 = vector.multi_reduction <add>, %70, %cst_37 [1] : vector<8x32xf32> to vector<8xf32>
    %76 = vector.shape_cast %75 : vector<8xf32> to vector<8x1xf32>
    %cst_38 = arith.constant 3.200000e+01 : f32
    %77 = vector.broadcast %cst_38 : f32 to vector<8x1xf32>
    %78 = arith.divf %76, %77 : vector<8x1xf32>
    %79 = vector.broadcast %78 : vector<8x1xf32> to vector<8x32xf32>
    %80 = arith.subf %70, %79 : vector<8x32xf32>
    %81 = arith.mulf %80, %80 : vector<8x32xf32>
    %cst_39 = arith.constant dense<0.000000e+00> : vector<8xf32>
    %82 = vector.multi_reduction <add>, %81, %cst_39 [1] : vector<8x32xf32> to vector<8xf32>
    %83 = vector.shape_cast %82 : vector<8xf32> to vector<8x1xf32>
    %cst_40 = arith.constant 3.200000e+01 : f32
    %84 = vector.broadcast %cst_40 : f32 to vector<8x1xf32>
    %85 = arith.divf %83, %84 : vector<8x1xf32>
    %86 = vector.broadcast %78 : vector<8x1xf32> to vector<8x32xf32>
    %87 = arith.subf %70, %86 : vector<8x32xf32>
    %cst_41 = arith.constant 9.99999996E-13 : f32
    %88 = vector.broadcast %cst_41 : f32 to vector<8x1xf32>
    %89 = arith.addf %85, %88 : vector<8x1xf32>
    %90 = math.rsqrt %89 : vector<8x1xf32>
    %91 = vector.broadcast %90 : vector<8x1xf32> to vector<8x32xf32>
    %92 = arith.mulf %87, %91 : vector<8x32xf32>
    %93 = vector.broadcast %72 : vector<1x32xf32> to vector<8x32xf32>
    %94 = arith.mulf %92, %93 : vector<8x32xf32>
    %95 = vector.broadcast %74 : vector<1x32xf32> to vector<8x32xf32>
    %96 = arith.addf %94, %95 : vector<8x32xf32>
    %97 = arith.truncf %96 : vector<8x32xf32> to vector<8x32xbf16>
    %c0_42 = arith.constant 0 : index
    %c0_43 = arith.constant 0 : index
    %c0_44 = arith.constant 0 : index
    %98 = vector.load %arg11[%c0_42, %c0_43, %c0_44] : memref<2x32x64xbf16, #tpu.memory_space<vmem>>, vector<1x32x64xbf16>
    %99 = vector.shape_cast %98 : vector<1x32x64xbf16> to vector<32x64xbf16>
    %cst_45 = arith.constant dense<0.000000e+00> : vector<8x64xf32>
    %100 = tpu.matmul %97, %99, %cst_45 {dimension_numbers = #tpu.dot_dimension_numbers<[1], [0], [0], [1], [0, 0, 1, 1], [], []>} : vector<8x32xbf16>, vector<32x64xbf16>, vector<8x64xf32> -> vector<8x64xf32>
    %c0_46 = arith.constant 0 : index
    %c0_47 = arith.constant 0 : index
    %c0_48 = arith.constant 0 : index
    %101 = vector.load %arg12[%c0_46, %c0_47, %c0_48] : memref<2x1x64xf32, #tpu.memory_space<vmem>>, vector<1x1x64xf32>
    %102 = vector.shape_cast %101 : vector<1x1x64xf32> to vector<1x64xf32>
    %103 = vector.broadcast %102 : vector<1x64xf32> to vector<8x64xf32>
    %104 = arith.addf %100, %103 : vector<8x64xf32>
    %105 = arith.mulf %104, %104 : vector<8x64xf32>
    %106 = arith.mulf %104, %105 : vector<8x64xf32>
    %cst_49 = arith.constant 4.471500e-02 : f32
    %107 = vector.broadcast %cst_49 : f32 to vector<8x64xf32>
    %108 = arith.mulf %107, %106 : vector<8x64xf32>
    %109 = arith.addf %104, %108 : vector<8x64xf32>
    %cst_50 = arith.constant 0.797884583 : f32
    %110 = vector.broadcast %cst_50 : f32 to vector<8x64xf32>
    %111 = arith.mulf %110, %109 : vector<8x64xf32>
    %112 = math.tanh %111 : vector<8x64xf32>
    %cst_51 = arith.constant 1.000000e+00 : f32
    %113 = vector.broadcast %cst_51 : f32 to vector<8x64xf32>
    %114 = arith.addf %113, %112 : vector<8x64xf32>
    %cst_52 = arith.constant 5.000000e-01 : f32
    %115 = vector.broadcast %cst_52 : f32 to vector<8x64xf32>
    %116 = arith.mulf %115, %114 : vector<8x64xf32>
    %117 = arith.mulf %104, %116 : vector<8x64xf32>
    %118 = arith.truncf %117 : vector<8x64xf32> to vector<8x64xbf16>
    %c0_53 = arith.constant 0 : index
    %c0_54 = arith.constant 0 : index
    %c0_55 = arith.constant 0 : index
    %119 = vector.load %arg13[%c0_53, %c0_54, %c0_55] : memref<2x64x32xbf16, #tpu.memory_space<vmem>>, vector<1x64x32xbf16>
    %120 = vector.shape_cast %119 : vector<1x64x32xbf16> to vector<64x32xbf16>
    %cst_56 = arith.constant dense<0.000000e+00> : vector<8x32xf32>
    %121 = tpu.matmul %118, %120, %cst_56 {dimension_numbers = #tpu.dot_dimension_numbers<[1], [0], [0], [1], [0, 0, 1, 1], [], []>} : vector<8x64xbf16>, vector<64x32xbf16>, vector<8x32xf32> -> vector<8x32xf32>
    %c0_57 = arith.constant 0 : index
    %c0_58 = arith.constant 0 : index
    %c0_59 = arith.constant 0 : index
    %122 = vector.load %arg14[%c0_57, %c0_58, %c0_59] : memref<2x1x32xf32, #tpu.memory_space<vmem>>, vector<1x1x32xf32>
    %123 = vector.shape_cast %122 : vector<1x1x32xf32> to vector<1x32xf32>
    %124 = vector.broadcast %123 : vector<1x32xf32> to vector<8x32xf32>
    %125 = arith.addf %121, %124 : vector<8x32xf32>
    %126 = arith.addf %96, %125 : vector<8x32xf32>
    %c0_60 = arith.constant 0 : index
    %c0_61 = arith.constant 0 : index
    %c0_62 = arith.constant 0 : index
    %127 = vector.load %arg15[%c0_60, %c0_61, %c0_62] : memref<2x1x32xf32, #tpu.memory_space<vmem>>, vector<1x1x32xf32>
    %128 = vector.shape_cast %127 : vector<1x1x32xf32> to vector<1x32xf32>
    %c0_63 = arith.constant 0 : index
    %c0_64 = arith.constant 0 : index
    %c0_65 = arith.constant 0 : index
    %129 = vector.load %arg16[%c0_63, %c0_64, %c0_65] : memref<2x1x32xf32, #tpu.memory_space<vmem>>, vector<1x1x32xf32>
    %130 = vector.shape_cast %129 : vector<1x1x32xf32> to vector<1x32xf32>
    %cst_66 = arith.constant dense<0.000000e+00> : vector<8xf32>
    %131 = vector.multi_reduction <add>, %126, %cst_66 [1] : vector<8x32xf32> to vector<8xf32>
    %132 = vector.shape_cast %131 : vector<8xf32> to vector<8x1xf32>
    %cst_67 = arith.constant 3.200000e+01 : f32
    %133 = vector.broadcast %cst_67 : f32 to vector<8x1xf32>
    %134 = arith.divf %132, %133 : vector<8x1xf32>
    %135 = vector.broadcast %134 : vector<8x1xf32> to vector<8x32xf32>
    %136 = arith.subf %126, %135 : vector<8x32xf32>
    %137 = arith.mulf %136, %136 : vector<8x32xf32>
    %cst_68 = arith.constant dense<0.000000e+00> : vector<8xf32>
    %138 = vector.multi_reduction <add>, %137, %cst_68 [1] : vector<8x32xf32> to vector<8xf32>
    %139 = vector.shape_cast %138 : vector<8xf32> to vector<8x1xf32>
    %cst_69 = arith.constant 3.200000e+01 : f32
    %140 = vector.broadcast %cst_69 : f32 to vector<8x1xf32>
    %141 = arith.divf %139, %140 : vector<8x1xf32>
    %142 = vector.broadcast %134 : vector<8x1xf32> to vector<8x32xf32>
    %143 = arith.subf %126, %142 : vector<8x32xf32>
    %cst_70 = arith.constant 9.99999996E-13 : f32
    %144 = vector.broadcast %cst_70 : f32 to vector<8x1xf32>
    %145 = arith.addf %141, %144 : vector<8x1xf32>
    %146 = math.rsqrt %145 : vector<8x1xf32>
    %147 = vector.broadcast %146 : vector<8x1xf32> to vector<8x32xf32>
    %148 = arith.mulf %143, %147 : vector<8x32xf32>
    %149 = vector.broadcast %128 : vector<1x32xf32> to vector<8x32xf32>
    %150 = arith.mulf %148, %149 : vector<8x32xf32>
    %151 = vector.broadcast %130 : vector<1x32xf32> to vector<8x32xf32>
    %152 = arith.addf %150, %151 : vector<8x32xf32>
    %153 = arith.truncf %152 : vector<8x32xf32> to vector<8x32xbf16>
    %c1 = arith.constant 1 : index
    %c0_71 = arith.constant 0 : index
    %c0_72 = arith.constant 0 : index
    %154 = vector.load %arg5[%c1, %c0_71, %c0_72] : memref<2x32x96xbf16, #tpu.memory_space<vmem>>, vector<1x32x96xbf16>
    %155 = vector.shape_cast %154 : vector<1x32x96xbf16> to vector<32x96xbf16>
    %cst_73 = arith.constant dense<0.000000e+00> : vector<8x96xf32>
    %156 = tpu.matmul %153, %155, %cst_73 {dimension_numbers = #tpu.dot_dimension_numbers<[1], [0], [0], [1], [0, 0, 1, 1], [], []>} : vector<8x32xbf16>, vector<32x96xbf16>, vector<8x96xf32> -> vector<8x96xf32>
    %c1_74 = arith.constant 1 : index
    %c0_75 = arith.constant 0 : index
    %c0_76 = arith.constant 0 : index
    %157 = vector.load %arg6[%c1_74, %c0_75, %c0_76] : memref<2x1x96xf32, #tpu.memory_space<vmem>>, vector<1x1x96xf32>
    %158 = vector.shape_cast %157 : vector<1x1x96xf32> to vector<1x96xf32>
    %159 = vector.broadcast %158 : vector<1x96xf32> to vector<8x96xf32>
    %160 = arith.addf %156, %159 : vector<8x96xf32>
    %161 = vector.shape_cast %160 : vector<8x96xf32> to vector<8x12x8xf32>
    %162 = tpu.transpose %161, [1, 0, 2] : vector<8x12x8xf32> -> vector<12x8x8xf32>
    %163 = vector.extract_strided_slice %162 {offsets = [0, 0, 0], sizes = [4, 8, 8], strides = [1, 1, 1]} : vector<12x8x8xf32> to vector<4x8x8xf32>
    %164 = arith.truncf %163 : vector<4x8x8xf32> to vector<4x8x8xbf16>
    %165 = vector.extract_strided_slice %162 {offsets = [4, 0, 0], sizes = [4, 8, 8], strides = [1, 1, 1]} : vector<12x8x8xf32> to vector<4x8x8xf32>
    %166 = arith.truncf %165 : vector<4x8x8xf32> to vector<4x8x8xbf16>
    %167 = vector.extract_strided_slice %162 {offsets = [8, 0, 0], sizes = [4, 8, 8], strides = [1, 1, 1]} : vector<12x8x8xf32> to vector<4x8x8xf32>
    %168 = arith.truncf %167 : vector<4x8x8xf32> to vector<4x8x8xbf16>
    %cst_77 = arith.constant dense<0.000000e+00> : vector<4x8x8xf32>
    %169 = tpu.matmul %164, %166, %cst_77 {dimension_numbers = #tpu.dot_dimension_numbers<[2], [2], [1], [1], [0, 0, 0, 1, 1, 1], [0], [0]>} : vector<4x8x8xbf16>, vector<4x8x8xbf16>, vector<4x8x8xf32> -> vector<4x8x8xf32>
    %170 = vector.broadcast %7 : vector<1x1x8xf32> to vector<4x8x8xf32>
    %171 = arith.addf %169, %170 : vector<4x8x8xf32>
    %172 = math.exp %171 : vector<4x8x8xf32>
    %cst_78 = arith.constant dense<0.000000e+00> : vector<4x8xf32>
    %173 = vector.multi_reduction <add>, %172, %cst_78 [2] : vector<4x8x8xf32> to vector<4x8xf32>
    %174 = vector.shape_cast %173 : vector<4x8xf32> to vector<4x8x1xf32>
    %175 = tpu.reciprocal %174 {approx = true} : vector<4x8x1xf32> -> vector<4x8x1xf32>
    %176 = vector.broadcast %175 : vector<4x8x1xf32> to vector<4x8x8xf32>
    %177 = arith.mulf %172, %176 : vector<4x8x8xf32>
    %178 = arith.truncf %177 : vector<4x8x8xf32> to vector<4x8x8xbf16>
    %cst_79 = arith.constant dense<0.000000e+00> : vector<4x8x8xf32>
    %179 = tpu.matmul %178, %168, %cst_79 {dimension_numbers = #tpu.dot_dimension_numbers<[2], [1], [1], [2], [0, 0, 0, 1, 1, 2], [0], [0]>} : vector<4x8x8xbf16>, vector<4x8x8xbf16>, vector<4x8x8xf32> -> vector<4x8x8xf32>
    %180 = arith.truncf %179 : vector<4x8x8xf32> to vector<4x8x8xbf16>
    %c1_80 = arith.constant 1 : index
    %c0_81 = arith.constant 0 : index
    %c0_82 = arith.constant 0 : index
    %c0_83 = arith.constant 0 : index
    %181 = vector.load %arg7[%c1_80, %c0_81, %c0_82, %c0_83] : memref<2x4x8x32xbf16, #tpu.memory_space<vmem>>, vector<1x4x8x32xbf16>
    %182 = vector.shape_cast %181 : vector<1x4x8x32xbf16> to vector<4x8x32xbf16>
    %cst_84 = arith.constant dense<0.000000e+00> : vector<4x8x32xf32>
    %183 = tpu.matmul %180, %182, %cst_84 {dimension_numbers = #tpu.dot_dimension_numbers<[2], [1], [1], [2], [0, 0, 0, 1, 1, 2], [0], [0]>} : vector<4x8x8xbf16>, vector<4x8x32xbf16>, vector<4x8x32xf32> -> vector<4x8x32xf32>
    %cst_85 = arith.constant dense<0.000000e+00> : vector<8x32xf32>
    %184 = vector.multi_reduction <add>, %183, %cst_85 [0] : vector<4x8x32xf32> to vector<8x32xf32>
    %c1_86 = arith.constant 1 : index
    %c0_87 = arith.constant 0 : index
    %c0_88 = arith.constant 0 : index
    %185 = vector.load %arg8[%c1_86, %c0_87, %c0_88] : memref<2x1x32xf32, #tpu.memory_space<vmem>>, vector<1x1x32xf32>
    %186 = vector.shape_cast %185 : vector<1x1x32xf32> to vector<1x32xf32>
    %187 = vector.broadcast %186 : vector<1x32xf32> to vector<8x32xf32>
    %188 = arith.addf %184, %187 : vector<8x32xf32>
    %189 = arith.addf %152, %188 : vector<8x32xf32>
    %c1_89 = arith.constant 1 : index
    %c0_90 = arith.constant 0 : index
    %c0_91 = arith.constant 0 : index
    %190 = vector.load %arg9[%c1_89, %c0_90, %c0_91] : memref<2x1x32xf32, #tpu.memory_space<vmem>>, vector<1x1x32xf32>
    %191 = vector.shape_cast %190 : vector<1x1x32xf32> to vector<1x32xf32>
    %c1_92 = arith.constant 1 : index
    %c0_93 = arith.constant 0 : index
    %c0_94 = arith.constant 0 : index
    %192 = vector.load %arg10[%c1_92, %c0_93, %c0_94] : memref<2x1x32xf32, #tpu.memory_space<vmem>>, vector<1x1x32xf32>
    %193 = vector.shape_cast %192 : vector<1x1x32xf32> to vector<1x32xf32>
    %cst_95 = arith.constant dense<0.000000e+00> : vector<8xf32>
    %194 = vector.multi_reduction <add>, %189, %cst_95 [1] : vector<8x32xf32> to vector<8xf32>
    %195 = vector.shape_cast %194 : vector<8xf32> to vector<8x1xf32>
    %cst_96 = arith.constant 3.200000e+01 : f32
    %196 = vector.broadcast %cst_96 : f32 to vector<8x1xf32>
    %197 = arith.divf %195, %196 : vector<8x1xf32>
    %198 = vector.broadcast %197 : vector<8x1xf32> to vector<8x32xf32>
    %199 = arith.subf %189, %198 : vector<8x32xf32>
    %200 = arith.mulf %199, %199 : vector<8x32xf32>
    %cst_97 = arith.constant dense<0.000000e+00> : vector<8xf32>
    %201 = vector.multi_reduction <add>, %200, %cst_97 [1] : vector<8x32xf32> to vector<8xf32>
    %202 = vector.shape_cast %201 : vector<8xf32> to vector<8x1xf32>
    %cst_98 = arith.constant 3.200000e+01 : f32
    %203 = vector.broadcast %cst_98 : f32 to vector<8x1xf32>
    %204 = arith.divf %202, %203 : vector<8x1xf32>
    %205 = vector.broadcast %197 : vector<8x1xf32> to vector<8x32xf32>
    %206 = arith.subf %189, %205 : vector<8x32xf32>
    %cst_99 = arith.constant 9.99999996E-13 : f32
    %207 = vector.broadcast %cst_99 : f32 to vector<8x1xf32>
    %208 = arith.addf %204, %207 : vector<8x1xf32>
    %209 = math.rsqrt %208 : vector<8x1xf32>
    %210 = vector.broadcast %209 : vector<8x1xf32> to vector<8x32xf32>
    %211 = arith.mulf %206, %210 : vector<8x32xf32>
    %212 = vector.broadcast %191 : vector<1x32xf32> to vector<8x32xf32>
    %213 = arith.mulf %211, %212 : vector<8x32xf32>
    %214 = vector.broadcast %193 : vector<1x32xf32> to vector<8x32xf32>
    %215 = arith.addf %213, %214 : vector<8x32xf32>
    %216 = arith.truncf %215 : vector<8x32xf32> to vector<8x32xbf16>
    %c1_100 = arith.constant 1 : index
    %c0_101 = arith.constant 0 : index
    %c0_102 = arith.constant 0 : index
    %217 = vector.load %arg11[%c1_100, %c0_101, %c0_102] : memref<2x32x64xbf16, #tpu.memory_space<vmem>>, vector<1x32x64xbf16>
    %218 = vector.shape_cast %217 : vector<1x32x64xbf16> to vector<32x64xbf16>
    %cst_103 = arith.constant dense<0.000000e+00> : vector<8x64xf32>
    %219 = tpu.matmul %216, %218, %cst_103 {dimension_numbers = #tpu.dot_dimension_numbers<[1], [0], [0], [1], [0, 0, 1, 1], [], []>} : vector<8x32xbf16>, vector<32x64xbf16>, vector<8x64xf32> -> vector<8x64xf32>
    %c1_104 = arith.constant 1 : index
    %c0_105 = arith.constant 0 : index
    %c0_106 = arith.constant 0 : index
    %220 = vector.load %arg12[%c1_104, %c0_105, %c0_106] : memref<2x1x64xf32, #tpu.memory_space<vmem>>, vector<1x1x64xf32>
    %221 = vector.shape_cast %220 : vector<1x1x64xf32> to vector<1x64xf32>
    %222 = vector.broadcast %221 : vector<1x64xf32> to vector<8x64xf32>
    %223 = arith.addf %219, %222 : vector<8x64xf32>
    %224 = arith.mulf %223, %223 : vector<8x64xf32>
    %225 = arith.mulf %223, %224 : vector<8x64xf32>
    %cst_107 = arith.constant 4.471500e-02 : f32
    %226 = vector.broadcast %cst_107 : f32 to vector<8x64xf32>
    %227 = arith.mulf %226, %225 : vector<8x64xf32>
    %228 = arith.addf %223, %227 : vector<8x64xf32>
    %cst_108 = arith.constant 0.797884583 : f32
    %229 = vector.broadcast %cst_108 : f32 to vector<8x64xf32>
    %230 = arith.mulf %229, %228 : vector<8x64xf32>
    %231 = math.tanh %230 : vector<8x64xf32>
    %cst_109 = arith.constant 1.000000e+00 : f32
    %232 = vector.broadcast %cst_109 : f32 to vector<8x64xf32>
    %233 = arith.addf %232, %231 : vector<8x64xf32>
    %cst_110 = arith.constant 5.000000e-01 : f32
    %234 = vector.broadcast %cst_110 : f32 to vector<8x64xf32>
    %235 = arith.mulf %234, %233 : vector<8x64xf32>
    %236 = arith.mulf %223, %235 : vector<8x64xf32>
    %237 = arith.truncf %236 : vector<8x64xf32> to vector<8x64xbf16>
    %c1_111 = arith.constant 1 : index
    %c0_112 = arith.constant 0 : index
    %c0_113 = arith.constant 0 : index
    %238 = vector.load %arg13[%c1_111, %c0_112, %c0_113] : memref<2x64x32xbf16, #tpu.memory_space<vmem>>, vector<1x64x32xbf16>
    %239 = vector.shape_cast %238 : vector<1x64x32xbf16> to vector<64x32xbf16>
    %cst_114 = arith.constant dense<0.000000e+00> : vector<8x32xf32>
    %240 = tpu.matmul %237, %239, %cst_114 {dimension_numbers = #tpu.dot_dimension_numbers<[1], [0], [0], [1], [0, 0, 1, 1], [], []>} : vector<8x64xbf16>, vector<64x32xbf16>, vector<8x32xf32> -> vector<8x32xf32>
    %c1_115 = arith.constant 1 : index
    %c0_116 = arith.constant 0 : index
    %c0_117 = arith.constant 0 : index
    %241 = vector.load %arg14[%c1_115, %c0_116, %c0_117] : memref<2x1x32xf32, #tpu.memory_space<vmem>>, vector<1x1x32xf32>
    %242 = vector.shape_cast %241 : vector<1x1x32xf32> to vector<1x32xf32>
    %243 = vector.broadcast %242 : vector<1x32xf32> to vector<8x32xf32>
    %244 = arith.addf %240, %243 : vector<8x32xf32>
    %245 = arith.addf %215, %244 : vector<8x32xf32>
    %c1_118 = arith.constant 1 : index
    %c0_119 = arith.constant 0 : index
    %c0_120 = arith.constant 0 : index
    %246 = vector.load %arg15[%c1_118, %c0_119, %c0_120] : memref<2x1x32xf32, #tpu.memory_space<vmem>>, vector<1x1x32xf32>
    %247 = vector.shape_cast %246 : vector<1x1x32xf32> to vector<1x32xf32>
    %c1_121 = arith.constant 1 : index
    %c0_122 = arith.constant 0 : index
    %c0_123 = arith.constant 0 : index
    %248 = vector.load %arg16[%c1_121, %c0_122, %c0_123] : memref<2x1x32xf32, #tpu.memory_space<vmem>>, vector<1x1x32xf32>
    %249 = vector.shape_cast %248 : vector<1x1x32xf32> to vector<1x32xf32>
    %cst_124 = arith.constant dense<0.000000e+00> : vector<8xf32>
    %250 = vector.multi_reduction <add>, %245, %cst_124 [1] : vector<8x32xf32> to vector<8xf32>
    %251 = vector.shape_cast %250 : vector<8xf32> to vector<8x1xf32>
    %cst_125 = arith.constant 3.200000e+01 : f32
    %252 = vector.broadcast %cst_125 : f32 to vector<8x1xf32>
    %253 = arith.divf %251, %252 : vector<8x1xf32>
    %254 = vector.broadcast %253 : vector<8x1xf32> to vector<8x32xf32>
    %255 = arith.subf %245, %254 : vector<8x32xf32>
    %256 = arith.mulf %255, %255 : vector<8x32xf32>
    %cst_126 = arith.constant dense<0.000000e+00> : vector<8xf32>
    %257 = vector.multi_reduction <add>, %256, %cst_126 [1] : vector<8x32xf32> to vector<8xf32>
    %258 = vector.shape_cast %257 : vector<8xf32> to vector<8x1xf32>
    %cst_127 = arith.constant 3.200000e+01 : f32
    %259 = vector.broadcast %cst_127 : f32 to vector<8x1xf32>
    %260 = arith.divf %258, %259 : vector<8x1xf32>
    %261 = vector.broadcast %253 : vector<8x1xf32> to vector<8x32xf32>
    %262 = arith.subf %245, %261 : vector<8x32xf32>
    %cst_128 = arith.constant 9.99999996E-13 : f32
    %263 = vector.broadcast %cst_128 : f32 to vector<8x1xf32>
    %264 = arith.addf %260, %263 : vector<8x1xf32>
    %265 = math.rsqrt %264 : vector<8x1xf32>
    %266 = vector.broadcast %265 : vector<8x1xf32> to vector<8x32xf32>
    %267 = arith.mulf %262, %266 : vector<8x32xf32>
    %268 = vector.broadcast %247 : vector<1x32xf32> to vector<8x32xf32>
    %269 = arith.mulf %267, %268 : vector<8x32xf32>
    %270 = vector.broadcast %249 : vector<1x32xf32> to vector<8x32xf32>
    %271 = arith.addf %269, %270 : vector<8x32xf32>
    %272 = vector.extract_strided_slice %271 {offsets = [0, 0], sizes = [1, 32], strides = [1, 1]} : vector<8x32xf32> to vector<1x32xf32>
    %273 = arith.truncf %272 : vector<1x32xf32> to vector<1x32xbf16>
    %c0_129 = arith.constant 0 : index
    %c0_130 = arith.constant 0 : index
    %274 = vector.load %arg17[%c0_129, %c0_130] : memref<32x32xbf16, #tpu.memory_space<vmem>>, vector<32x32xbf16>
    %cst_131 = arith.constant dense<0.000000e+00> : vector<1x32xf32>
    %275 = tpu.matmul %273, %274, %cst_131 {dimension_numbers = #tpu.dot_dimension_numbers<[1], [0], [0], [1], [0, 0, 1, 1], [], []>} : vector<1x32xbf16>, vector<32x32xbf16>, vector<1x32xf32> -> vector<1x32xf32>
    %c0_132 = arith.constant 0 : index
    %c0_133 = arith.constant 0 : index
    %276 = vector.load %arg18[%c0_132, %c0_133] : memref<1x32xf32, #tpu.memory_space<vmem>>, vector<1x32xf32>
    %277 = arith.addf %275, %276 : vector<1x32xf32>
    %278 = math.tanh %277 : vector<1x32xf32>
    %279 = arith.truncf %278 : vector<1x32xf32> to vector<1x32xbf16>
    %c0_134 = arith.constant 0 : index
    %c0_135 = arith.constant 0 : index
    %280 = vector.load %arg19[%c0_134, %c0_135] : memref<32x2xbf16, #tpu.memory_space<vmem>>, vector<32x2xbf16>
    %cst_136 = arith.constant dense<0.000000e+00> : vector<1x2xf32>
    %281 = tpu.matmul %279, %280, %cst_136 {dimension_numbers = #tpu.dot_dimension_numbers<[1], [0], [0], [1], [0, 0, 1, 1], [], []>} : vector<1x32xbf16>, vector<32x2xbf16>, vector<1x2xf32> -> vector<1x2xf32>
    %c0_137 = arith.constant 0 : index
    %c0_138 = arith.constant 0 : index
    %282 = vector.load %arg20[%c0_137, %c0_138] : memref<1x2xf32, #tpu.memory_space<vmem>>, vector<1x2xf32>
    %283 = arith.addf %281, %282 : vector<1x2xf32>
    %c0_139 = arith.constant 0 : index
    %c0_140 = arith.constant 0 : index
    %c0_141 = arith.constant 0 : index
    %284 = vector.load %arg21[%c0_139, %c0_140, %c0_141] : memref<1x1x2xf32, #tpu.memory_space<vmem>>, vector<1x1x2xf32>
    %285 = vector.shape_cast %284 : vector<1x1x2xf32> to vector<1x2xf32>
    %286 = vector.shape_cast %283 : vector<1x2xf32> to vector<1x1x2xf32>
    tpu.vector_store %arg21[%c0_139, %c0_140, %c0_141], %286 {strides = array<i32>} : memref<1x1x2xf32, #tpu.memory_space<vmem>>, vector<1x1x2xf32>,
    return
  }
  func.func @transform_0(%arg0: i32, %arg1: memref<2xi32, #tpu.memory_space<smem>>) -> (i32, i32, i32) {
    %c0_i32 = arith.constant 0 : i32
    %c0_i32_0 = arith.constant 0 : i32
    %c0_i32_1 = arith.constant 0 : i32
    return %arg0, %c0_i32, %c0_i32_0 : i32, i32, i32
  }
  func.func @transform_1(%arg0: i32, %arg1: memref<2xi32, #tpu.memory_space<smem>>) -> (i32, i32) {
    %c0_i32 = arith.constant 0 : i32
    %c0_i32_0 = arith.constant 0 : i32
    %c0_i32_1 = arith.constant 0 : i32
    return %c0_i32, %c0_i32_0 : i32, i32
  }
  func.func @transform_2(%arg0: i32, %arg1: memref<2xi32, #tpu.memory_space<smem>>) -> (i32, i32) {
    %c0_i32 = arith.constant 0 : i32
    %c0_i32_0 = arith.constant 0 : i32
    %c0_i32_1 = arith.constant 0 : i32
    return %c0_i32, %c0_i32_0 : i32, i32
  }
  func.func @transform_3(%arg0: i32, %arg1: memref<2xi32, #tpu.memory_space<smem>>) -> (i32, i32, i32) {
    %c0_i32 = arith.constant 0 : i32
    %c0_i32_0 = arith.constant 0 : i32
    %c0_i32_1 = arith.constant 0 : i32
    %c0_i32_2 = arith.constant 0 : i32
    return %c0_i32, %c0_i32_0, %c0_i32_1 : i32, i32, i32
  }
  func.func @transform_4(%arg0: i32, %arg1: memref<2xi32, #tpu.memory_space<smem>>) -> (i32, i32, i32) {
    %c0_i32 = arith.constant 0 : i32
    %c0_i32_0 = arith.constant 0 : i32
    %c0_i32_1 = arith.constant 0 : i32
    %c0_i32_2 = arith.constant 0 : i32
    return %c0_i32, %c0_i32_0, %c0_i32_1 : i32, i32, i32
  }
  func.func @transform_5(%arg0: i32, %arg1: memref<2xi32, #tpu.memory_space<smem>>) -> (i32, i32, i32, i32) {
    %c0_i32 = arith.constant 0 : i32
    %c0_i32_0 = arith.constant 0 : i32
    %c0_i32_1 = arith.constant 0 : i32
    %c0_i32_2 = arith.constant 0 : i32
    %c0_i32_3 = arith.constant 0 : i32
    return %c0_i32, %c0_i32_0, %c0_i32_1, %c0_i32_2 : i32, i32, i32, i32
  }
  func.func @transform_6(%arg0: i32, %arg1: memref<2xi32, #tpu.memory_space<smem>>) -> (i32, i32, i32) {
    %c0_i32 = arith.constant 0 : i32
    %c0_i32_0 = arith.constant 0 : i32
    %c0_i32_1 = arith.constant 0 : i32
    %c0_i32_2 = arith.constant 0 : i32
    return %c0_i32, %c0_i32_0, %c0_i32_1 : i32, i32, i32
  }
  func.func @transform_7(%arg0: i32, %arg1: memref<2xi32, #tpu.memory_space<smem>>) -> (i32, i32, i32) {
    %c0_i32 = arith.constant 0 : i32
    %c0_i32_0 = arith.constant 0 : i32
    %c0_i32_1 = arith.constant 0 : i32
    %c0_i32_2 = arith.constant 0 : i32
    return %c0_i32, %c0_i32_0, %c0_i32_1 : i32, i32, i32
  }
  func.func @transform_8(%arg0: i32, %arg1: memref<2xi32, #tpu.memory_space<smem>>) -> (i32, i32, i32) {
    %c0_i32 = arith.constant 0 : i32
    %c0_i32_0 = arith.constant 0 : i32
    %c0_i32_1 = arith.constant 0 : i32
    %c0_i32_2 = arith.constant 0 : i32
    return %c0_i32, %c0_i32_0, %c0_i32_1 : i32, i32, i32
  }
  func.func @transform_9(%arg0: i32, %arg1: memref<2xi32, #tpu.memory_space<smem>>) -> (i32, i32, i32) {
    %c0_i32 = arith.constant 0 : i32
    %c0_i32_0 = arith.constant 0 : i32
    %c0_i32_1 = arith.constant 0 : i32
    %c0_i32_2 = arith.constant 0 : i32
    return %c0_i32, %c0_i32_0, %c0_i32_1 : i32, i32, i32
  }
  func.func @transform_10(%arg0: i32, %arg1: memref<2xi32, #tpu.memory_space<smem>>) -> (i32, i32, i32) {
    %c0_i32 = arith.constant 0 : i32
    %c0_i32_0 = arith.constant 0 : i32
    %c0_i32_1 = arith.constant 0 : i32
    %c0_i32_2 = arith.constant 0 : i32
    return %c0_i32, %c0_i32_0, %c0_i32_1 : i32, i32, i32
  }
  func.func @transform_11(%arg0: i32, %arg1: memref<2xi32, #tpu.memory_space<smem>>) -> (i32, i32, i32) {
    %c0_i32 = arith.constant 0 : i32
    %c0_i32_0 = arith.constant 0 : i32
    %c0_i32_1 = arith.constant 0 : i32
    %c0_i32_2 = arith.constant 0 : i32
    return %c0_i32, %c0_i32_0, %c0_i32_1 : i32, i32, i32
  }
  func.func @transform_12(%arg0: i32, %arg1: memref<2xi32, #tpu.memory_space<smem>>) -> (i32, i32, i32) {
    %c0_i32 = arith.constant 0 : i32
    %c0_i32_0 = arith.constant 0 : i32
    %c0_i32_1 = arith.constant 0 : i32
    %c0_i32_2 = arith.constant 0 : i32
    return %c0_i32, %c0_i32_0, %c0_i32_1 : i32, i32, i32
  }
  func.func @transform_13(%arg0: i32, %arg1: memref<2xi32, #tpu.memory_space<smem>>) -> (i32, i32, i32) {
    %c0_i32 = arith.constant 0 : i32
    %c0_i32_0 = arith.constant 0 : i32
    %c0_i32_1 = arith.constant 0 : i32
    %c0_i32_2 = arith.constant 0 : i32
    return %c0_i32, %c0_i32_0, %c0_i32_1 : i32, i32, i32
  }
  func.func @transform_14(%arg0: i32, %arg1: memref<2xi32, #tpu.memory_space<smem>>) -> (i32, i32, i32) {
    %c0_i32 = arith.constant 0 : i32
    %c0_i32_0 = arith.constant 0 : i32
    %c0_i32_1 = arith.constant 0 : i32
    %c0_i32_2 = arith.constant 0 : i32
    return %c0_i32, %c0_i32_0, %c0_i32_1 : i32, i32, i32
  }
  func.func @transform_15(%arg0: i32, %arg1: memref<2xi32, #tpu.memory_space<smem>>) -> (i32, i32) {
    %c0_i32 = arith.constant 0 : i32
    %c0_i32_0 = arith.constant 0 : i32
    %c0_i32_1 = arith.constant 0 : i32
    return %c0_i32, %c0_i32_0 : i32, i32
  }
  func.func @transform_16(%arg0: i32, %arg1: memref<2xi32, #tpu.memory_space<smem>>) -> (i32, i32) {
    %c0_i32 = arith.constant 0 : i32
    %c0_i32_0 = arith.constant 0 : i32
    %c0_i32_1 = arith.constant 0 : i32
    return %c0_i32, %c0_i32_0 : i32, i32
  }
  func.func @transform_17(%arg0: i32, %arg1: memref<2xi32, #tpu.memory_space<smem>>) -> (i32, i32) {
    %c0_i32 = arith.constant 0 : i32
    %c0_i32_0 = arith.constant 0 : i32
    %c0_i32_1 = arith.constant 0 : i32
    return %c0_i32, %c0_i32_0 : i32, i32
  }
  func.func @transform_18(%arg0: i32, %arg1: memref<2xi32, #tpu.memory_space<smem>>) -> (i32, i32) {
    %c0_i32 = arith.constant 0 : i32
    %c0_i32_0 = arith.constant 0 : i32
    %c0_i32_1 = arith.constant 0 : i32
    return %c0_i32, %c0_i32_0 : i32, i32
  }
  func.func @transform_19(%arg0: i32, %arg1: memref<2xi32, #tpu.memory_space<smem>>) -> (i32, i32, i32) {
    %c0_i32 = arith.constant 0 : i32
    %c0_i32_0 = arith.constant 0 : i32
    %c0_i32_1 = arith.constant 0 : i32
    return %arg0, %c0_i32, %c0_i32_0 : i32, i32, i32
  }
}

</mosaic_0001>

<llo_original>
// kernel: bert_classifier_forward.1
$region0: #{bert_classifier_forward.1}
  #allocation0 [shape = 'u32[]', space=smem, size = 0x4, offset = 0x4, fixed_abs, tag = 'smem constant byte address 0x4 - core index']
  #allocation1 [shape = 'u32[144,128]{1,0:T(1,128)}', space=vmem, size = 0x12000, scoped, tag = 'internal scratch']
  #allocation2 [shape = 's32[1]{0}', space=sflag, size = 0x4, scoped, tag = 'scoped memory for bert_classifier_forward.1']
  #allocation3 [shape = 'u8[512]{0}', space=smem, size = 0x200, scoped, tag = 'prefetched SMEM operand 0']
  %s0 = inlined_call_operand.vmem [shape: s32[2], index: 0, kind: input, shape index: {}]
  %s1 = inlined_call_operand.vmem [shape: f32[2,8,32], index: 1, kind: input, shape index: {}]
  %s2 = inlined_call_operand.vmem [shape: f32[1,32], index: 2, kind: input, shape index: {}]
  %s3 = inlined_call_operand.vmem [shape: f32[1,32], index: 3, kind: input, shape index: {}]
  %s4 = inlined_call_operand.vmem [shape: bf16[2,32,96], index: 4, kind: input, shape index: {}]
  %s5 = inlined_call_operand.vmem [shape: f32[2,1,96], index: 5, kind: input, shape index: {}]
  %s6 = inlined_call_operand.vmem [shape: bf16[2,4,8,32], index: 6, kind: input, shape index: {}]
  %s7 = inlined_call_operand.vmem [shape: f32[2,1,32], index: 7, kind: input, shape index: {}]
  %s8 = inlined_call_operand.vmem [shape: f32[2,1,32], index: 8, kind: input, shape index: {}]
  %s9 = inlined_call_operand.vmem [shape: f32[2,1,32], index: 9, kind: input, shape index: {}]
  %s10 = inlined_call_operand.vmem [shape: bf16[2,32,64], index: 10, kind: input, shape index: {}]
  %s11 = inlined_call_operand.vmem [shape: f32[2,1,64], index: 11, kind: input, shape index: {}]
  %s12 = inlined_call_operand.vmem [shape: bf16[2,64,32], index: 12, kind: input, shape index: {}]
  %s13 = inlined_call_operand.vmem [shape: f32[2,1,32], index: 13, kind: input, shape index: {}]
  %s14 = inlined_call_operand.vmem [shape: f32[2,1,32], index: 14, kind: input, shape index: {}]
  %s15 = inlined_call_operand.vmem [shape: f32[2,1,32], index: 15, kind: input, shape index: {}]
  %s16 = inlined_call_operand.vmem [shape: bf16[32,32], index: 16, kind: input, shape index: {}]
  %s17 = inlined_call_operand.vmem [shape: f32[1,32], index: 17, kind: input, shape index: {}]
  %s18 = inlined_call_operand.vmem [shape: bf16[32,2], index: 18, kind: input, shape index: {}]
  %s19 = inlined_call_operand.vmem [shape: f32[1,2], index: 19, kind: input, shape index: {}]
  %s20 = inlined_call_operand.hbm [shape: f32[2,1,2], index: 20, kind: output, shape index: {}]
  %s21 = sld [smem:[#allocation0]]
  $region109: #{bert_classifier_forward.1} parent=0
    _
  %s23 = ssub.s32 1, %s21
  %s24 = scalar_select 0, %s23, %s21
  %s25 = sshll.u32 %s0, 4
  %s26 = int_to_ptr.vmem [resolvable:$true] %s25
  %28 = dma.vmem_to_smem %s26, 16, [#allocation3], [#allocation2]
  %29 = dma.done [#allocation2], 16
  %30 = sfence
  $region1: #{bert_classifier_forward.1} parent=0
    #allocation4 [shape = 'u8[1024]{0}', space=vmem, size = 0x400, scoped, tag = 'output window, operand 0']
    #allocation5 [shape = 's32[2]{0}', space=sflag, size = 0x8, scoped, tag = 'scoped memory for bert_classifier_forward.1']
    %31 = vsyncpa [#allocation5], 0
    %s32 = scalar_lea.sflag [#allocation5], 1
    %33 = vsyncpa %s32, 0
    loop: start=0, step=1, limit=4
    $region2: #{bert_classifier_forward.1} parent=1 // loop_pre_header
      _
    $region3: #{bert_classifier_forward.1} parent=1 // loop_header
      %s35 = sphi 0, %s39
      %p36 = scmp.ge.s32.totalorder %s35, 4
      %s45 = sphi 0, %s47
      %s48 = sphi 0, %s45
      %s49 = sphi 0, %s48
      %s65 = sphi 0, %s49
      %s69 = sphi 0, %s69
      %s71 = sphi 0, %s69
      %s72 = sphi 0, %s71
      %s86 = sphi 0, %s72
      %s90 = sphi 0, %s90
      %s92 = sphi 0, %s90
      %s93 = sphi 0, %s92
      %s107 = sphi 0, %s93
      %s111 = sphi 0, %s111
      %s113 = sphi 0, %s111
      %s114 = sphi 0, %s113
      %s128 = sphi 0, %s114
      %s132 = sphi 0, %s132
      %s134 = sphi 0, %s132
      %s135 = sphi 0, %s134
      %s149 = sphi 0, %s135
      %s153 = sphi 0, %s153
      %s155 = sphi 0, %s153
      %s156 = sphi 0, %s155
      %s170 = sphi 0, %s156
      %s174 = sphi 0, %s174
      %s176 = sphi 0, %s174
      %s177 = sphi 0, %s176
      %s191 = sphi 0, %s177
      %s195 = sphi 0, %s195
      %s197 = sphi 0, %s195
      %s198 = sphi 0, %s197
      %s212 = sphi 0, %s198
      %s216 = sphi 0, %s216
      %s218 = sphi 0, %s216
      %s219 = sphi 0, %s218
      %s233 = sphi 0, %s219
      %s237 = sphi 0, %s237
      %s239 = sphi 0, %s237
      %s240 = sphi 0, %s239
      %s254 = sphi 0, %s240
      %s258 = sphi 0, %s258
      %s260 = sphi 0, %s258
      %s261 = sphi 0, %s260
      %s275 = sphi 0, %s261
      %s279 = sphi 0, %s279
      %s281 = sphi 0, %s279
      %s282 = sphi 0, %s281
      %s296 = sphi 0, %s282
      %s300 = sphi 0, %s300
      %s302 = sphi 0, %s300
      %s303 = sphi 0, %s302
      %s317 = sphi 0, %s303
      %s321 = sphi 0, %s321
      %s323 = sphi 0, %s321
      %s324 = sphi 0, %s323
      %s338 = sphi 0, %s324
      %s342 = sphi 0, %s342
      %s344 = sphi 0, %s342
      %s345 = sphi 0, %s344
      %s359 = sphi 0, %s345
      %s363 = sphi 0, %s363
      %s365 = sphi 0, %s363
      %s366 = sphi 0, %s365
      %s380 = sphi 0, %s366
      %s384 = sphi 0, %s384
      %s386 = sphi 0, %s384
      %s387 = sphi 0, %s386
      %s401 = sphi 0, %s387
      %s405 = sphi 0, %s405
      %s407 = sphi 0, %s405
      %s408 = sphi 0, %s407
      %s422 = sphi 0, %s408
      %s426 = sphi 0, %s426
      %s428 = sphi 0, %s426
      %s429 = sphi 0, %s428
      %s443 = sphi 0, %s429
      %s449 = sphi 0, %s451
      %s452 = sphi 0, %s449
      %s453 = sphi 0, %s452
      %s469 = sphi 0, %s453
    $region4: #{bert_classifier_forward.1} parent=1 // loop_header_branch
      %38 = sbr.rel (%p36) target = $region8
    $region5: #{bert_classifier_forward.1} parent=1 // loop_body
      %s40 = ssub.s32 %s35, 1
      %s41 = ssub.s32 %s35, 2
      %s42 = sadd.s32 %s35, 1
      %s43 = ssub.s32 %s35, %s42
      %p44 = scmp.eq.s32.totalorder %s43, 0
      %s46 = sadd.s32 %s45, 1
      %s47 = scalar_select %p44, %s45, %s46
      %p50 = pneg %p44
      %p51 = scmp.eq.s32.totalorder %s35, 1
      %p52 = por %p50, %p51
      %p53 = scmp.ne.s32.totalorder %s45, %s48
      %p54 = scmp.eq.s32.totalorder %s35, 0
      %p55 = por %p53, %p54
      %p56 = scmp.ne.s32.totalorder %s45, %s48
      %p57 = scmp.eq.s32.totalorder %s40, 1
      %p58 = por %p56, %p57
      %p59 = scmp.ne.s32.totalorder %s48, %s49
      %p60 = scmp.eq.s32.totalorder %s40, 0
      %p61 = por %p59, %p60
      %p62 = scmp.ne.s32.totalorder %s48, %s49
      %p63 = scmp.eq.s32.totalorder %s41, 1
      %p64 = por %p62, %p63
      %p66 = scmp.ne.s32.totalorder %s49, %s65
      %p67 = scmp.eq.s32.totalorder %s41, 0
      %p68 = por %p66, %p67
      %s70 = sadd.s32 %s69, 1
      %p73 = scmp.eq.s32.totalorder %s35, 1
      %p74 = scmp.ne.s32.totalorder %s69, %s71
      %p75 = scmp.eq.s32.totalorder %s35, 0
      %p76 = por %p74, %p75
      %p77 = scmp.ne.s32.totalorder %s69, %s71
      %p78 = scmp.eq.s32.totalorder %s40, 1
      %p79 = por %p77, %p78
      %p80 = scmp.ne.s32.totalorder %s71, %s72
      %p81 = scmp.eq.s32.totalorder %s40, 0
      %p82 = por %p80, %p81
      %p83 = scmp.ne.s32.totalorder %s71, %s72
      %p84 = scmp.eq.s32.totalorder %s41, 1
      %p85 = por %p83, %p84
      %p87 = scmp.ne.s32.totalorder %s72, %s86
      %p88 = scmp.eq.s32.totalorder %s41, 0
      %p89 = por %p87, %p88
      %s91 = sadd.s32 %s90, 1
      %p94 = scmp.eq.s32.totalorder %s35, 1
      %p95 = scmp.ne.s32.totalorder %s90, %s92
      %p96 = scmp.eq.s32.totalorder %s35, 0
      %p97 = por %p95, %p96
      %p98 = scmp.ne.s32.totalorder %s90, %s92
      %p99 = scmp.eq.s32.totalorder %s40, 1
      %p100 = por %p98, %p99
      %p101 = scmp.ne.s32.totalorder %s92, %s93
      %p102 = scmp.eq.s32.totalorder %s40, 0
      %p103 = por %p101, %p102
      %p104 = scmp.ne.s32.totalorder %s92, %s93
      %p105 = scmp.eq.s32.totalorder %s41, 1
      %p106 = por %p104, %p105
      %p108 = scmp.ne.s32.totalorder %s93, %s107
      %p109 = scmp.eq.s32.totalorder %s41, 0
      %p110 = por %p108, %p109
      %s112 = sadd.s32 %s111, 1
      %p115 = scmp.eq.s32.totalorder %s35, 1
      %p116 = scmp.ne.s32.totalorder %s111, %s113
      %p117 = scmp.eq.s32.totalorder %s35, 0
      %p118 = por %p116, %p117
      %p119 = scmp.ne.s32.totalorder %s111, %s113
      %p120 = scmp.eq.s32.totalorder %s40, 1
      %p121 = por %p119, %p120
      %p122 = scmp.ne.s32.totalorder %s113, %s114
      %p123 = scmp.eq.s32.totalorder %s40, 0
      %p124 = por %p122, %p123
      %p125 = scmp.ne.s32.totalorder %s113, %s114
      %p126 = scmp.eq.s32.totalorder %s41, 1
      %p127 = por %p125, %p126
      %p129 = scmp.ne.s32.totalorder %s114, %s128
      %p130 = scmp.eq.s32.totalorder %s41, 0
      %p131 = por %p129, %p130
      %s133 = sadd.s32 %s132, 1
      %p136 = scmp.eq.s32.totalorder %s35, 1
      %p137 = scmp.ne.s32.totalorder %s132, %s134
      %p138 = scmp.eq.s32.totalorder %s35, 0
      %p139 = por %p137, %p138
      %p140 = scmp.ne.s32.totalorder %s132, %s134
      %p141 = scmp.eq.s32.totalorder %s40, 1
      %p142 = por %p140, %p141
      %p143 = scmp.ne.s32.totalorder %s134, %s135
      %p144 = scmp.eq.s32.totalorder %s40, 0
      %p145 = por %p143, %p144
      %p146 = scmp.ne.s32.totalorder %s134, %s135
      %p147 = scmp.eq.s32.totalorder %s41, 1
      %p148 = por %p146, %p147
      %p150 = scmp.ne.s32.totalorder %s135, %s149
      %p151 = scmp.eq.s32.totalorder %s41, 0
      %p152 = por %p150, %p151
      %s154 = sadd.s32 %s153, 1
      %p157 = scmp.eq.s32.totalorder %s35, 1
      %p158 = scmp.ne.s32.totalorder %s153, %s155
      %p159 = scmp.eq.s32.totalorder %s35, 0
      %p160 = por %p158, %p159
      %p161 = scmp.ne.s32.totalorder %s153, %s155
      %p162 = scmp.eq.s32.totalorder %s40, 1
      %p163 = por %p161, %p162
      %p164 = scmp.ne.s32.totalorder %s155, %s156
      %p165 = scmp.eq.s32.totalorder %s40, 0
      %p166 = por %p164, %p165
      %p167 = scmp.ne.s32.totalorder %s155, %s156
      %p168 = scmp.eq.s32.totalorder %s41, 1
      %p169 = por %p167, %p168
      %p171 = scmp.ne.s32.totalorder %s156, %s170
      %p172 = scmp.eq.s32.totalorder %s41, 0
      %p173 = por %p171, %p172
      %s175 = sadd.s32 %s174, 1
      %p178 = scmp.eq.s32.totalorder %s35, 1
      %p179 = scmp.ne.s32.totalorder %s174, %s176
      %p180 = scmp.eq.s32.totalorder %s35, 0
      %p181 = por %p179, %p180
      %p182 = scmp.ne.s32.totalorder %s174, %s176
      %p183 = scmp.eq.s32.totalorder %s40, 1
      %p184 = por %p182, %p183
      %p185 = scmp.ne.s32.totalorder %s176, %s177
      %p186 = scmp.eq.s32.totalorder %s40, 0
      %p187 = por %p185, %p186
      %p188 = scmp.ne.s32.totalorder %s176, %s177
      %p189 = scmp.eq.s32.totalorder %s41, 1
      %p190 = por %p188, %p189
      %p192 = scmp.ne.s32.totalorder %s177, %s191
      %p193 = scmp.eq.s32.totalorder %s41, 0
      %p194 = por %p192, %p193
      %s196 = sadd.s32 %s195, 1
      %p199 = scmp.eq.s32.totalorder %s35, 1
      %p200 = scmp.ne.s32.totalorder %s195, %s197
      %p201 = scmp.eq.s32.totalorder %s35, 0
      %p202 = por %p200, %p201
      %p203 = scmp.ne.s32.totalorder %s195, %s197
      %p204 = scmp.eq.s32.totalorder %s40, 1
      %p205 = por %p203, %p204
      %p206 = scmp.ne.s32.totalorder %s197, %s198
      %p207 = scmp.eq.s32.totalorder %s40, 0
      %p208 = por %p206, %p207
      %p209 = scmp.ne.s32.totalorder %s197, %s198
      %p210 = scmp.eq.s32.totalorder %s41, 1
      %p211 = por %p209, %p210
      %p213 = scmp.ne.s32.totalorder %s198, %s212
      %p214 = scmp.eq.s32.totalorder %s41, 0
      %p215 = por %p213, %p214
      %s217 = sadd.s32 %s216, 1
      %p220 = scmp.eq.s32.totalorder %s35, 1
      %p221 = scmp.ne.s32.totalorder %s216, %s218
      %p222 = scmp.eq.s32.totalorder %s35, 0
      %p223 = por %p221, %p222
      %p224 = scmp.ne.s32.totalorder %s216, %s218
      %p225 = scmp.eq.s32.totalorder %s40, 1
      %p226 = por %p224, %p225
      %p227 = scmp.ne.s32.totalorder %s218, %s219
      %p228 = scmp.eq.s32.totalorder %s40, 0
      %p229 = por %p227, %p228
      %p230 = scmp.ne.s32.totalorder %s218, %s219
      %p231 = scmp.eq.s32.totalorder %s41, 1
      %p232 = por %p230, %p231
      %p234 = scmp.ne.s32.totalorder %s219, %s233
      %p235 = scmp.eq.s32.totalorder %s41, 0
      %p236 = por %p234, %p235
      %s238 = sadd.s32 %s237, 1
      %p241 = scmp.eq.s32.totalorder %s35, 1
      %p242 = scmp.ne.s32.totalorder %s237, %s239
      %p243 = scmp.eq.s32.totalorder %s35, 0
      %p244 = por %p242, %p243
      %p245 = scmp.ne.s32.totalorder %s237, %s239
      %p246 = scmp.eq.s32.totalorder %s40, 1
      %p247 = por %p245, %p246
      %p248 = scmp.ne.s32.totalorder %s239, %s240
      %p249 = scmp.eq.s32.totalorder %s40, 0
      %p250 = por %p248, %p249
      %p251 = scmp.ne.s32.totalorder %s239, %s240
      %p252 = scmp.eq.s32.totalorder %s41, 1
      %p253 = por %p251, %p252
      %p255 = scmp.ne.s32.totalorder %s240, %s254
      %p256 = scmp.eq.s32.totalorder %s41, 0
      %p257 = por %p255, %p256
      %s259 = sadd.s32 %s258, 1
      %p262 = scmp.eq.s32.totalorder %s35, 1
      %p263 = scmp.ne.s32.totalorder %s258, %s260
      %p264 = scmp.eq.s32.totalorder %s35, 0
      %p265 = por %p263, %p264
      %p266 = scmp.ne.s32.totalorder %s258, %s260
      %p267 = scmp.eq.s32.totalorder %s40, 1
      %p268 = por %p266, %p267
      %p269 = scmp.ne.s32.totalorder %s260, %s261
      %p270 = scmp.eq.s32.totalorder %s40, 0
      %p271 = por %p269, %p270
      %p272 = scmp.ne.s32.totalorder %s260, %s261
      %p273 = scmp.eq.s32.totalorder %s41, 1
      %p274 = por %p272, %p273
      %p276 = scmp.ne.s32.totalorder %s261, %s275
      %p277 = scmp.eq.s32.totalorder %s41, 0
      %p278 = por %p276, %p277
      %s280 = sadd.s32 %s279, 1
      %p283 = scmp.eq.s32.totalorder %s35, 1
      %p284 = scmp.ne.s32.totalorder %s279, %s281
      %p285 = scmp.eq.s32.totalorder %s35, 0
      %p286 = por %p284, %p285
      %p287 = scmp.ne.s32.totalorder %s279, %s281
      %p288 = scmp.eq.s32.totalorder %s40, 1
      %p289 = por %p287, %p288
      %p290 = scmp.ne.s32.totalorder %s281, %s282
      %p291 = scmp.eq.s32.totalorder %s40, 0
      %p292 = por %p290, %p291
      %p293 = scmp.ne.s32.totalorder %s281, %s282
      %p294 = scmp.eq.s32.totalorder %s41, 1
      %p295 = por %p293, %p294
      %p297 = scmp.ne.s32.totalorder %s282, %s296
      %p298 = scmp.eq.s32.totalorder %s41, 0
      %p299 = por %p297, %p298
      %s301 = sadd.s32 %s300, 1
      %p304 = scmp.eq.s32.totalorder %s35, 1
      %p305 = scmp.ne.s32.totalorder %s300, %s302
      %p306 = scmp.eq.s32.totalorder %s35, 0
      %p307 = por %p305, %p306
      %p308 = scmp.ne.s32.totalorder %s300, %s302
      %p309 = scmp.eq.s32.totalorder %s40, 1
      %p310 = por %p308, %p309
      %p311 = scmp.ne.s32.totalorder %s302, %s303
      %p312 = scmp.eq.s32.totalorder %s40, 0
      %p313 = por %p311, %p312
      %p314 = scmp.ne.s32.totalorder %s302, %s303
      %p315 = scmp.eq.s32.totalorder %s41, 1
      %p316 = por %p314, %p315
      %p318 = scmp.ne.s32.totalorder %s303, %s317
      %p319 = scmp.eq.s32.totalorder %s41, 0
      %p320 = por %p318, %p319
      %s322 = sadd.s32 %s321, 1
      %p325 = scmp.eq.s32.totalorder %s35, 1
      %p326 = scmp.ne.s32.totalorder %s321, %s323
      %p327 = scmp.eq.s32.totalorder %s35, 0
      %p328 = por %p326, %p327
      %p329 = scmp.ne.s32.totalorder %s321, %s323
      %p330 = scmp.eq.s32.totalorder %s40, 1
      %p331 = por %p329, %p330
      %p332 = scmp.ne.s32.totalorder %s323, %s324
      %p333 = scmp.eq.s32.totalorder %s40, 0
      %p334 = por %p332, %p333
      %p335 = scmp.ne.s32.totalorder %s323, %s324
      %p336 = scmp.eq.s32.totalorder %s41, 1
      %p337 = por %p335, %p336
      %p339 = scmp.ne.s32.totalorder %s324, %s338
      %p340 = scmp.eq.s32.totalorder %s41, 0
      %p341 = por %p339, %p340
      %s343 = sadd.s32 %s342, 1
      %p346 = scmp.eq.s32.totalorder %s35, 1
      %p347 = scmp.ne.s32.totalorder %s342, %s344
      %p348 = scmp.eq.s32.totalorder %s35, 0
      %p349 = por %p347, %p348
      %p350 = scmp.ne.s32.totalorder %s342, %s344
      %p351 = scmp.eq.s32.totalorder %s40, 1
      %p352 = por %p350, %p351
      %p353 = scmp.ne.s32.totalorder %s344, %s345
      %p354 = scmp.eq.s32.totalorder %s40, 0
      %p355 = por %p353, %p354
      %p356 = scmp.ne.s32.totalorder %s344, %s345
      %p357 = scmp.eq.s32.totalorder %s41, 1
      %p358 = por %p356, %p357
      %p360 = scmp.ne.s32.totalorder %s345, %s359
      %p361 = scmp.eq.s32.totalorder %s41, 0
      %p362 = por %p360, %p361
      %s364 = sadd.s32 %s363, 1
      %p367 = scmp.eq.s32.totalorder %s35, 1
      %p368 = scmp.ne.s32.totalorder %s363, %s365
      %p369 = scmp.eq.s32.totalorder %s35, 0
      %p370 = por %p368, %p369
      %p371 = scmp.ne.s32.totalorder %s363, %s365
      %p372 = scmp.eq.s32.totalorder %s40, 1
      %p373 = por %p371, %p372
      %p374 = scmp.ne.s32.totalorder %s365, %s366
      %p375 = scmp.eq.s32.totalorder %s40, 0
      %p376 = por %p374, %p375
      %p377 = scmp.ne.s32.totalorder %s365, %s366
      %p378 = scmp.eq.s32.totalorder %s41, 1
      %p379 = por %p377, %p378
      %p381 = scmp.ne.s32.totalorder %s366, %s380
      %p382 = scmp.eq.s32.totalorder %s41, 0
      %p383 = por %p381, %p382
      %s385 = sadd.s32 %s384, 1
      %p388 = scmp.eq.s32.totalorder %s35, 1
      %p389 = scmp.ne.s32.totalorder %s384, %s386
      %p390 = scmp.eq.s32.totalorder %s35, 0
      %p391 = por %p389, %p390
      %p392 = scmp.ne.s32.totalorder %s384, %s386
      %p393 = scmp.eq.s32.totalorder %s40, 1
      %p394 = por %p392, %p393
      %p395 = scmp.ne.s32.totalorder %s386, %s387
      %p396 = scmp.eq.s32.totalorder %s40, 0
      %p397 = por %p395, %p396
      %p398 = scmp.ne.s32.totalorder %s386, %s387
      %p399 = scmp.eq.s32.totalorder %s41, 1
      %p400 = por %p398, %p399
      %p402 = scmp.ne.s32.totalorder %s387, %s401
      %p403 = scmp.eq.s32.totalorder %s41, 0
      %p404 = por %p402, %p403
      %s406 = sadd.s32 %s405, 1
      %p409 = scmp.eq.s32.totalorder %s35, 1
      %p410 = scmp.ne.s32.totalorder %s405, %s407
      %p411 = scmp.eq.s32.totalorder %s35, 0
      %p412 = por %p410, %p411
      %p413 = scmp.ne.s32.totalorder %s405, %s407
      %p414 = scmp.eq.s32.totalorder %s40, 1
      %p415 = por %p413, %p414
      %p416 = scmp.ne.s32.totalorder %s407, %s408
      %p417 = scmp.eq.s32.totalorder %s40, 0
      %p418 = por %p416, %p417
      %p419 = scmp.ne.s32.totalorder %s407, %s408
      %p420 = scmp.eq.s32.totalorder %s41, 1
      %p421 = por %p419, %p420
      %p423 = scmp.ne.s32.totalorder %s408, %s422
      %p424 = scmp.eq.s32.totalorder %s41, 0
      %p425 = por %p423, %p424
      %s427 = sadd.s32 %s426, 1
      %p430 = scmp.eq.s32.totalorder %s35, 1
      %p431 = scmp.ne.s32.totalorder %s426, %s428
      %p432 = scmp.eq.s32.totalorder %s35, 0
      %p433 = por %p431, %p432
      %p434 = scmp.ne.s32.totalorder %s426, %s428
      %p435 = scmp.eq.s32.totalorder %s40, 1
      %p436 = por %p434, %p435
      %p437 = scmp.ne.s32.totalorder %s428, %s429
      %p438 = scmp.eq.s32.totalorder %s40, 0
      %p439 = por %p437, %p438
      %p440 = scmp.ne.s32.totalorder %s428, %s429
      %p441 = scmp.eq.s32.totalorder %s41, 1
      %p442 = por %p440, %p441
      %p444 = scmp.ne.s32.totalorder %s429, %s443
      %p445 = scmp.eq.s32.totalorder %s41, 0
      %p446 = por %p444, %p445
      %s447 = ssub.s32 %s35, %s42
      %p448 = scmp.eq.s32.totalorder %s447, 0
      %s450 = sadd.s32 %s449, 1
      %s451 = scalar_select %p448, %s449, %s450
      %p454 = pneg %p448
      %p455 = scmp.eq.s32.totalorder %s35, 1
      %p456 = por %p454, %p455
      %p457 = scmp.ne.s32.totalorder %s449, %s452
      %p458 = scmp.eq.s32.totalorder %s35, 0
      %p459 = por %p457, %p458
      %p460 = scmp.ne.s32.totalorder %s449, %s452
      %p461 = scmp.eq.s32.totalorder %s40, 1
      %p462 = por %p460, %p461
      %p463 = scmp.ne.s32.totalorder %s452, %s453
      %p464 = scmp.eq.s32.totalorder %s40, 0
      %p465 = por %p463, %p464
      %p466 = scmp.ne.s32.totalorder %s452, %s453
      %p467 = scmp.eq.s32.totalorder %s41, 1
      %p468 = por %p466, %p467
      %p470 = scmp.ne.s32.totalorder %s453, %s469
      %p471 = scmp.eq.s32.totalorder %s41, 0
      %p472 = por %p470, %p471
      %p473 = scmp.le.s32.totalorder 1, %s35
      %p474 = scmp.lt.s32.totalorder %s35, 3
      %p475 = pnand %p473, %p474
      %p476 = pneg %p475
      // Predicated region
      $region9: #{bert_classifier_forward.1} parent=5 // pred_check
        _
      $region10: #{bert_classifier_forward.1} parent=5 // pred_check_branch
        %478 = sbr.rel (%p475) target = $region12
      $region11: #{bert_classifier_forward.1} parent=5 // pred_region
        %s479 = ssub.s32 %s35, 1
        // Predicated region
        $region13: #{bert_classifier_forward.1} parent=11 // pred_check
          %p480 = pneg %p82
        $region14: #{bert_classifier_forward.1} parent=11 // pred_check_branch
          %482 = sbr.rel (%p480) target = $region16
        $region15: #{bert_classifier_forward.1} parent=11 // pred_region
          _
        $region16: #{bert_classifier_forward.1} parent=11 // pred_fallthru
          _
        // Predicated region
        $region17: #{bert_classifier_forward.1} parent=11 // pred_check
          %p483 = pneg %p103
        $region18: #{bert_classifier_forward.1} parent=11 // pred_check_branch
          %485 = sbr.rel (%p483) target = $region20
        $region19: #{bert_classifier_forward.1} parent=11 // pred_region
          _
        $region20: #{bert_classifier_forward.1} parent=11 // pred_fallthru
          _
        // Predicated region
        $region21: #{bert_classifier_forward.1} parent=11 // pred_check
          %p486 = pneg %p124
        $region22: #{bert_classifier_forward.1} parent=11 // pred_check_branch
          %488 = sbr.rel (%p486) target = $region24
        $region23: #{bert_classifier_forward.1} parent=11 // pred_region
          _
        $region24: #{bert_classifier_forward.1} parent=11 // pred_fallthru
          _
        // Predicated region
        $region25: #{bert_classifier_forward.1} parent=11 // pred_check
          %p489 = pneg %p145
        $region26: #{bert_classifier_forward.1} parent=11 // pred_check_branch
          %491 = sbr.rel (%p489) target = $region28
        $region27: #{bert_classifier_forward.1} parent=11 // pred_region
          _
        $region28: #{bert_classifier_forward.1} parent=11 // pred_fallthru
          _
        // Predicated region
        $region29: #{bert_classifier_forward.1} parent=11 // pred_check
          %p492 = pneg %p166
        $region30: #{bert_classifier_forward.1} parent=11 // pred_check_branch
          %494 = sbr.rel (%p492) target = $region32
        $region31: #{bert_classifier_forward.1} parent=11 // pred_region
          _
        $region32: #{bert_classifier_forward.1} parent=11 // pred_fallthru
          _
        // Predicated region
        $region33: #{bert_classifier_forward.1} parent=11 // pred_check
          %p495 = pneg %p187
        $region34: #{bert_classifier_forward.1} parent=11 // pred_check_branch
          %497 = sbr.rel (%p495) target = $region36
        $region35: #{bert_classifier_forward.1} parent=11 // pred_region
          _
        $region36: #{bert_classifier_forward.1} parent=11 // pred_fallthru
          _
        // Predicated region
        $region37: #{bert_classifier_forward.1} parent=11 // pred_check
          %p498 = pneg %p208
        $region38: #{bert_classifier_forward.1} parent=11 // pred_check_branch
          %500 = sbr.rel (%p498) target = $region40
        $region39: #{bert_classifier_forward.1} parent=11 // pred_region
          _
        $region40: #{bert_classifier_forward.1} parent=11 // pred_fallthru
          _
        // Predicated region
        $region41: #{bert_classifier_forward.1} parent=11 // pred_check
          %p501 = pneg %p229
        $region42: #{bert_classifier_forward.1} parent=11 // pred_check_branch
          %503 = sbr.rel (%p501) target = $region44
        $region43: #{bert_classifier_forward.1} parent=11 // pred_region
          _
        $region44: #{bert_classifier_forward.1} parent=11 // pred_fallthru
          _
        // Predicated region
        $region45: #{bert_classifier_forward.1} parent=11 // pred_check
          %p504 = pneg %p250
        $region46: #{bert_classifier_forward.1} parent=11 // pred_check_branch
          %506 = sbr.rel (%p504) target = $region48
        $region47: #{bert_classifier_forward.1} parent=11 // pred_region
          _
        $region48: #{bert_classifier_forward.1} parent=11 // pred_fallthru
          _
        // Predicated region
        $region49: #{bert_classifier_forward.1} parent=11 // pred_check
          %p507 = pneg %p271
        $region50: #{bert_classifier_forward.1} parent=11 // pred_check_branch
          %509 = sbr.rel (%p507) target = $region52
        $region51: #{bert_classifier_forward.1} parent=11 // pred_region
          _
        $region52: #{bert_classifier_forward.1} parent=11 // pred_fallthru
          _
        // Predicated region
        $region53: #{bert_classifier_forward.1} parent=11 // pred_check
          %p510 = pneg %p292
        $region54: #{bert_classifier_forward.1} parent=11 // pred_check_branch
          %512 = sbr.rel (%p510) target = $region56
        $region55: #{bert_classifier_forward.1} parent=11 // pred_region
          _
        $region56: #{bert_classifier_forward.1} parent=11 // pred_fallthru
          _
        // Predicated region
        $region57: #{bert_classifier_forward.1} parent=11 // pred_check
          %p513 = pneg %p313
        $region58: #{bert_classifier_forward.1} parent=11 // pred_check_branch
          %515 = sbr.rel (%p513) target = $region60
        $region59: #{bert_classifier_forward.1} parent=11 // pred_region
          _
        $region60: #{bert_classifier_forward.1} parent=11 // pred_fallthru
          _
        // Predicated region
        $region61: #{bert_classifier_forward.1} parent=11 // pred_check
          %p516 = pneg %p334
        $region62: #{bert_classifier_forward.1} parent=11 // pred_check_branch
          %518 = sbr.rel (%p516) target = $region64
        $region63: #{bert_classifier_forward.1} parent=11 // pred_region
          _
        $region64: #{bert_classifier_forward.1} parent=11 // pred_fallthru
          _
        // Predicated region
        $region65: #{bert_classifier_forward.1} parent=11 // pred_check
          %p519 = pneg %p355
        $region66: #{bert_classifier_forward.1} parent=11 // pred_check_branch
          %521 = sbr.rel (%p519) target = $region68
        $region67: #{bert_classifier_forward.1} parent=11 // pred_region
          _
        $region68: #{bert_classifier_forward.1} parent=11 // pred_fallthru
          _
        // Predicated region
        $region69: #{bert_classifier_forward.1} parent=11 // pred_check
          %p522 = pneg %p376
        $region70: #{bert_classifier_forward.1} parent=11 // pred_check_branch
          %524 = sbr.rel (%p522) target = $region72
        $region71: #{bert_classifier_forward.1} parent=11 // pred_region
          _
        $region72: #{bert_classifier_forward.1} parent=11 // pred_fallthru
          _
        // Predicated region
        $region73: #{bert_classifier_forward.1} parent=11 // pred_check
          %p525 = pneg %p397
        $region74: #{bert_classifier_forward.1} parent=11 // pred_check_branch
          %527 = sbr.rel (%p525) target = $region76
        $region75: #{bert_classifier_forward.1} parent=11 // pred_region
          _
        $region76: #{bert_classifier_forward.1} parent=11 // pred_fallthru
          _
        // Predicated region
        $region77: #{bert_classifier_forward.1} parent=11 // pred_check
          %p528 = pneg %p418
        $region78: #{bert_classifier_forward.1} parent=11 // pred_check_branch
          %530 = sbr.rel (%p528) target = $region80
        $region79: #{bert_classifier_forward.1} parent=11 // pred_region
          _
        $region80: #{bert_classifier_forward.1} parent=11 // pred_fallthru
          _
        // Predicated region
        $region81: #{bert_classifier_forward.1} parent=11 // pred_check
          %p531 = pneg %p439
        $region82: #{bert_classifier_forward.1} parent=11 // pred_check_branch
          %533 = sbr.rel (%p531) target = $region84
        $region83: #{bert_classifier_forward.1} parent=11 // pred_region
          _
        $region84: #{bert_classifier_forward.1} parent=11 // pred_fallthru
          _
      $region12: #{bert_classifier_forward.1} parent=5 // pred_fallthru
        _
      %p534 = scmp.lt.s32.totalorder %s35, 2
      // Predicated region
      $region85: #{bert_classifier_forward.1} parent=5 // pred_check
        %p535 = pneg %p534
      $region86: #{bert_classifier_forward.1} parent=5 // pred_check_branch
        %537 = sbr.rel (%p535) target = $region88
      $region87: #{bert_classifier_forward.1} parent=5 // pred_region
        // Predicated region
        $region89: #{bert_classifier_forward.1} parent=87 // pred_check
          %p538 = pneg %p55
        $region90: #{bert_classifier_forward.1} parent=87 // pred_check_branch
          %540 = sbr.rel (%p538) target = $region92
        $region91: #{bert_classifier_forward.1} parent=87 // pred_region
          %p541 = scmp.lt.s32.totalorder %s35, 1
          %s542 = scalar_select %p541, %s35, 1
          %s543 = smul.addr %s542, 8
          %s544 = scalar_lea.vmem %s1, %s543
        $region92: #{bert_classifier_forward.1} parent=87 // pred_fallthru
          _
      $region88: #{bert_classifier_forward.1} parent=5 // pred_fallthru
        _
      %p545 = scmp.le.s32.totalorder 1, %s35
      %p546 = scmp.lt.s32.totalorder %s35, 3
      %p547 = pnand %p545, %p546
      %p548 = pneg %p547
      // Predicated region
      $region93: #{bert_classifier_forward.1} parent=5 // pred_check
        _
      $region94: #{bert_classifier_forward.1} parent=5 // pred_check_branch
        %550 = sbr.rel (%p547) target = $region96
      $region95: #{bert_classifier_forward.1} parent=5 // pred_region
        %s551 = ssub.s32 %s35, 1
        %p552 = scmp.lt.s32.totalorder %s40, 1
        %s553 = scalar_select %p552, %s40, 1
        %s554 = smul.addr %s553, 8
        %s555 = scalar_lea.vmem %s1, %s554
        %p556 = pneg %p61
        %p557 = pneg %p58
        %p558 = pneg %p82
        %p559 = pneg %p79
        %p560 = pneg %p103
        %p561 = pneg %p100
        %p562 = pneg %p124
        %p563 = pneg %p121
        %p564 = pneg %p145
        %p565 = pneg %p142
        %p566 = pneg %p166
        %p567 = pneg %p163
        %p568 = pneg %p187
        %p569 = pneg %p184
        %p570 = pneg %p208
        %p571 = pneg %p205
        %p572 = pneg %p229
        %p573 = pneg %p226
        %p574 = pneg %p250
        %p575 = pneg %p247
        %p576 = pneg %p271
        %p577 = pneg %p268
        %p578 = pneg %p292
        %p579 = pneg %p289
        %p580 = pneg %p313
        %p581 = pneg %p310
        %p582 = pneg %p334
        %p583 = pneg %p331
        %p584 = pneg %p355
        %p585 = pneg %p352
        %p586 = pneg %p376
        %p587 = pneg %p373
        %p588 = pneg %p397
        %p589 = pneg %p394
        %p590 = pneg %p418
        %p591 = pneg %p415
        %p592 = pneg %p439
        %p593 = pneg %p436
        %p594 = pneg %p465
        %p595 = pneg %p462
        %s596 = sand.u32 %s452, 1
        %s597 = scalar_lea.sflag [#allocation5], %s596
        %s598 = sand.u32 %s452, 1
        %s599 = scalar_lea.vmem [#allocation4], %s598
        %p600 = scmp.lt.s32.totalorder %s40, 1
        %s601 = scalar_select %p600, %s40, 1
        %s602 = smul.addr %s601, 8
        %s603 = scalar_lea.vmem %s1, %s602
        %v605 = vlaneseq
        %v606 = vand.u32 %v605, 127
        %s607 = sld [smem:[#allocation3 + %s40]]
        %v608 = vstv %s607
        %vm609 = vcmp.lt.s32.totalorder %v606, %v608
        %v610 = vsel %vm609, 0.0, -1e+09
        %v611 = vld [vmem:[%s603] sm:$0xff]
        %v612 = vld [vmem:[%s2] sm:$0x1]
        %v613 = vld [vmem:[%s3] sm:$0x1]
        %vm614 = vcmask 261120
        %v615 = vsel %vm614, %v611, 0.0
        %616 = vadd.xlane.f32.xlu0 %v615
        %v617 = vpop.xlane.xlu0 %616
        %v618 = vrcp.pop 32.0
        %v619 = vmul.f32 %v617, %v618
        %v620 = vsub.f32 %v611, %v619
        %v621 = vmul.f32 %v620, %v620
        %v622 = vsel %vm614, %v621, 0.0
        %623 = vadd.xlane.f32.xlu0 %v622
        %v624 = vpop.xlane.xlu0 %623
        %v625 = vmul.f32 %v624, %v618
        %v626 = vadd.f32 %v625, 1e-12
        %v627 = vrsqrt.pop %v626
        %v628 = vmul.f32 %v620, %v627
        %v630 = vlaneseq
        %v631 = vshrl.u32 %v630, 7
        %v632 = vsub.s32 0, %v631
        %v633 = vrot.slane %v612, %v632
        %v635 = vmul.f32 %v628, %v633
        %v637 = vlaneseq
        %v638 = vshrl.u32 %v637, 7
        %v639 = vsub.s32 0, %v638
        %v640 = vrot.slane %v613, %v639
        %v642 = vadd.f32 %v635, %v640
        %v643 = vpack.c.bf16 %v642, %v642
        %v644 = vld [vmem:[%s4] sm:$0xf]
        %v645 = vld [vmem:[%s4 + $0x4] sm:$0xf]
        %v646 = vld [vmem:[%s4 + $0x8] sm:$0xf]
        %v647 = vld [vmem:[%s4 + $0xc] sm:$0xf]
        %v648 = vld [vmem:[%s5] sm:$0x1]
        %v650 = vlaneseq
        %v651 = vshrl.u32 %v650, 7
        %v652 = vsub.s32 0, %v651
        %v653 = vrot.slane %v648, %v652
        %v659 = vunpack.c.l.b16 %v644
        %v660 = vunpack.c.l.b16 %v645
        %v661 = vunpack.c.l.b16 %v646
        %v662 = vunpack.c.l.b16 %v647
        %v663 = vpack.c.b16 %v660, %v659
        %v664 = vpack.c.b16 %v662, %v661
        %v668 = vsel %vm614, %v643, 0
        %670 = vmatprep.subr.bf16.mxu0 0
        %671 = vmatpush1.bf16.msra.mxu0 %v663
        %672 = vmatprep.subr.bf16.mxu0 0
        %673 = vmatpush1.bf16.msra.mxu0 %v664
        %674 = vmatprep.subr.bf16.mxu0 0
        %675 = vmatpush1.bf16.msra.mxu0 0
        %676 = vmatprep.subr.bf16.mxu0 0
        %677 = vmatpush1.bf16.msra.mxu0 0
        %678 = vmatprep.subr.bf16.mxu0 0
        %679 = vmatpush1.bf16.msra.mxu0 0
        %680 = vmatprep.subr.bf16.mxu0 0
        %681 = vmatpush1.bf16.msra.mxu0 0
        %682 = vmatprep.subr.bf16.mxu0 0
        %683 = vmatpush1.bf16.msra.mxu0 0
        %684 = vmatprep.subr.bf16.mxu0 0
        %685 = vmatpush1.bf16.msra.mxu0 0
        %686 = vmatprep.subr.bf16.mxu0 0
        %687 = vmatpush1.bf16.msra.mxu0 0
        %688 = vmatprep.subr.bf16.mxu0 0
        %689 = vmatpush1.bf16.msra.mxu0 0
        %690 = vmatprep.subr.bf16.mxu0 0
        %691 = vmatpush1.bf16.msra.mxu0 0
        %692 = vmatprep.subr.bf16.mxu0 0
        %693 = vmatpush1.bf16.msra.mxu0 0
        %694 = vmatprep.subr.bf16.mxu0 0
        %695 = vmatpush1.bf16.msra.mxu0 0
        %696 = vmatprep.subr.bf16.mxu0 0
        %697 = vmatpush1.bf16.msra.mxu0 0
        %698 = vmatprep.subr.bf16.mxu0 0
        %699 = vmatpush1.bf16.msra.mxu0 0
        %700 = vmatprep.subr.bf16.mxu0 0
        %701 = vmatpush1.bf16.msra.mxu0 0
        %702 = vmatprep.mubr.bf16.mxu0 0
        %703 = vmatmul.mubr.bf16.gmra.mrb[0].mxu0 %v668
        %v704 = vpop.f32.mrb[0].mxu0
        %v705 = vadd.f32 %v653, %v704
        %v706 = vpop.f32.mrb[0].mxu0
        %v707 = vpop.f32.mrb[0].mxu0
        %v708 = vpop.f32.mrb[0].mxu0
        %709 = vdwg.mxu0
        %711 = vrot.lane.b32.xlu0 %v705, 120
        %v712 = vpop.permute.xlu0 %711
        %714 = vrot.lane.b32.xlu0 %v705, 112
        %v715 = vpop.permute.xlu0 %714
        %717 = vrot.lane.b32.xlu0 %v705, 104
        %v718 = vpop.permute.xlu0 %717
        %720 = vrot.lane.b32.xlu0 %v705, 96
        %v721 = vpop.permute.xlu0 %720
        %723 = vrot.lane.b32.xlu0 %v705, 88
        %v724 = vpop.permute.xlu0 %723
        %726 = vrot.lane.b32.xlu0 %v705, 80
        %v727 = vpop.permute.xlu0 %726
        %729 = vrot.lane.b32.xlu0 %v705, 72
        %v730 = vpop.permute.xlu0 %729
        %732 = vrot.lane.b32.xlu0 %v705, 64
        %v733 = vpop.permute.xlu0 %732
        %735 = vrot.lane.b32.xlu0 %v705, 56
        %v736 = vpop.permute.xlu0 %735
        %738 = vrot.lane.b32.xlu0 %v705, 48
        %v739 = vpop.permute.xlu0 %738
        %741 = vrot.lane.b32.xlu0 %v705, 40
        %v742 = vpop.permute.xlu0 %741
        %v744 = vcombine.low %v705, %v715
        %v745 = vcombine.high %v705, %v715
        %v747 = vunpack.c.l.s4 1983009808
        %v748 = vunpack.c.0.s8 %v747
        %v749 = vlaneseq
        %v750 = vshrl.u32 %v749, 7
        %v751 = vsub.s32 %v748, %v750
        %v752 = vrot.slane %v744, %v751
        %v754 = vunpack.c.l.s4 1983009808
        %v755 = vunpack.c.0.s8 %v754
        %v756 = vlaneseq
        %v757 = vshrl.u32 %v756, 7
        %v758 = vsub.s32 %v755, %v757
        %v759 = vrot.slane %v745, %v758
        %v760 = vcombine.low %v712, %v718
        %v761 = vcombine.high %v712, %v718
        %v763 = vunpack.c.l.s4 1983009808
        %v764 = vunpack.c.0.s8 %v763
        %v765 = vlaneseq
        %v766 = vshrl.u32 %v765, 7
        %v767 = vsub.s32 %v764, %v766
        %v768 = vrot.slane %v760, %v767
        %v770 = vunpack.c.l.s4 1983009808
        %v771 = vunpack.c.0.s8 %v770
        %v772 = vlaneseq
        %v773 = vshrl.u32 %v772, 7
        %v774 = vsub.s32 %v771, %v773
        %v775 = vrot.slane %v761, %v774
        %v776 = vcombine.low %v721, %v727
        %v777 = vcombine.high %v721, %v727
        %v779 = vunpack.c.l.s4 1983009808
        %v780 = vunpack.c.0.s8 %v779
        %v781 = vlaneseq
        %v782 = vshrl.u32 %v781, 7
        %v783 = vsub.s32 %v780, %v782
        %v784 = vrot.slane %v776, %v783
        %v786 = vunpack.c.l.s4 1983009808
        %v787 = vunpack.c.0.s8 %v786
        %v788 = vlaneseq
        %v789 = vshrl.u32 %v788, 7
        %v790 = vsub.s32 %v787, %v789
        %v791 = vrot.slane %v777, %v790
        %v792 = vcombine.low %v724, %v730
        %v793 = vcombine.high %v724, %v730
        %v795 = vunpack.c.l.s4 1983009808
        %v796 = vunpack.c.0.s8 %v795
        %v797 = vlaneseq
        %v798 = vshrl.u32 %v797, 7
        %v799 = vsub.s32 %v796, %v798
        %v800 = vrot.slane %v792, %v799
        %v802 = vunpack.c.l.s4 1983009808
        %v803 = vunpack.c.0.s8 %v802
        %v804 = vlaneseq
        %v805 = vshrl.u32 %v804, 7
        %v806 = vsub.s32 %v803, %v805
        %v807 = vrot.slane %v793, %v806
        %v808 = vcombine.low %v752, %v768
        %v809 = vcombine.high %v752, %v768
        %v811 = vunpack.c.l.s4 1934713408
        %v812 = vunpack.c.0.s8 %v811
        %v813 = vlaneseq
        %v814 = vshrl.u32 %v813, 7
        %v815 = vsub.s32 %v812, %v814
        %v816 = vrot.slane %v808, %v815
        %v818 = vunpack.c.l.s4 1934713408
        %v819 = vunpack.c.0.s8 %v818
        %v820 = vlaneseq
        %v821 = vshrl.u32 %v820, 7
        %v822 = vsub.s32 %v819, %v821
        %v823 = vrot.slane %v809, %v822
        %v824 = vcombine.low %v759, %v775
        %v825 = vcombine.high %v759, %v775
        %v827 = vunpack.c.l.s4 1934713408
        %v828 = vunpack.c.0.s8 %v827
        %v829 = vlaneseq
        %v830 = vshrl.u32 %v829, 7
        %v831 = vsub.s32 %v828, %v830
        %v832 = vrot.slane %v824, %v831
        %v834 = vunpack.c.l.s4 1934713408
        %v835 = vunpack.c.0.s8 %v834
        %v836 = vlaneseq
        %v837 = vshrl.u32 %v836, 7
        %v838 = vsub.s32 %v835, %v837
        %v839 = vrot.slane %v825, %v838
        %v840 = vcombine.low %v784, %v800
        %v841 = vcombine.high %v784, %v800
        %v843 = vunpack.c.l.s4 1934713408
        %v844 = vunpack.c.0.s8 %v843
        %v845 = vlaneseq
        %v846 = vshrl.u32 %v845, 7
        %v847 = vsub.s32 %v844, %v846
        %v848 = vrot.slane %v840, %v847
        %v850 = vunpack.c.l.s4 1934713408
        %v851 = vunpack.c.0.s8 %v850
        %v852 = vlaneseq
        %v853 = vshrl.u32 %v852, 7
        %v854 = vsub.s32 %v851, %v853
        %v855 = vrot.slane %v841, %v854
        %v856 = vcombine.low %v791, %v807
        %v857 = vcombine.high %v791, %v807
        %v859 = vunpack.c.l.s4 1934713408
        %v860 = vunpack.c.0.s8 %v859
        %v861 = vlaneseq
        %v862 = vshrl.u32 %v861, 7
        %v863 = vsub.s32 %v860, %v862
        %v864 = vrot.slane %v856, %v863
        %v866 = vunpack.c.l.s4 1934713408
        %v867 = vunpack.c.0.s8 %v866
        %v868 = vlaneseq
        %v869 = vshrl.u32 %v868, 7
        %v870 = vsub.s32 %v867, %v869
        %v871 = vrot.slane %v857, %v870
        %v872 = vcombine.low %v816, %v848
        %v873 = vcombine.high %v816, %v848
        %v874 = vcombine.low %v823, %v855
        %v875 = vcombine.high %v823, %v855
        %v876 = vcombine.low %v832, %v864
        %v877 = vcombine.high %v832, %v864
        %v878 = vcombine.low %v839, %v871
        %v879 = vcombine.high %v839, %v871
        %v880 = vcombine.low %v733, %v739
        %v881 = vcombine.high %v733, %v739
        %v883 = vunpack.c.l.s4 1983009808
        %v884 = vunpack.c.0.s8 %v883
        %v885 = vlaneseq
        %v886 = vshrl.u32 %v885, 7
        %v887 = vsub.s32 %v884, %v886
        %v888 = vrot.slane %v880, %v887
        %v890 = vunpack.c.l.s4 1983009808
        %v891 = vunpack.c.0.s8 %v890
        %v892 = vlaneseq
        %v893 = vshrl.u32 %v892, 7
        %v894 = vsub.s32 %v891, %v893
        %v895 = vrot.slane %v881, %v894
        %v896 = vcombine.low %v736, %v742
        %v897 = vcombine.high %v736, %v742
        %v899 = vunpack.c.l.s4 1983009808
        %v900 = vunpack.c.0.s8 %v899
        %v901 = vlaneseq
        %v902 = vshrl.u32 %v901, 7
        %v903 = vsub.s32 %v900, %v902
        %v904 = vrot.slane %v896, %v903
        %v906 = vunpack.c.l.s4 1983009808
        %v907 = vunpack.c.0.s8 %v906
        %v908 = vlaneseq
        %v909 = vshrl.u32 %v908, 7
        %v910 = vsub.s32 %v907, %v909
        %v911 = vrot.slane %v897, %v910
        %v912 = vcombine.low %v888, %v904
        %v913 = vcombine.high %v888, %v904
        %v915 = vunpack.c.l.s4 1934713408
        %v916 = vunpack.c.0.s8 %v915
        %v917 = vlaneseq
        %v918 = vshrl.u32 %v917, 7
        %v919 = vsub.s32 %v916, %v918
        %v920 = vrot.slane %v912, %v919
        %v922 = vunpack.c.l.s4 1934713408
        %v923 = vunpack.c.0.s8 %v922
        %v924 = vlaneseq
        %v925 = vshrl.u32 %v924, 7
        %v926 = vsub.s32 %v923, %v925
        %v927 = vrot.slane %v913, %v926
        %v928 = vcombine.low %v895, %v911
        %v929 = vcombine.high %v895, %v911
        %v931 = vunpack.c.l.s4 1934713408
        %v932 = vunpack.c.0.s8 %v931
        %v933 = vlaneseq
        %v934 = vshrl.u32 %v933, 7
        %v935 = vsub.s32 %v932, %v934
        %v936 = vrot.slane %v928, %v935
        %v938 = vunpack.c.l.s4 1934713408
        %v939 = vunpack.c.0.s8 %v938
        %v940 = vlaneseq
        %v941 = vshrl.u32 %v940, 7
        %v942 = vsub.s32 %v939, %v941
        %v943 = vrot.slane %v929, %v942
        %v944 = vcombine.high %v920, 0.0
        %v945 = vcombine.high %v927, 0.0
        %v946 = vcombine.high %v936, 0.0
        %v947 = vcombine.high %v943, 0.0
        %v948 = vcombine.low %v872, %v874
        %v949 = vcombine.high %v872, %v874
        %v951 = vunpack.c.l.s4 1983009808
        %v952 = vunpack.c.0.s8 %v951
        %v953 = vlaneseq
        %v954 = vshrl.u32 %v953, 7
        %v955 = vsub.s32 %v952, %v954
        %v956 = vrot.slane %v948, %v955
        %v958 = vunpack.c.l.s4 1983009808
        %v959 = vunpack.c.0.s8 %v958
        %v960 = vlaneseq
        %v961 = vshrl.u32 %v960, 7
        %v962 = vsub.s32 %v959, %v961
        %v963 = vrot.slane %v949, %v962
        %v964 = vcombine.low %v873, %v875
        %v965 = vcombine.high %v873, %v875
        %v967 = vunpack.c.l.s4 1983009808
        %v968 = vunpack.c.0.s8 %v967
        %v969 = vlaneseq
        %v970 = vshrl.u32 %v969, 7
        %v971 = vsub.s32 %v968, %v970
        %v972 = vrot.slane %v964, %v971
        %v974 = vunpack.c.l.s4 1983009808
        %v975 = vunpack.c.0.s8 %v974
        %v976 = vlaneseq
        %v977 = vshrl.u32 %v976, 7
        %v978 = vsub.s32 %v975, %v977
        %v979 = vrot.slane %v965, %v978
        %v980 = vcombine.low %v876, %v878
        %v981 = vcombine.high %v876, %v878
        %v983 = vunpack.c.l.s4 1983009808
        %v984 = vunpack.c.0.s8 %v983
        %v985 = vlaneseq
        %v986 = vshrl.u32 %v985, 7
        %v987 = vsub.s32 %v984, %v986
        %v988 = vrot.slane %v980, %v987
        %v990 = vunpack.c.l.s4 1983009808
        %v991 = vunpack.c.0.s8 %v990
        %v992 = vlaneseq
        %v993 = vshrl.u32 %v992, 7
        %v994 = vsub.s32 %v991, %v993
        %v995 = vrot.slane %v981, %v994
        %v996 = vcombine.low %v877, %v879
        %v997 = vcombine.high %v877, %v879
        %v999 = vunpack.c.l.s4 1983009808
        %v1000 = vunpack.c.0.s8 %v999
        %v1001 = vlaneseq
        %v1002 = vshrl.u32 %v1001, 7
        %v1003 = vsub.s32 %v1000, %v1002
        %v1004 = vrot.slane %v996, %v1003
        %v1006 = vunpack.c.l.s4 1983009808
        %v1007 = vunpack.c.0.s8 %v1006
        %v1008 = vlaneseq
        %v1009 = vshrl.u32 %v1008, 7
        %v1010 = vsub.s32 %v1007, %v1009
        %v1011 = vrot.slane %v997, %v1010
        %v1012 = vcombine.low %v956, %v972
        %v1013 = vcombine.high %v956, %v972
        %v1015 = vunpack.c.l.s4 1934713408
        %v1016 = vunpack.c.0.s8 %v1015
        %v1017 = vlaneseq
        %v1018 = vshrl.u32 %v1017, 7
        %v1019 = vsub.s32 %v1016, %v1018
        %v1020 = vrot.slane %v1012, %v1019
        %v1022 = vunpack.c.l.s4 1934713408
        %v1023 = vunpack.c.0.s8 %v1022
        %v1024 = vlaneseq
        %v1025 = vshrl.u32 %v1024, 7
        %v1026 = vsub.s32 %v1023, %v1025
        %v1027 = vrot.slane %v1013, %v1026
        %v1028 = vcombine.low %v963, %v979
        %v1029 = vcombine.high %v963, %v979
        %v1031 = vunpack.c.l.s4 1934713408
        %v1032 = vunpack.c.0.s8 %v1031
        %v1033 = vlaneseq
        %v1034 = vshrl.u32 %v1033, 7
        %v1035 = vsub.s32 %v1032, %v1034
        %v1036 = vrot.slane %v1028, %v1035
        %v1038 = vunpack.c.l.s4 1934713408
        %v1039 = vunpack.c.0.s8 %v1038
        %v1040 = vlaneseq
        %v1041 = vshrl.u32 %v1040, 7
        %v1042 = vsub.s32 %v1039, %v1041
        %v1043 = vrot.slane %v1029, %v1042
        %v1044 = vcombine.low %v988, %v1004
        %v1045 = vcombine.high %v988, %v1004
        %v1047 = vunpack.c.l.s4 1934713408
        %v1048 = vunpack.c.0.s8 %v1047
        %v1049 = vlaneseq
        %v1050 = vshrl.u32 %v1049, 7
        %v1051 = vsub.s32 %v1048, %v1050
        %v1052 = vrot.slane %v1044, %v1051
        %v1054 = vunpack.c.l.s4 1934713408
        %v1055 = vunpack.c.0.s8 %v1054
        %v1056 = vlaneseq
        %v1057 = vshrl.u32 %v1056, 7
        %v1058 = vsub.s32 %v1055, %v1057
        %v1059 = vrot.slane %v1045, %v1058
        %v1060 = vcombine.low %v995, %v1011
        %v1061 = vcombine.high %v995, %v1011
        %v1063 = vunpack.c.l.s4 1934713408
        %v1064 = vunpack.c.0.s8 %v1063
        %v1065 = vlaneseq
        %v1066 = vshrl.u32 %v1065, 7
        %v1067 = vsub.s32 %v1064, %v1066
        %v1068 = vrot.slane %v1060, %v1067
        %v1070 = vunpack.c.l.s4 1934713408
        %v1071 = vunpack.c.0.s8 %v1070
        %v1072 = vlaneseq
        %v1073 = vshrl.u32 %v1072, 7
        %v1074 = vsub.s32 %v1071, %v1073
        %v1075 = vrot.slane %v1061, %v1074
        %v1076 = vcombine.low %v1020, %v1052
        %v1077 = vcombine.high %v1020, %v1052
        %v1078 = vcombine.low %v1027, %v1059
        %v1079 = vcombine.high %v1027, %v1059
        %v1080 = vcombine.low %v1036, %v1068
        %v1081 = vcombine.high %v1036, %v1068
        %v1082 = vcombine.low %v1043, %v1075
        %v1083 = vcombine.high %v1043, %v1075
        %v1084 = vcombine.low %v920, %v927
        %v1086 = vunpack.c.l.s4 1983009808
        %v1087 = vunpack.c.0.s8 %v1086
        %v1088 = vlaneseq
        %v1089 = vshrl.u32 %v1088, 7
        %v1090 = vsub.s32 %v1087, %v1089
        %v1091 = vrot.slane %v1084, %v1090
        %v1092 = vcombine.low %v944, %v945
        %v1094 = vunpack.c.l.s4 1983009808
        %v1095 = vunpack.c.0.s8 %v1094
        %v1096 = vlaneseq
        %v1097 = vshrl.u32 %v1096, 7
        %v1098 = vsub.s32 %v1095, %v1097
        %v1099 = vrot.slane %v1092, %v1098
        %v1100 = vcombine.low %v936, %v943
        %v1102 = vunpack.c.l.s4 1983009808
        %v1103 = vunpack.c.0.s8 %v1102
        %v1104 = vlaneseq
        %v1105 = vshrl.u32 %v1104, 7
        %v1106 = vsub.s32 %v1103, %v1105
        %v1107 = vrot.slane %v1100, %v1106
        %v1108 = vcombine.low %v946, %v947
        %v1110 = vunpack.c.l.s4 1983009808
        %v1111 = vunpack.c.0.s8 %v1110
        %v1112 = vlaneseq
        %v1113 = vshrl.u32 %v1112, 7
        %v1114 = vsub.s32 %v1111, %v1113
        %v1115 = vrot.slane %v1108, %v1114
        %v1116 = vcombine.low %v1091, %v1099
        %v1117 = vcombine.high %v1091, %v1099
        %v1119 = vunpack.c.l.s4 1934713408
        %v1120 = vunpack.c.0.s8 %v1119
        %v1121 = vlaneseq
        %v1122 = vshrl.u32 %v1121, 7
        %v1123 = vsub.s32 %v1120, %v1122
        %v1124 = vrot.slane %v1116, %v1123
        %v1126 = vunpack.c.l.s4 1934713408
        %v1127 = vunpack.c.0.s8 %v1126
        %v1128 = vlaneseq
        %v1129 = vshrl.u32 %v1128, 7
        %v1130 = vsub.s32 %v1127, %v1129
        %v1131 = vrot.slane %v1117, %v1130
        %v1132 = vcombine.low %v1107, %v1115
        %v1133 = vcombine.high %v1107, %v1115
        %v1135 = vunpack.c.l.s4 1934713408
        %v1136 = vunpack.c.0.s8 %v1135
        %v1137 = vlaneseq
        %v1138 = vshrl.u32 %v1137, 7
        %v1139 = vsub.s32 %v1136, %v1138
        %v1140 = vrot.slane %v1132, %v1139
        %v1142 = vunpack.c.l.s4 1934713408
        %v1143 = vunpack.c.0.s8 %v1142
        %v1144 = vlaneseq
        %v1145 = vshrl.u32 %v1144, 7
        %v1146 = vsub.s32 %v1143, %v1145
        %v1147 = vrot.slane %v1133, %v1146
        %v1148 = vcombine.low %v1124, %v1140
        %v1149 = vcombine.high %v1124, %v1140
        %v1150 = vcombine.low %v1131, %v1147
        %v1151 = vcombine.high %v1131, %v1147
        %v1152 = vpack.c.bf16 %v1076, %v1076
        %v1153 = vpack.c.bf16 %v1077, %v1077
        %v1154 = vpack.c.bf16 %v1078, %v1078
        %v1155 = vpack.c.bf16 %v1079, %v1079
        %v1156 = vpack.c.bf16 %v1080, %v1080
        %v1157 = vpack.c.bf16 %v1081, %v1081
        %v1158 = vpack.c.bf16 %v1082, %v1082
        %v1159 = vpack.c.bf16 %v1083, %v1083
        %v1160 = vpack.c.bf16 %v1148, %v1148
        %v1161 = vpack.c.bf16 %v1149, %v1149
        %v1162 = vpack.c.bf16 %v1150, %v1150
        %v1163 = vpack.c.bf16 %v1151, %v1151
        %vm1164 = vcmask 64512
        %v1166 = vsel %vm1164, %v1152, 0
        %v1169 = vsel %vm1164, %v1156, 0
        %1171 = vmatprep.subr.bf16.mxu0 0
        %1172 = vmatpush1.bf16.xpose.msra.mxu0 %v1169
        %1173 = vmatprep.subr.bf16.mxu0 0
        %1174 = vmatpush1.bf16.xpose.msra.mxu0 0
        %1175 = vmatprep.subr.bf16.mxu0 0
        %1176 = vmatpush1.bf16.xpose.msra.mxu0 0
        %1177 = vmatprep.subr.bf16.mxu0 0
        %1178 = vmatpush1.bf16.xpose.msra.mxu0 0
        %1179 = vmatprep.subr.bf16.mxu0 0
        %1180 = vmatpush1.bf16.xpose.msra.mxu0 0
        %1181 = vmatprep.subr.bf16.mxu0 0
        %1182 = vmatpush1.bf16.xpose.msra.mxu0 0
        %1183 = vmatprep.subr.bf16.mxu0 0
        %1184 = vmatpush1.bf16.xpose.msra.mxu0 0
        %1185 = vmatprep.subr.bf16.mxu0 0
        %1186 = vmatpush1.bf16.xpose.msra.mxu0 0
        %1187 = vmatprep.subr.bf16.mxu0 0
        %1188 = vmatpush1.bf16.xpose.msra.mxu0 0
        %1189 = vmatprep.subr.bf16.mxu0 0
        %1190 = vmatpush1.bf16.xpose.msra.mxu0 0
        %1191 = vmatprep.subr.bf16.mxu0 0
        %1192 = vmatpush1.bf16.xpose.msra.mxu0 0
        %1193 = vmatprep.subr.bf16.mxu0 0
        %1194 = vmatpush1.bf16.xpose.msra.mxu0 0
        %1195 = vmatprep.subr.bf16.mxu0 0
        %1196 = vmatpush1.bf16.xpose.msra.mxu0 0
        %1197 = vmatprep.subr.bf16.mxu0 0
        %1198 = vmatpush1.bf16.xpose.msra.mxu0 0
        %1199 = vmatprep.subr.bf16.mxu0 0
        %1200 = vmatpush1.bf16.xpose.msra.mxu0 0
        %1201 = vmatprep.subr.bf16.mxu0 0
        %1202 = vmatpush1.bf16.xpose.msra.mxu0 0
        %1203 = vmatprep.mubr.bf16.mxu0 0
        %1204 = vmatmul.mubr.bf16.gmra.mrb[0].mxu0 %v1166
        %v1205 = vpop.f32.mrb[0].mxu0
        %v1206 = vadd.f32 %v610, %v1205
        %v1207 = vpop.f32.mrb[0].mxu0
        %v1208 = vpop.f32.mrb[0].mxu0
        %v1209 = vpop.f32.mrb[0].mxu0
        %1210 = vdwg.mxu0
        %v1212 = vsel %vm1164, %v1153, 0
        %v1215 = vsel %vm1164, %v1157, 0
        %1217 = vmatprep.subr.bf16.mxu0 0
        %1218 = vmatpush1.bf16.xpose.msra.mxu0 %v1215
        %1219 = vmatprep.subr.bf16.mxu0 0
        %1220 = vmatpush1.bf16.xpose.msra.mxu0 0
        %1221 = vmatprep.subr.bf16.mxu0 0
        %1222 = vmatpush1.bf16.xpose.msra.mxu0 0
        %1223 = vmatprep.subr.bf16.mxu0 0
        %1224 = vmatpush1.bf16.xpose.msra.mxu0 0
        %1225 = vmatprep.subr.bf16.mxu0 0
        %1226 = vmatpush1.bf16.xpose.msra.mxu0 0
        %1227 = vmatprep.subr.bf16.mxu0 0
        %1228 = vmatpush1.bf16.xpose.msra.mxu0 0
        %1229 = vmatprep.subr.bf16.mxu0 0
        %1230 = vmatpush1.bf16.xpose.msra.mxu0 0
        %1231 = vmatprep.subr.bf16.mxu0 0
        %1232 = vmatpush1.bf16.xpose.msra.mxu0 0
        %1233 = vmatprep.subr.bf16.mxu0 0
        %1234 = vmatpush1.bf16.xpose.msra.mxu0 0
        %1235 = vmatprep.subr.bf16.mxu0 0
        %1236 = vmatpush1.bf16.xpose.msra.mxu0 0
        %1237 = vmatprep.subr.bf16.mxu0 0
        %1238 = vmatpush1.bf16.xpose.msra.mxu0 0
        %1239 = vmatprep.subr.bf16.mxu0 0
        %1240 = vmatpush1.bf16.xpose.msra.mxu0 0
        %1241 = vmatprep.subr.bf16.mxu0 0
        %1242 = vmatpush1.bf16.xpose.msra.mxu0 0
        %1243 = vmatprep.subr.bf16.mxu0 0
        %1244 = vmatpush1.bf16.xpose.msra.mxu0 0
        %1245 = vmatprep.subr.bf16.mxu0 0
        %1246 = vmatpush1.bf16.xpose.msra.mxu0 0
        %1247 = vmatprep.subr.bf16.mxu0 0
        %1248 = vmatpush1.bf16.xpose.msra.mxu0 0
        %1249 = vmatprep.mubr.bf16.mxu0 0
        %1250 = vmatmul.mubr.bf16.gmra.mrb[0].mxu0 %v1212
        %v1251 = vpop.f32.mrb[0].mxu0
        %v1252 = vadd.f32 %v610, %v1251
        %v1253 = vpop.f32.mrb[0].mxu0
        %v1254 = vpop.f32.mrb[0].mxu0
        %v1255 = vpop.f32.mrb[0].mxu0
        %1256 = vdwg.mxu0
        %v1258 = vsel %vm1164, %v1154, 0
        %v1261 = vsel %vm1164, %v1158, 0
        %1263 = vmatprep.subr.bf16.mxu0 0
        %1264 = vmatpush1.bf16.xpose.msra.mxu0 %v1261
        %1265 = vmatprep.subr.bf16.mxu0 0
        %1266 = vmatpush1.bf16.xpose.msra.mxu0 0
        %1267 = vmatprep.subr.bf16.mxu0 0
        %1268 = vmatpush1.bf16.xpose.msra.mxu0 0
        %1269 = vmatprep.subr.bf16.mxu0 0
        %1270 = vmatpush1.bf16.xpose.msra.mxu0 0
        %1271 = vmatprep.subr.bf16.mxu0 0
        %1272 = vmatpush1.bf16.xpose.msra.mxu0 0
        %1273 = vmatprep.subr.bf16.mxu0 0
        %1274 = vmatpush1.bf16.xpose.msra.mxu0 0
        %1275 = vmatprep.subr.bf16.mxu0 0
        %1276 = vmatpush1.bf16.xpose.msra.mxu0 0
        %1277 = vmatprep.subr.bf16.mxu0 0
        %1278 = vmatpush1.bf16.xpose.msra.mxu0 0
        %1279 = vmatprep.subr.bf16.mxu0 0
        %1280 = vmatpush1.bf16.xpose.msra.mxu0 0
        %1281 = vmatprep.subr.bf16.mxu0 0
        %1282 = vmatpush1.bf16.xpose.msra.mxu0 0
        %1283 = vmatprep.subr.bf16.mxu0 0
        %1284 = vmatpush1.bf16.xpose.msra.mxu0 0
        %1285 = vmatprep.subr.bf16.mxu0 0
        %1286 = vmatpush1.bf16.xpose.msra.mxu0 0
        %1287 = vmatprep.subr.bf16.mxu0 0
        %1288 = vmatpush1.bf16.xpose.msra.mxu0 0
        %1289 = vmatprep.subr.bf16.mxu0 0
        %1290 = vmatpush1.bf16.xpose.msra.mxu0 0
        %1291 = vmatprep.subr.bf16.mxu0 0
        %1292 = vmatpush1.bf16.xpose.msra.mxu0 0
        %1293 = vmatprep.subr.bf16.mxu0 0
        %1294 = vmatpush1.bf16.xpose.msra.mxu0 0
        %1295 = vmatprep.mubr.bf16.mxu0 0
        %1296 = vmatmul.mubr.bf16.gmra.mrb[0].mxu0 %v1258
        %v1297 = vpop.f32.mrb[0].mxu0
        %v1298 = vadd.f32 %v610, %v1297
        %v1299 = vpop.f32.mrb[0].mxu0
        %v1300 = vpop.f32.mrb[0].mxu0
        %v1301 = vpop.f32.mrb[0].mxu0
        %1302 = vdwg.mxu0
        %v1304 = vsel %vm1164, %v1155, 0
        %v1307 = vsel %vm1164, %v1159, 0
        %1309 = vmatprep.subr.bf16.mxu0 0
        %1310 = vmatpush1.bf16.xpose.msra.mxu0 %v1307
        %1311 = vmatprep.subr.bf16.mxu0 0
        %1312 = vmatpush1.bf16.xpose.msra.mxu0 0
        %1313 = vmatprep.subr.bf16.mxu0 0
        %1314 = vmatpush1.bf16.xpose.msra.mxu0 0
        %1315 = vmatprep.subr.bf16.mxu0 0
        %1316 = vmatpush1.bf16.xpose.msra.mxu0 0
        %1317 = vmatprep.subr.bf16.mxu0 0
        %1318 = vmatpush1.bf16.xpose.msra.mxu0 0
        %1319 = vmatprep.subr.bf16.mxu0 0
        %1320 = vmatpush1.bf16.xpose.msra.mxu0 0
        %1321 = vmatprep.subr.bf16.mxu0 0
        %1322 = vmatpush1.bf16.xpose.msra.mxu0 0
        %1323 = vmatprep.subr.bf16.mxu0 0
        %1324 = vmatpush1.bf16.xpose.msra.mxu0 0
        %1325 = vmatprep.subr.bf16.mxu0 0
        %1326 = vmatpush1.bf16.xpose.msra.mxu0 0
        %1327 = vmatprep.subr.bf16.mxu0 0
        %1328 = vmatpush1.bf16.xpose.msra.mxu0 0
        %1329 = vmatprep.subr.bf16.mxu0 0
        %1330 = vmatpush1.bf16.xpose.msra.mxu0 0
        %1331 = vmatprep.subr.bf16.mxu0 0
        %1332 = vmatpush1.bf16.xpose.msra.mxu0 0
        %1333 = vmatprep.subr.bf16.mxu0 0
        %1334 = vmatpush1.bf16.xpose.msra.mxu0 0
        %1335 = vmatprep.subr.bf16.mxu0 0
        %1336 = vmatpush1.bf16.xpose.msra.mxu0 0
        %1337 = vmatprep.subr.bf16.mxu0 0
        %1338 = vmatpush1.bf16.xpose.msra.mxu0 0
        %1339 = vmatprep.subr.bf16.mxu0 0
        %1340 = vmatpush1.bf16.xpose.msra.mxu0 0
        %1341 = vmatprep.mubr.bf16.mxu0 0
        %1342 = vmatmul.mubr.bf16.gmra.mrb[0].mxu0 %v1304
        %v1343 = vpop.f32.mrb[0].mxu0
        %v1344 = vadd.f32 %v610, %v1343
        %v1345 = vpop.f32.mrb[0].mxu0
        %v1346 = vpop.f32.mrb[0].mxu0
        %v1347 = vpop.f32.mrb[0].mxu0
        %1348 = vdwg.mxu0
        %v1349 = vmul.f32 %v1206, 1.442695
        %v1350 = vpow.pop %v1349
        %v1351 = vmul.f32 %v1252, 1.442695
        %v1352 = vpow.pop %v1351
        %v1353 = vmul.f32 %v1298, 1.442695
        %v1354 = vpow.pop %v1353
        %v1355 = vmul.f32 %v1344, 1.442695
        %v1356 = vpow.pop %v1355
        %v1357 = vsel %vm1164, %v1350, 0.0
        %1358 = vadd.xlane.f32.xlu0 %v1357
        %v1359 = vpop.xlane.xlu0 %1358
        %v1360 = vsel %vm1164, %v1352, 0.0
        %1361 = vadd.xlane.f32.xlu0 %v1360
        %v1362 = vpop.xlane.xlu0 %1361
        %v1363 = vsel %vm1164, %v1354, 0.0
        %1364 = vadd.xlane.f32.xlu0 %v1363
        %v1365 = vpop.xlane.xlu0 %1364
        %v1366 = vsel %vm1164, %v1356, 0.0
        %1367 = vadd.xlane.f32.xlu0 %v1366
        %v1368 = vpop.xlane.xlu0 %1367
        %v1369 = vrcp.pop %v1359
        %v1370 = vrcp.pop %v1362
        %v1371 = vrcp.pop %v1365
        %v1372 = vrcp.pop %v1368
        %v1373 = vmul.f32 %v1350, %v1369
        %v1374 = vmul.f32 %v1352, %v1370
        %v1375 = vmul.f32 %v1354, %v1371
        %v1376 = vmul.f32 %v1356, %v1372
        %v1377 = vpack.c.bf16 %v1373, %v1373
        %v1378 = vpack.c.bf16 %v1374, %v1374
        %v1379 = vpack.c.bf16 %v1375, %v1375
        %v1380 = vpack.c.bf16 %v1376, %v1376
        %v1382 = vsel %vm1164, %v1377, 0
        %vm1384 = vcmask 1043456
        %v1386 = vsel %vm1384, %v1160, 0
        %1388 = vmatprep.subr.bf16.mxu0 0
        %1389 = vmatpush1.bf16.msra.mxu0 %v1386
        %1390 = vmatprep.subr.bf16.mxu0 0
        %1391 = vmatpush1.bf16.msra.mxu0 0
        %1392 = vmatprep.subr.bf16.mxu0 0
        %1393 = vmatpush1.bf16.msra.mxu0 0
        %1394 = vmatprep.subr.bf16.mxu0 0
        %1395 = vmatpush1.bf16.msra.mxu0 0
        %1396 = vmatprep.subr.bf16.mxu0 0
        %1397 = vmatpush1.bf16.msra.mxu0 0
        %1398 = vmatprep.subr.bf16.mxu0 0
        %1399 = vmatpush1.bf16.msra.mxu0 0
        %1400 = vmatprep.subr.bf16.mxu0 0
        %1401 = vmatpush1.bf16.msra.mxu0 0
        %1402 = vmatprep.subr.bf16.mxu0 0
        %1403 = vmatpush1.bf16.msra.mxu0 0
        %1404 = vmatprep.subr.bf16.mxu0 0
        %1405 = vmatpush1.bf16.msra.mxu0 0
        %1406 = vmatprep.subr.bf16.mxu0 0
        %1407 = vmatpush1.bf16.msra.mxu0 0
        %1408 = vmatprep.subr.bf16.mxu0 0
        %1409 = vmatpush1.bf16.msra.mxu0 0
        %1410 = vmatprep.subr.bf16.mxu0 0
        %1411 = vmatpush1.bf16.msra.mxu0 0
        %1412 = vmatprep.subr.bf16.mxu0 0
        %1413 = vmatpush1.bf16.msra.mxu0 0
        %1414 = vmatprep.subr.bf16.mxu0 0
        %1415 = vmatpush1.bf16.msra.mxu0 0
        %1416 = vmatprep.subr.bf16.mxu0 0
        %1417 = vmatpush1.bf16.msra.mxu0 0
        %1418 = vmatprep.subr.bf16.mxu0 0
        %1419 = vmatpush1.bf16.msra.mxu0 0
        %1420 = vmatprep.mubr.bf16.mxu0 0
        %1421 = vmatmul.mubr.bf16.gmra.mrb[0].mxu0 %v1382
        %v1422 = vpop.f32.mrb[0].mxu0
        %v1423 = vadd.f32 0.0, %v1422
        %v1424 = vpop.f32.mrb[0].mxu0
        %v1425 = vpop.f32.mrb[0].mxu0
        %v1426 = vpop.f32.mrb[0].mxu0
        %1427 = vdwg.mxu0
        %v1429 = vsel %vm1164, %v1378, 0
        %v1432 = vsel %vm1384, %v1161, 0
        %1434 = vmatprep.subr.bf16.mxu0 0
        %1435 = vmatpush1.bf16.msra.mxu0 %v1432
        %1436 = vmatprep.subr.bf16.mxu0 0
        %1437 = vmatpush1.bf16.msra.mxu0 0
        %1438 = vmatprep.subr.bf16.mxu0 0
        %1439 = vmatpush1.bf16.msra.mxu0 0
        %1440 = vmatprep.subr.bf16.mxu0 0
        %1441 = vmatpush1.bf16.msra.mxu0 0
        %1442 = vmatprep.subr.bf16.mxu0 0
        %1443 = vmatpush1.bf16.msra.mxu0 0
        %1444 = vmatprep.subr.bf16.mxu0 0
        %1445 = vmatpush1.bf16.msra.mxu0 0
        %1446 = vmatprep.subr.bf16.mxu0 0
        %1447 = vmatpush1.bf16.msra.mxu0 0
        %1448 = vmatprep.subr.bf16.mxu0 0
        %1449 = vmatpush1.bf16.msra.mxu0 0
        %1450 = vmatprep.subr.bf16.mxu0 0
        %1451 = vmatpush1.bf16.msra.mxu0 0
        %1452 = vmatprep.subr.bf16.mxu0 0
        %1453 = vmatpush1.bf16.msra.mxu0 0
        %1454 = vmatprep.subr.bf16.mxu0 0
        %1455 = vmatpush1.bf16.msra.mxu0 0
        %1456 = vmatprep.subr.bf16.mxu0 0
        %1457 = vmatpush1.bf16.msra.mxu0 0
        %1458 = vmatprep.subr.bf16.mxu0 0
        %1459 = vmatpush1.bf16.msra.mxu0 0
        %1460 = vmatprep.subr.bf16.mxu0 0
        %1461 = vmatpush1.bf16.msra.mxu0 0
        %1462 = vmatprep.subr.bf16.mxu0 0
        %1463 = vmatpush1.bf16.msra.mxu0 0
        %1464 = vmatprep.subr.bf16.mxu0 0
        %1465 = vmatpush1.bf16.msra.mxu0 0
        %1466 = vmatprep.mubr.bf16.mxu0 0
        %1467 = vmatmul.mubr.bf16.gmra.mrb[0].mxu0 %v1429
        %v1468 = vpop.f32.mrb[0].mxu0
        %v1469 = vadd.f32 0.0, %v1468
        %v1470 = vpop.f32.mrb[0].mxu0
        %v1471 = vpop.f32.mrb[0].mxu0
        %v1472 = vpop.f32.mrb[0].mxu0
        %1473 = vdwg.mxu0
        %v1475 = vsel %vm1164, %v1379, 0
        %v1478 = vsel %vm1384, %v1162, 0
        %1480 = vmatprep.subr.bf16.mxu0 0
        %1481 = vmatpush1.bf16.msra.mxu0 %v1478
        %1482 = vmatprep.subr.bf16.mxu0 0
        %1483 = vmatpush1.bf16.msra.mxu0 0
        %1484 = vmatprep.subr.bf16.mxu0 0
        %1485 = vmatpush1.bf16.msra.mxu0 0
        %1486 = vmatprep.subr.bf16.mxu0 0
        %1487 = vmatpush1.bf16.msra.mxu0 0
        %1488 = vmatprep.subr.bf16.mxu0 0
        %1489 = vmatpush1.bf16.msra.mxu0 0
        %1490 = vmatprep.subr.bf16.mxu0 0
        %1491 = vmatpush1.bf16.msra.mxu0 0
        %1492 = vmatprep.subr.bf16.mxu0 0
        %1493 = vmatpush1.bf16.msra.mxu0 0
        %1494 = vmatprep.subr.bf16.mxu0 0
        %1495 = vmatpush1.bf16.msra.mxu0 0
        %1496 = vmatprep.subr.bf16.mxu0 0
        %1497 = vmatpush1.bf16.msra.mxu0 0
        %1498 = vmatprep.subr.bf16.mxu0 0
        %1499 = vmatpush1.bf16.msra.mxu0 0
        %1500 = vmatprep.subr.bf16.mxu0 0
        %1501 = vmatpush1.bf16.msra.mxu0 0
        %1502 = vmatprep.subr.bf16.mxu0 0
        %1503 = vmatpush1.bf16.msra.mxu0 0
        %1504 = vmatprep.subr.bf16.mxu0 0
        %1505 = vmatpush1.bf16.msra.mxu0 0
        %1506 = vmatprep.subr.bf16.mxu0 0
        %1507 = vmatpush1.bf16.msra.mxu0 0
        %1508 = vmatprep.subr.bf16.mxu0 0
        %1509 = vmatpush1.bf16.msra.mxu0 0
        %1510 = vmatprep.subr.bf16.mxu0 0
        %1511 = vmatpush1.bf16.msra.mxu0 0
        %1512 = vmatprep.mubr.bf16.mxu0 0
        %1513 = vmatmul.mubr.bf16.gmra.mrb[0].mxu0 %v1475
        %v1514 = vpop.f32.mrb[0].mxu0
        %v1515 = vadd.f32 0.0, %v1514
        %v1516 = vpop.f32.mrb[0].mxu0
        %v1517 = vpop.f32.mrb[0].mxu0
        %v1518 = vpop.f32.mrb[0].mxu0
        %1519 = vdwg.mxu0
        %v1521 = vsel %vm1164, %v1380, 0
        %v1524 = vsel %vm1384, %v1163, 0
        %1526 = vmatprep.subr.bf16.mxu0 0
        %1527 = vmatpush1.bf16.msra.mxu0 %v1524
        %1528 = vmatprep.subr.bf16.mxu0 0
        %1529 = vmatpush1.bf16.msra.mxu0 0
        %1530 = vmatprep.subr.bf16.mxu0 0
        %1531 = vmatpush1.bf16.msra.mxu0 0
        %1532 = vmatprep.subr.bf16.mxu0 0
        %1533 = vmatpush1.bf16.msra.mxu0 0
        %1534 = vmatprep.subr.bf16.mxu0 0
        %1535 = vmatpush1.bf16.msra.mxu0 0
        %1536 = vmatprep.subr.bf16.mxu0 0
        %1537 = vmatpush1.bf16.msra.mxu0 0
        %1538 = vmatprep.subr.bf16.mxu0 0
        %1539 = vmatpush1.bf16.msra.mxu0 0
        %1540 = vmatprep.subr.bf16.mxu0 0
        %1541 = vmatpush1.bf16.msra.mxu0 0
        %1542 = vmatprep.subr.bf16.mxu0 0
        %1543 = vmatpush1.bf16.msra.mxu0 0
        %1544 = vmatprep.subr.bf16.mxu0 0
        %1545 = vmatpush1.bf16.msra.mxu0 0
        %1546 = vmatprep.subr.bf16.mxu0 0
        %1547 = vmatpush1.bf16.msra.mxu0 0
        %1548 = vmatprep.subr.bf16.mxu0 0
        %1549 = vmatpush1.bf16.msra.mxu0 0
        %1550 = vmatprep.subr.bf16.mxu0 0
        %1551 = vmatpush1.bf16.msra.mxu0 0
        %1552 = vmatprep.subr.bf16.mxu0 0
        %1553 = vmatpush1.bf16.msra.mxu0 0
        %1554 = vmatprep.subr.bf16.mxu0 0
        %1555 = vmatpush1.bf16.msra.mxu0 0
        %1556 = vmatprep.subr.bf16.mxu0 0
        %1557 = vmatpush1.bf16.msra.mxu0 0
        %1558 = vmatprep.mubr.bf16.mxu0 0
        %1559 = vmatmul.mubr.bf16.gmra.mrb[0].mxu0 %v1521
        %v1560 = vpop.f32.mrb[0].mxu0
        %v1561 = vadd.f32 0.0, %v1560
        %v1562 = vpop.f32.mrb[0].mxu0
        %v1563 = vpop.f32.mrb[0].mxu0
        %v1564 = vpop.f32.mrb[0].mxu0
        %1565 = vdwg.mxu0
        %v1566 = vpack.c.bf16 %v1423, %v1423
        %v1567 = vpack.c.bf16 %v1469, %v1469
        %v1568 = vpack.c.bf16 %v1515, %v1515
        %v1569 = vpack.c.bf16 %v1561, %v1561
        %v1570 = vld [vmem:[%s6] sm:$0xf]
        %v1571 = vld [vmem:[%s6 + $0x4] sm:$0xf]
        %v1572 = vld [vmem:[%s6 + $0x8] sm:$0xf]
        %v1573 = vld [vmem:[%s6 + $0xc] sm:$0xf]
        %v1575 = vsel %vm1164, %v1566, 0
        %v1578 = vsel %vm1384, %v1570, 0
        %1580 = vmatprep.subr.bf16.mxu0 0
        %1581 = vmatpush1.bf16.msra.mxu0 %v1578
        %1582 = vmatprep.subr.bf16.mxu0 0
        %1583 = vmatpush1.bf16.msra.mxu0 0
        %1584 = vmatprep.subr.bf16.mxu0 0
        %1585 = vmatpush1.bf16.msra.mxu0 0
        %1586 = vmatprep.subr.bf16.mxu0 0
        %1587 = vmatpush1.bf16.msra.mxu0 0
        %1588 = vmatprep.subr.bf16.mxu0 0
        %1589 = vmatpush1.bf16.msra.mxu0 0
        %1590 = vmatprep.subr.bf16.mxu0 0
        %1591 = vmatpush1.bf16.msra.mxu0 0
        %1592 = vmatprep.subr.bf16.mxu0 0
        %1593 = vmatpush1.bf16.msra.mxu0 0
        %1594 = vmatprep.subr.bf16.mxu0 0
        %1595 = vmatpush1.bf16.msra.mxu0 0
        %1596 = vmatprep.subr.bf16.mxu0 0
        %1597 = vmatpush1.bf16.msra.mxu0 0
        %1598 = vmatprep.subr.bf16.mxu0 0
        %1599 = vmatpush1.bf16.msra.mxu0 0
        %1600 = vmatprep.subr.bf16.mxu0 0
        %1601 = vmatpush1.bf16.msra.mxu0 0
        %1602 = vmatprep.subr.bf16.mxu0 0
        %1603 = vmatpush1.bf16.msra.mxu0 0
        %1604 = vmatprep.subr.bf16.mxu0 0
        %1605 = vmatpush1.bf16.msra.mxu0 0
        %1606 = vmatprep.subr.bf16.mxu0 0
        %1607 = vmatpush1.bf16.msra.mxu0 0
        %1608 = vmatprep.subr.bf16.mxu0 0
        %1609 = vmatpush1.bf16.msra.mxu0 0
        %1610 = vmatprep.subr.bf16.mxu0 0
        %1611 = vmatpush1.bf16.msra.mxu0 0
        %1612 = vmatprep.mubr.bf16.mxu0 0
        %1613 = vmatmul.mubr.bf16.gmra.mrb[0].mxu0 %v1575
        %v1614 = vpop.f32.mrb[0].mxu0
        %v1615 = vadd.f32 0.0, %v1614
        %v1616 = vpop.f32.mrb[0].mxu0
        %v1617 = vpop.f32.mrb[0].mxu0
        %v1618 = vpop.f32.mrb[0].mxu0
        %1619 = vdwg.mxu0
        %v1621 = vsel %vm1164, %v1567, 0
        %v1624 = vsel %vm1384, %v1571, 0
        %1626 = vmatprep.subr.bf16.mxu0 0
        %1627 = vmatpush1.bf16.msra.mxu0 %v1624
        %1628 = vmatprep.subr.bf16.mxu0 0
        %1629 = vmatpush1.bf16.msra.mxu0 0
        %1630 = vmatprep.subr.bf16.mxu0 0
        %1631 = vmatpush1.bf16.msra.mxu0 0
        %1632 = vmatprep.subr.bf16.mxu0 0
        %1633 = vmatpush1.bf16.msra.mxu0 0
        %1634 = vmatprep.subr.bf16.mxu0 0
        %1635 = vmatpush1.bf16.msra.mxu0 0
        %1636 = vmatprep.subr.bf16.mxu0 0
        %1637 = vmatpush1.bf16.msra.mxu0 0
        %1638 = vmatprep.subr.bf16.mxu0 0
        %1639 = vmatpush1.bf16.msra.mxu0 0
        %1640 = vmatprep.subr.bf16.mxu0 0
        %1641 = vmatpush1.bf16.msra.mxu0 0
        %1642 = vmatprep.subr.bf16.mxu0 0
        %1643 = vmatpush1.bf16.msra.mxu0 0
        %1644 = vmatprep.subr.bf16.mxu0 0
        %1645 = vmatpush1.bf16.msra.mxu0 0
        %1646 = vmatprep.subr.bf16.mxu0 0
        %1647 = vmatpush1.bf16.msra.mxu0 0
        %1648 = vmatprep.subr.bf16.mxu0 0
        %1649 = vmatpush1.bf16.msra.mxu0 0
        %1650 = vmatprep.subr.bf16.mxu0 0
        %1651 = vmatpush1.bf16.msra.mxu0 0
        %1652 = vmatprep.subr.bf16.mxu0 0
        %1653 = vmatpush1.bf16.msra.mxu0 0
        %1654 = vmatprep.subr.bf16.mxu0 0
        %1655 = vmatpush1.bf16.msra.mxu0 0
        %1656 = vmatprep.subr.bf16.mxu0 0
        %1657 = vmatpush1.bf16.msra.mxu0 0
        %1658 = vmatprep.mubr.bf16.mxu0 0
        %1659 = vmatmul.mubr.bf16.gmra.mrb[0].mxu0 %v1621
        %v1660 = vpop.f32.mrb[0].mxu0
        %v1661 = vadd.f32 0.0, %v1660
        %v1662 = vpop.f32.mrb[0].mxu0
        %v1663 = vpop.f32.mrb[0].mxu0
        %v1664 = vpop.f32.mrb[0].mxu0
        %1665 = vdwg.mxu0
        %v1667 = vsel %vm1164, %v1568, 0
        %v1670 = vsel %vm1384, %v1572, 0
        %1672 = vmatprep.subr.bf16.mxu0 0
        %1673 = vmatpush1.bf16.msra.mxu0 %v1670
        %1674 = vmatprep.subr.bf16.mxu0 0
        %1675 = vmatpush1.bf16.msra.mxu0 0
        %1676 = vmatprep.subr.bf16.mxu0 0
        %1677 = vmatpush1.bf16.msra.mxu0 0
        %1678 = vmatprep.subr.bf16.mxu0 0
        %1679 = vmatpush1.bf16.msra.mxu0 0
        %1680 = vmatprep.subr.bf16.mxu0 0
        %1681 = vmatpush1.bf16.msra.mxu0 0
        %1682 = vmatprep.subr.bf16.mxu0 0
        %1683 = vmatpush1.bf16.msra.mxu0 0
        %1684 = vmatprep.subr.bf16.mxu0 0
        %1685 = vmatpush1.bf16.msra.mxu0 0
        %1686 = vmatprep.subr.bf16.mxu0 0
        %1687 = vmatpush1.bf16.msra.mxu0 0
        %1688 = vmatprep.subr.bf16.mxu0 0
        %1689 = vmatpush1.bf16.msra.mxu0 0
        %1690 = vmatprep.subr.bf16.mxu0 0
        %1691 = vmatpush1.bf16.msra.mxu0 0
        %1692 = vmatprep.subr.bf16.mxu0 0
        %1693 = vmatpush1.bf16.msra.mxu0 0
        %1694 = vmatprep.subr.bf16.mxu0 0
        %1695 = vmatpush1.bf16.msra.mxu0 0
        %1696 = vmatprep.subr.bf16.mxu0 0
        %1697 = vmatpush1.bf16.msra.mxu0 0
        %1698 = vmatprep.subr.bf16.mxu0 0
        %1699 = vmatpush1.bf16.msra.mxu0 0
        %1700 = vmatprep.subr.bf16.mxu0 0
        %1701 = vmatpush1.bf16.msra.mxu0 0
        %1702 = vmatprep.subr.bf16.mxu0 0
        %1703 = vmatpush1.bf16.msra.mxu0 0
        %1704 = vmatprep.mubr.bf16.mxu0 0
        %1705 = vmatmul.mubr.bf16.gmra.mrb[0].mxu0 %v1667
        %v1706 = vpop.f32.mrb[0].mxu0
        %v1707 = vadd.f32 0.0, %v1706
        %v1708 = vpop.f32.mrb[0].mxu0
        %v1709 = vpop.f32.mrb[0].mxu0
        %v1710 = vpop.f32.mrb[0].mxu0
        %1711 = vdwg.mxu0
        %v1713 = vsel %vm1164, %v1569, 0
        %v1716 = vsel %vm1384, %v1573, 0
        %1718 = vmatprep.subr.bf16.mxu0 0
        %1719 = vmatpush1.bf16.msra.mxu0 %v1716
        %1720 = vmatprep.subr.bf16.mxu0 0
        %1721 = vmatpush1.bf16.msra.mxu0 0
        %1722 = vmatprep.subr.bf16.mxu0 0
        %1723 = vmatpush1.bf16.msra.mxu0 0
        %1724 = vmatprep.subr.bf16.mxu0 0
        %1725 = vmatpush1.bf16.msra.mxu0 0
        %1726 = vmatprep.subr.bf16.mxu0 0
        %1727 = vmatpush1.bf16.msra.mxu0 0
        %1728 = vmatprep.subr.bf16.mxu0 0
        %1729 = vmatpush1.bf16.msra.mxu0 0
        %1730 = vmatprep.subr.bf16.mxu0 0
        %1731 = vmatpush1.bf16.msra.mxu0 0
        %1732 = vmatprep.subr.bf16.mxu0 0
        %1733 = vmatpush1.bf16.msra.mxu0 0
        %1734 = vmatprep.subr.bf16.mxu0 0
        %1735 = vmatpush1.bf16.msra.mxu0 0
        %1736 = vmatprep.subr.bf16.mxu0 0
        %1737 = vmatpush1.bf16.msra.mxu0 0
        %1738 = vmatprep.subr.bf16.mxu0 0
        %1739 = vmatpush1.bf16.msra.mxu0 0
        %1740 = vmatprep.subr.bf16.mxu0 0
        %1741 = vmatpush1.bf16.msra.mxu0 0
        %1742 = vmatprep.subr.bf16.mxu0 0
        %1743 = vmatpush1.bf16.msra.mxu0 0
        %1744 = vmatprep.subr.bf16.mxu0 0
        %1745 = vmatpush1.bf16.msra.mxu0 0
        %1746 = vmatprep.subr.bf16.mxu0 0
        %1747 = vmatpush1.bf16.msra.mxu0 0
        %1748 = vmatprep.subr.bf16.mxu0 0
        %1749 = vmatpush1.bf16.msra.mxu0 0
        %1750 = vmatprep.mubr.bf16.mxu0 0
        %1751 = vmatmul.mubr.bf16.gmra.mrb[0].mxu0 %v1713
        %v1752 = vpop.f32.mrb[0].mxu0
        %v1753 = vadd.f32 0.0, %v1752
        %v1754 = vpop.f32.mrb[0].mxu0
        %v1755 = vpop.f32.mrb[0].mxu0
        %v1756 = vpop.f32.mrb[0].mxu0
        %1757 = vdwg.mxu0
        %v1758 = vsel %vm614, %v1615, 0.0
        %v1759 = vsel %vm614, %v1661, 0.0
        %v1760 = vadd.f32 %v1758, %v1759
        %v1761 = vsel %vm614, %v1707, 0.0
        %v1762 = vadd.f32 %v1760, %v1761
        %v1763 = vsel %vm614, %v1753, 0.0
        %v1764 = vadd.f32 %v1762, %v1763
        %v1765 = vld [vmem:[%s7] sm:$0x1]
        %v1767 = vlaneseq
        %v1768 = vshrl.u32 %v1767, 7
        %v1769 = vsub.s32 0, %v1768
        %v1770 = vrot.slane %v1765, %v1769
        %v1772 = vadd.f32 %v1764, %v1770
        %v1773 = vadd.f32 %v642, %v1772
        %v1774 = vld [vmem:[%s8] sm:$0x1]
        %v1775 = vld [vmem:[%s9] sm:$0x1]
        %v1776 = vsel %vm614, %v1773, 0.0
        %1777 = vadd.xlane.f32.xlu0 %v1776
        %v1778 = vpop.xlane.xlu0 %1777
        %v1779 = vmul.f32 %v1778, %v618
        %v1780 = vsub.f32 %v1773, %v1779
        %v1781 = vmul.f32 %v1780, %v1780
        %v1782 = vsel %vm614, %v1781, 0.0
        %1783 = vadd.xlane.f32.xlu0 %v1782
        %v1784 = vpop.xlane.xlu0 %1783
        %v1785 = vmul.f32 %v1784, %v618
        %v1786 = vadd.f32 %v1785, 1e-12
        %v1787 = vrsqrt.pop %v1786
        %v1788 = vmul.f32 %v1780, %v1787
        %v1790 = vlaneseq
        %v1791 = vshrl.u32 %v1790, 7
        %v1792 = vsub.s32 0, %v1791
        %v1793 = vrot.slane %v1774, %v1792
        %v1795 = vmul.f32 %v1788, %v1793
        %v1797 = vlaneseq
        %v1798 = vshrl.u32 %v1797, 7
        %v1799 = vsub.s32 0, %v1798
        %v1800 = vrot.slane %v1775, %v1799
        %v1802 = vadd.f32 %v1795, %v1800
        %v1803 = vpack.c.bf16 %v1802, %v1802
        %v1804 = vld [vmem:[%s10] sm:$0xf]
        %v1805 = vld [vmem:[%s10 + $0x4] sm:$0xf]
        %v1806 = vld [vmem:[%s10 + $0x8] sm:$0xf]
        %v1807 = vld [vmem:[%s10 + $0xc] sm:$0xf]
        %v1808 = vld [vmem:[%s11] sm:$0x1]
        %v1810 = vlaneseq
        %v1811 = vshrl.u32 %v1810, 7
        %v1812 = vsub.s32 0, %v1811
        %v1813 = vrot.slane %v1808, %v1812
        %v1819 = vunpack.c.l.b16 %v1804
        %v1820 = vunpack.c.l.b16 %v1805
        %v1821 = vunpack.c.l.b16 %v1806
        %v1822 = vunpack.c.l.b16 %v1807
        %v1823 = vpack.c.b16 %v1820, %v1819
        %v1824 = vpack.c.b16 %v1822, %v1821
        %v1828 = vsel %vm614, %v1803, 0
        %1830 = vmatprep.subr.bf16.mxu0 0
        %1831 = vmatpush1.bf16.msra.mxu0 %v1823
        %1832 = vmatprep.subr.bf16.mxu0 0
        %1833 = vmatpush1.bf16.msra.mxu0 %v1824
        %1834 = vmatprep.subr.bf16.mxu0 0
        %1835 = vmatpush1.bf16.msra.mxu0 0
        %1836 = vmatprep.subr.bf16.mxu0 0
        %1837 = vmatpush1.bf16.msra.mxu0 0
        %1838 = vmatprep.subr.bf16.mxu0 0
        %1839 = vmatpush1.bf16.msra.mxu0 0
        %1840 = vmatprep.subr.bf16.mxu0 0
        %1841 = vmatpush1.bf16.msra.mxu0 0
        %1842 = vmatprep.subr.bf16.mxu0 0
        %1843 = vmatpush1.bf16.msra.mxu0 0
        %1844 = vmatprep.subr.bf16.mxu0 0
        %1845 = vmatpush1.bf16.msra.mxu0 0
        %1846 = vmatprep.subr.bf16.mxu0 0
        %1847 = vmatpush1.bf16.msra.mxu0 0
        %1848 = vmatprep.subr.bf16.mxu0 0
        %1849 = vmatpush1.bf16.msra.mxu0 0
        %1850 = vmatprep.subr.bf16.mxu0 0
        %1851 = vmatpush1.bf16.msra.mxu0 0
        %1852 = vmatprep.subr.bf16.mxu0 0
        %1853 = vmatpush1.bf16.msra.mxu0 0
        %1854 = vmatprep.subr.bf16.mxu0 0
        %1855 = vmatpush1.bf16.msra.mxu0 0
        %1856 = vmatprep.subr.bf16.mxu0 0
        %1857 = vmatpush1.bf16.msra.mxu0 0
        %1858 = vmatprep.subr.bf16.mxu0 0
        %1859 = vmatpush1.bf16.msra.mxu0 0
        %1860 = vmatprep.subr.bf16.mxu0 0
        %1861 = vmatpush1.bf16.msra.mxu0 0
        %1862 = vmatprep.mubr.bf16.mxu0 0
        %1863 = vmatmul.mubr.bf16.gmra.mrb[0].mxu0 %v1828
        %v1864 = vpop.f32.mrb[0].mxu0
        %v1865 = vadd.f32 %v1813, %v1864
        %v1866 = vpop.f32.mrb[0].mxu0
        %v1867 = vpop.f32.mrb[0].mxu0
        %v1868 = vpop.f32.mrb[0].mxu0
        %1869 = vdwg.mxu0
        %v1870 = vmul.f32 %v1865, %v1865
        %v1871 = vmul.f32 %v1865, %v1870
        %v1872 = vmul.f32 %v1871, 0.044715
        %v1873 = vadd.f32 %v1865, %v1872
        %v1874 = vmul.f32 %v1873, 0.7978846
        %v1875 = vtanh.pop %v1874
        %v1876 = vadd.f32 %v1875, 1.0
        %v1877 = vmul.f32 %v1876, 0.5
        %v1878 = vmul.f32 %v1865, %v1877
        %v1879 = vpack.c.bf16 %v1878, %v1878
        %v1880 = vld [vmem:[%s12] sm:$0xf]
        %v1881 = vld [vmem:[%s12 + $0x4] sm:$0xf]
        %v1882 = vld [vmem:[%s12 + $0x8] sm:$0xf]
        %v1883 = vld [vmem:[%s12 + $0xc] sm:$0xf]
        %v1884 = vld [vmem:[%s12 + $0x10] sm:$0xf]
        %v1885 = vld [vmem:[%s12 + $0x14] sm:$0xf]
        %v1886 = vld [vmem:[%s12 + $0x18] sm:$0xf]
        %v1887 = vld [vmem:[%s12 + $0x1c] sm:$0xf]
        %v1888 = vld [vmem:[%s13] sm:$0x1]
        %v1890 = vlaneseq
        %v1891 = vshrl.u32 %v1890, 7
        %v1892 = vsub.s32 0, %v1891
        %v1893 = vrot.slane %v1888, %v1892
        %v1903 = vunpack.c.l.b16 %v1880
        %v1904 = vunpack.c.l.b16 %v1881
        %v1905 = vunpack.c.l.b16 %v1882
        %v1906 = vunpack.c.l.b16 %v1883
        %v1907 = vunpack.c.l.b16 %v1884
        %v1908 = vunpack.c.l.b16 %v1885
        %v1909 = vunpack.c.l.b16 %v1886
        %v1910 = vunpack.c.l.b16 %v1887
        %v1911 = vpack.c.b16 %v1904, %v1903
        %v1912 = vpack.c.b16 %v1906, %v1905
        %v1913 = vpack.c.b16 %v1908, %v1907
        %v1914 = vpack.c.b16 %v1910, %v1909
        %vm1919 = vcmask 523264
        %v1921 = vsel %vm1919, %v1879, 0
        %1923 = vmatprep.subr.bf16.mxu0 0
        %1924 = vmatpush1.bf16.msra.mxu0 %v1911
        %1925 = vmatprep.subr.bf16.mxu0 0
        %1926 = vmatpush1.bf16.msra.mxu0 %v1912
        %1927 = vmatprep.subr.bf16.mxu0 0
        %1928 = vmatpush1.bf16.msra.mxu0 %v1913
        %1929 = vmatprep.subr.bf16.mxu0 0
        %1930 = vmatpush1.bf16.msra.mxu0 %v1914
        %1931 = vmatprep.subr.bf16.mxu0 0
        %1932 = vmatpush1.bf16.msra.mxu0 0
        %1933 = vmatprep.subr.bf16.mxu0 0
        %1934 = vmatpush1.bf16.msra.mxu0 0
        %1935 = vmatprep.subr.bf16.mxu0 0
        %1936 = vmatpush1.bf16.msra.mxu0 0
        %1937 = vmatprep.subr.bf16.mxu0 0
        %1938 = vmatpush1.bf16.msra.mxu0 0
        %1939 = vmatprep.subr.bf16.mxu0 0
        %1940 = vmatpush1.bf16.msra.mxu0 0
        %1941 = vmatprep.subr.bf16.mxu0 0
        %1942 = vmatpush1.bf16.msra.mxu0 0
        %1943 = vmatprep.subr.bf16.mxu0 0
        %1944 = vmatpush1.bf16.msra.mxu0 0
        %1945 = vmatprep.subr.bf16.mxu0 0
        %1946 = vmatpush1.bf16.msra.mxu0 0
        %1947 = vmatprep.subr.bf16.mxu0 0
        %1948 = vmatpush1.bf16.msra.mxu0 0
        %1949 = vmatprep.subr.bf16.mxu0 0
        %1950 = vmatpush1.bf16.msra.mxu0 0
        %1951 = vmatprep.subr.bf16.mxu0 0
        %1952 = vmatpush1.bf16.msra.mxu0 0
        %1953 = vmatprep.subr.bf16.mxu0 0
        %1954 = vmatpush1.bf16.msra.mxu0 0
        %1955 = vmatprep.mubr.bf16.mxu0 0
        %1956 = vmatmul.mubr.bf16.gmra.mrb[0].mxu0 %v1921
        %v1957 = vpop.f32.mrb[0].mxu0
        %v1958 = vadd.f32 %v1893, %v1957
        %v1959 = vpop.f32.mrb[0].mxu0
        %v1960 = vpop.f32.mrb[0].mxu0
        %v1961 = vpop.f32.mrb[0].mxu0
        %1962 = vdwg.mxu0
        %v1963 = vadd.f32 %v1802, %v1958
        %v1964 = vld [vmem:[%s14] sm:$0x1]
        %v1965 = vld [vmem:[%s15] sm:$0x1]
        %v1966 = vsel %vm614, %v1963, 0.0
        %1967 = vadd.xlane.f32.xlu0 %v1966
        %v1968 = vpop.xlane.xlu0 %1967
        %v1969 = vmul.f32 %v1968, %v618
        %v1970 = vsub.f32 %v1963, %v1969
        %v1971 = vmul.f32 %v1970, %v1970
        %v1972 = vsel %vm614, %v1971, 0.0
        %1973 = vadd.xlane.f32.xlu0 %v1972
        %v1974 = vpop.xlane.xlu0 %1973
        %v1975 = vmul.f32 %v1974, %v618
        %v1976 = vadd.f32 %v1975, 1e-12
        %v1977 = vrsqrt.pop %v1976
        %v1978 = vmul.f32 %v1970, %v1977
        %v1980 = vlaneseq
        %v1981 = vshrl.u32 %v1980, 7
        %v1982 = vsub.s32 0, %v1981
        %v1983 = vrot.slane %v1964, %v1982
        %v1985 = vmul.f32 %v1978, %v1983
        %v1987 = vlaneseq
        %v1988 = vshrl.u32 %v1987, 7
        %v1989 = vsub.s32 0, %v1988
        %v1990 = vrot.slane %v1965, %v1989
        %v1992 = vadd.f32 %v1985, %v1990
        %v1993 = vpack.c.bf16 %v1992, %v1992
        %s1994 = scalar_lea.vmem %s4, 16
        %v1995 = vld [vmem:[%s1994] sm:$0xf]
        %v1996 = vld [vmem:[%s1994 + $0x4] sm:$0xf]
        %v1997 = vld [vmem:[%s1994 + $0x8] sm:$0xf]
        %v1998 = vld [vmem:[%s1994 + $0xc] sm:$0xf]
        %s1999 = scalar_lea.vmem %s5, 1
        %v2000 = vld [vmem:[%s1999] sm:$0x1]
        %v2002 = vlaneseq
        %v2003 = vshrl.u32 %v2002, 7
        %v2004 = vsub.s32 0, %v2003
        %v2005 = vrot.slane %v2000, %v2004
        %v2011 = vunpack.c.l.b16 %v1995
        %v2012 = vunpack.c.l.b16 %v1996
        %v2013 = vunpack.c.l.b16 %v1997
        %v2014 = vunpack.c.l.b16 %v1998
        %v2015 = vpack.c.b16 %v2012, %v2011
        %v2016 = vpack.c.b16 %v2014, %v2013
        %v2020 = vsel %vm614, %v1993, 0
        %2022 = vmatprep.subr.bf16.mxu0 0
        %2023 = vmatpush1.bf16.msra.mxu0 %v2015
        %2024 = vmatprep.subr.bf16.mxu0 0
        %2025 = vmatpush1.bf16.msra.mxu0 %v2016
        %2026 = vmatprep.subr.bf16.mxu0 0
        %2027 = vmatpush1.bf16.msra.mxu0 0
        %2028 = vmatprep.subr.bf16.mxu0 0
        %2029 = vmatpush1.bf16.msra.mxu0 0
        %2030 = vmatprep.subr.bf16.mxu0 0
        %2031 = vmatpush1.bf16.msra.mxu0 0
        %2032 = vmatprep.subr.bf16.mxu0 0
        %2033 = vmatpush1.bf16.msra.mxu0 0
        %2034 = vmatprep.subr.bf16.mxu0 0
        %2035 = vmatpush1.bf16.msra.mxu0 0
        %2036 = vmatprep.subr.bf16.mxu0 0
        %2037 = vmatpush1.bf16.msra.mxu0 0
        %2038 = vmatprep.subr.bf16.mxu0 0
        %2039 = vmatpush1.bf16.msra.mxu0 0
        %2040 = vmatprep.subr.bf16.mxu0 0
        %2041 = vmatpush1.bf16.msra.mxu0 0
        %2042 = vmatprep.subr.bf16.mxu0 0
        %2043 = vmatpush1.bf16.msra.mxu0 0
        %2044 = vmatprep.subr.bf16.mxu0 0
        %2045 = vmatpush1.bf16.msra.mxu0 0
        %2046 = vmatprep.subr.bf16.mxu0 0
        %2047 = vmatpush1.bf16.msra.mxu0 0
        %2048 = vmatprep.subr.bf16.mxu0 0
        %2049 = vmatpush1.bf16.msra.mxu0 0
        %2050 = vmatprep.subr.bf16.mxu0 0
        %2051 = vmatpush1.bf16.msra.mxu0 0
        %2052 = vmatprep.subr.bf16.mxu0 0
        %2053 = vmatpush1.bf16.msra.mxu0 0
        %2054 = vmatprep.mubr.bf16.mxu0 0
        %2055 = vmatmul.mubr.bf16.gmra.mrb[0].mxu0 %v2020
        %v2056 = vpop.f32.mrb[0].mxu0
        %v2057 = vadd.f32 %v2005, %v2056
        %v2058 = vpop.f32.mrb[0].mxu0
        %v2059 = vpop.f32.mrb[0].mxu0
        %v2060 = vpop.f32.mrb[0].mxu0
        %2061 = vdwg.mxu0
        %2063 = vrot.lane.b32.xlu0 %v2057, 120
        %v2064 = vpop.permute.xlu0 %2063
        %2066 = vrot.lane.b32.xlu0 %v2057, 112
        %v2067 = vpop.permute.xlu0 %2066
        %2069 = vrot.lane.b32.xlu0 %v2057, 104
        %v2070 = vpop.permute.xlu0 %2069
        %2072 = vrot.lane.b32.xlu0 %v2057, 96
        %v2073 = vpop.permute.xlu0 %2072
        %2075 = vrot.lane.b32.xlu0 %v2057, 88
        %v2076 = vpop.permute.xlu0 %2075
        %2078 = vrot.lane.b32.xlu0 %v2057, 80
        %v2079 = vpop.permute.xlu0 %2078
        %2081 = vrot.lane.b32.xlu0 %v2057, 72
        %v2082 = vpop.permute.xlu0 %2081
        %2084 = vrot.lane.b32.xlu0 %v2057, 64
        %v2085 = vpop.permute.xlu0 %2084
        %2087 = vrot.lane.b32.xlu0 %v2057, 56
        %v2088 = vpop.permute.xlu0 %2087
        %2090 = vrot.lane.b32.xlu0 %v2057, 48
        %v2091 = vpop.permute.xlu0 %2090
        %2093 = vrot.lane.b32.xlu0 %v2057, 40
        %v2094 = vpop.permute.xlu0 %2093
        %v2096 = vcombine.low %v2057, %v2067
        %v2097 = vcombine.high %v2057, %v2067
        %v2099 = vunpack.c.l.s4 1983009808
        %v2100 = vunpack.c.0.s8 %v2099
        %v2101 = vlaneseq
        %v2102 = vshrl.u32 %v2101, 7
        %v2103 = vsub.s32 %v2100, %v2102
        %v2104 = vrot.slane %v2096, %v2103
        %v2106 = vunpack.c.l.s4 1983009808
        %v2107 = vunpack.c.0.s8 %v2106
        %v2108 = vlaneseq
        %v2109 = vshrl.u32 %v2108, 7
        %v2110 = vsub.s32 %v2107, %v2109
        %v2111 = vrot.slane %v2097, %v2110
        %v2112 = vcombine.low %v2064, %v2070
        %v2113 = vcombine.high %v2064, %v2070
        %v2115 = vunpack.c.l.s4 1983009808
        %v2116 = vunpack.c.0.s8 %v2115
        %v2117 = vlaneseq
        %v2118 = vshrl.u32 %v2117, 7
        %v2119 = vsub.s32 %v2116, %v2118
        %v2120 = vrot.slane %v2112, %v2119
        %v2122 = vunpack.c.l.s4 1983009808
        %v2123 = vunpack.c.0.s8 %v2122
        %v2124 = vlaneseq
        %v2125 = vshrl.u32 %v2124, 7
        %v2126 = vsub.s32 %v2123, %v2125
        %v2127 = vrot.slane %v2113, %v2126
        %v2128 = vcombine.low %v2073, %v2079
        %v2129 = vcombine.high %v2073, %v2079
        %v2131 = vunpack.c.l.s4 1983009808
        %v2132 = vunpack.c.0.s8 %v2131
        %v2133 = vlaneseq
        %v2134 = vshrl.u32 %v2133, 7
        %v2135 = vsub.s32 %v2132, %v2134
        %v2136 = vrot.slane %v2128, %v2135
        %v2138 = vunpack.c.l.s4 1983009808
        %v2139 = vunpack.c.0.s8 %v2138
        %v2140 = vlaneseq
        %v2141 = vshrl.u32 %v2140, 7
        %v2142 = vsub.s32 %v2139, %v2141
        %v2143 = vrot.slane %v2129, %v2142
        %v2144 = vcombine.low %v2076, %v2082
        %v2145 = vcombine.high %v2076, %v2082
        %v2147 = vunpack.c.l.s4 1983009808
        %v2148 = vunpack.c.0.s8 %v2147
        %v2149 = vlaneseq
        %v2150 = vshrl.u32 %v2149, 7
        %v2151 = vsub.s32 %v2148, %v2150
        %v2152 = vrot.slane %v2144, %v2151
        %v2154 = vunpack.c.l.s4 1983009808
        %v2155 = vunpack.c.0.s8 %v2154
        %v2156 = vlaneseq
        %v2157 = vshrl.u32 %v2156, 7
        %v2158 = vsub.s32 %v2155, %v2157
        %v2159 = vrot.slane %v2145, %v2158
        %v2160 = vcombine.low %v2104, %v2120
        %v2161 = vcombine.high %v2104, %v2120
        %v2163 = vunpack.c.l.s4 1934713408
        %v2164 = vunpack.c.0.s8 %v2163
        %v2165 = vlaneseq
        %v2166 = vshrl.u32 %v2165, 7
        %v2167 = vsub.s32 %v2164, %v2166
        %v2168 = vrot.slane %v2160, %v2167
        %v2170 = vunpack.c.l.s4 1934713408
        %v2171 = vunpack.c.0.s8 %v2170
        %v2172 = vlaneseq
        %v2173 = vshrl.u32 %v2172, 7
        %v2174 = vsub.s32 %v2171, %v2173
        %v2175 = vrot.slane %v2161, %v2174
        %v2176 = vcombine.low %v2111, %v2127
        %v2177 = vcombine.high %v2111, %v2127
        %v2179 = vunpack.c.l.s4 1934713408
        %v2180 = vunpack.c.0.s8 %v2179
        %v2181 = vlaneseq
        %v2182 = vshrl.u32 %v2181, 7
        %v2183 = vsub.s32 %v2180, %v2182
        %v2184 = vrot.slane %v2176, %v2183
        %v2186 = vunpack.c.l.s4 1934713408
        %v2187 = vunpack.c.0.s8 %v2186
        %v2188 = vlaneseq
        %v2189 = vshrl.u32 %v2188, 7
        %v2190 = vsub.s32 %v2187, %v2189
        %v2191 = vrot.slane %v2177, %v2190
        %v2192 = vcombine.low %v2136, %v2152
        %v2193 = vcombine.high %v2136, %v2152
        %v2195 = vunpack.c.l.s4 1934713408
        %v2196 = vunpack.c.0.s8 %v2195
        %v2197 = vlaneseq
        %v2198 = vshrl.u32 %v2197, 7
        %v2199 = vsub.s32 %v2196, %v2198
        %v2200 = vrot.slane %v2192, %v2199
        %v2202 = vunpack.c.l.s4 1934713408
        %v2203 = vunpack.c.0.s8 %v2202
        %v2204 = vlaneseq
        %v2205 = vshrl.u32 %v2204, 7
        %v2206 = vsub.s32 %v2203, %v2205
        %v2207 = vrot.slane %v2193, %v2206
        %v2208 = vcombine.low %v2143, %v2159
        %v2209 = vcombine.high %v2143, %v2159
        %v2211 = vunpack.c.l.s4 1934713408
        %v2212 = vunpack.c.0.s8 %v2211
        %v2213 = vlaneseq
        %v2214 = vshrl.u32 %v2213, 7
        %v2215 = vsub.s32 %v2212, %v2214
        %v2216 = vrot.slane %v2208, %v2215
        %v2218 = vunpack.c.l.s4 1934713408
        %v2219 = vunpack.c.0.s8 %v2218
        %v2220 = vlaneseq
        %v2221 = vshrl.u32 %v2220, 7
        %v2222 = vsub.s32 %v2219, %v2221
        %v2223 = vrot.slane %v2209, %v2222
        %v2224 = vcombine.low %v2168, %v2200
        %v2225 = vcombine.high %v2168, %v2200
        %v2226 = vcombine.low %v2175, %v2207
        %v2227 = vcombine.high %v2175, %v2207
        %v2228 = vcombine.low %v2184, %v2216
        %v2229 = vcombine.high %v2184, %v2216
        %v2230 = vcombine.low %v2191, %v2223
        %v2231 = vcombine.high %v2191, %v2223
        %v2232 = vcombine.low %v2085, %v2091
        %v2233 = vcombine.high %v2085, %v2091
        %v2235 = vunpack.c.l.s4 1983009808
        %v2236 = vunpack.c.0.s8 %v2235
        %v2237 = vlaneseq
        %v2238 = vshrl.u32 %v2237, 7
        %v2239 = vsub.s32 %v2236, %v2238
        %v2240 = vrot.slane %v2232, %v2239
        %v2242 = vunpack.c.l.s4 1983009808
        %v2243 = vunpack.c.0.s8 %v2242
        %v2244 = vlaneseq
        %v2245 = vshrl.u32 %v2244, 7
        %v2246 = vsub.s32 %v2243, %v2245
        %v2247 = vrot.slane %v2233, %v2246
        %v2248 = vcombine.low %v2088, %v2094
        %v2249 = vcombine.high %v2088, %v2094
        %v2251 = vunpack.c.l.s4 1983009808
        %v2252 = vunpack.c.0.s8 %v2251
        %v2253 = vlaneseq
        %v2254 = vshrl.u32 %v2253, 7
        %v2255 = vsub.s32 %v2252, %v2254
        %v2256 = vrot.slane %v2248, %v2255
        %v2258 = vunpack.c.l.s4 1983009808
        %v2259 = vunpack.c.0.s8 %v2258
        %v2260 = vlaneseq
        %v2261 = vshrl.u32 %v2260, 7
        %v2262 = vsub.s32 %v2259, %v2261
        %v2263 = vrot.slane %v2249, %v2262
        %v2264 = vcombine.low %v2240, %v2256
        %v2265 = vcombine.high %v2240, %v2256
        %v2267 = vunpack.c.l.s4 1934713408
        %v2268 = vunpack.c.0.s8 %v2267
        %v2269 = vlaneseq
        %v2270 = vshrl.u32 %v2269, 7
        %v2271 = vsub.s32 %v2268, %v2270
        %v2272 = vrot.slane %v2264, %v2271
        %v2274 = vunpack.c.l.s4 1934713408
        %v2275 = vunpack.c.0.s8 %v2274
        %v2276 = vlaneseq
        %v2277 = vshrl.u32 %v2276, 7
        %v2278 = vsub.s32 %v2275, %v2277
        %v2279 = vrot.slane %v2265, %v2278
        %v2280 = vcombine.low %v2247, %v2263
        %v2281 = vcombine.high %v2247, %v2263
        %v2283 = vunpack.c.l.s4 1934713408
        %v2284 = vunpack.c.0.s8 %v2283
        %v2285 = vlaneseq
        %v2286 = vshrl.u32 %v2285, 7
        %v2287 = vsub.s32 %v2284, %v2286
        %v2288 = vrot.slane %v2280, %v2287
        %v2290 = vunpack.c.l.s4 1934713408
        %v2291 = vunpack.c.0.s8 %v2290
        %v2292 = vlaneseq
        %v2293 = vshrl.u32 %v2292, 7
        %v2294 = vsub.s32 %v2291, %v2293
        %v2295 = vrot.slane %v2281, %v2294
        %v2296 = vcombine.high %v2272, 0.0
        %v2297 = vcombine.high %v2279, 0.0
        %v2298 = vcombine.high %v2288, 0.0
        %v2299 = vcombine.high %v2295, 0.0
        %v2300 = vcombine.low %v2224, %v2226
        %v2301 = vcombine.high %v2224, %v2226
        %v2303 = vunpack.c.l.s4 1983009808
        %v2304 = vunpack.c.0.s8 %v2303
        %v2305 = vlaneseq
        %v2306 = vshrl.u32 %v2305, 7
        %v2307 = vsub.s32 %v2304, %v2306
        %v2308 = vrot.slane %v2300, %v2307
        %v2310 = vunpack.c.l.s4 1983009808
        %v2311 = vunpack.c.0.s8 %v2310
        %v2312 = vlaneseq
        %v2313 = vshrl.u32 %v2312, 7
        %v2314 = vsub.s32 %v2311, %v2313
        %v2315 = vrot.slane %v2301, %v2314
        %v2316 = vcombine.low %v2225, %v2227
        %v2317 = vcombine.high %v2225, %v2227
        %v2319 = vunpack.c.l.s4 1983009808
        %v2320 = vunpack.c.0.s8 %v2319
        %v2321 = vlaneseq
        %v2322 = vshrl.u32 %v2321, 7
        %v2323 = vsub.s32 %v2320, %v2322
        %v2324 = vrot.slane %v2316, %v2323
        %v2326 = vunpack.c.l.s4 1983009808
        %v2327 = vunpack.c.0.s8 %v2326
        %v2328 = vlaneseq
        %v2329 = vshrl.u32 %v2328, 7
        %v2330 = vsub.s32 %v2327, %v2329
        %v2331 = vrot.slane %v2317, %v2330
        %v2332 = vcombine.low %v2228, %v2230
        %v2333 = vcombine.high %v2228, %v2230
        %v2335 = vunpack.c.l.s4 1983009808
        %v2336 = vunpack.c.0.s8 %v2335
        %v2337 = vlaneseq
        %v2338 = vshrl.u32 %v2337, 7
        %v2339 = vsub.s32 %v2336, %v2338
        %v2340 = vrot.slane %v2332, %v2339
        %v2342 = vunpack.c.l.s4 1983009808
        %v2343 = vunpack.c.0.s8 %v2342
        %v2344 = vlaneseq
        %v2345 = vshrl.u32 %v2344, 7
        %v2346 = vsub.s32 %v2343, %v2345
        %v2347 = vrot.slane %v2333, %v2346
        %v2348 = vcombine.low %v2229, %v2231
        %v2349 = vcombine.high %v2229, %v2231
        %v2351 = vunpack.c.l.s4 1983009808
        %v2352 = vunpack.c.0.s8 %v2351
        %v2353 = vlaneseq
        %v2354 = vshrl.u32 %v2353, 7
        %v2355 = vsub.s32 %v2352, %v2354
        %v2356 = vrot.slane %v2348, %v2355
        %v2358 = vunpack.c.l.s4 1983009808
        %v2359 = vunpack.c.0.s8 %v2358
        %v2360 = vlaneseq
        %v2361 = vshrl.u32 %v2360, 7
        %v2362 = vsub.s32 %v2359, %v2361
        %v2363 = vrot.slane %v2349, %v2362
        %v2364 = vcombine.low %v2308, %v2324
        %v2365 = vcombine.high %v2308, %v2324
        %v2367 = vunpack.c.l.s4 1934713408
        %v2368 = vunpack.c.0.s8 %v2367
        %v2369 = vlaneseq
        %v2370 = vshrl.u32 %v2369, 7
        %v2371 = vsub.s32 %v2368, %v2370
        %v2372 = vrot.slane %v2364, %v2371
        %v2374 = vunpack.c.l.s4 1934713408
        %v2375 = vunpack.c.0.s8 %v2374
        %v2376 = vlaneseq
        %v2377 = vshrl.u32 %v2376, 7
        %v2378 = vsub.s32 %v2375, %v2377
        %v2379 = vrot.slane %v2365, %v2378
        %v2380 = vcombine.low %v2315, %v2331
        %v2381 = vcombine.high %v2315, %v2331
        %v2383 = vunpack.c.l.s4 1934713408
        %v2384 = vunpack.c.0.s8 %v2383
        %v2385 = vlaneseq
        %v2386 = vshrl.u32 %v2385, 7
        %v2387 = vsub.s32 %v2384, %v2386
        %v2388 = vrot.slane %v2380, %v2387
        %v2390 = vunpack.c.l.s4 1934713408
        %v2391 = vunpack.c.0.s8 %v2390
        %v2392 = vlaneseq
        %v2393 = vshrl.u32 %v2392, 7
        %v2394 = vsub.s32 %v2391, %v2393
        %v2395 = vrot.slane %v2381, %v2394
        %v2396 = vcombine.low %v2340, %v2356
        %v2397 = vcombine.high %v2340, %v2356
        %v2399 = vunpack.c.l.s4 1934713408
        %v2400 = vunpack.c.0.s8 %v2399
        %v2401 = vlaneseq
        %v2402 = vshrl.u32 %v2401, 7
        %v2403 = vsub.s32 %v2400, %v2402
        %v2404 = vrot.slane %v2396, %v2403
        %v2406 = vunpack.c.l.s4 1934713408
        %v2407 = vunpack.c.0.s8 %v2406
        %v2408 = vlaneseq
        %v2409 = vshrl.u32 %v2408, 7
        %v2410 = vsub.s32 %v2407, %v2409
        %v2411 = vrot.slane %v2397, %v2410
        %v2412 = vcombine.low %v2347, %v2363
        %v2413 = vcombine.high %v2347, %v2363
        %v2415 = vunpack.c.l.s4 1934713408
        %v2416 = vunpack.c.0.s8 %v2415
        %v2417 = vlaneseq
        %v2418 = vshrl.u32 %v2417, 7
        %v2419 = vsub.s32 %v2416, %v2418
        %v2420 = vrot.slane %v2412, %v2419
        %v2422 = vunpack.c.l.s4 1934713408
        %v2423 = vunpack.c.0.s8 %v2422
        %v2424 = vlaneseq
        %v2425 = vshrl.u32 %v2424, 7
        %v2426 = vsub.s32 %v2423, %v2425
        %v2427 = vrot.slane %v2413, %v2426
        %v2428 = vcombine.low %v2372, %v2404
        %v2429 = vcombine.high %v2372, %v2404
        %v2430 = vcombine.low %v2379, %v2411
        %v2431 = vcombine.high %v2379, %v2411
        %v2432 = vcombine.low %v2388, %v2420
        %v2433 = vcombine.high %v2388, %v2420
        %v2434 = vcombine.low %v2395, %v2427
        %v2435 = vcombine.high %v2395, %v2427
        %v2436 = vcombine.low %v2272, %v2279
        %v2438 = vunpack.c.l.s4 1983009808
        %v2439 = vunpack.c.0.s8 %v2438
        %v2440 = vlaneseq
        %v2441 = vshrl.u32 %v2440, 7
        %v2442 = vsub.s32 %v2439, %v2441
        %v2443 = vrot.slane %v2436, %v2442
        %v2444 = vcombine.low %v2296, %v2297
        %v2446 = vunpack.c.l.s4 1983009808
        %v2447 = vunpack.c.0.s8 %v2446
        %v2448 = vlaneseq
        %v2449 = vshrl.u32 %v2448, 7
        %v2450 = vsub.s32 %v2447, %v2449
        %v2451 = vrot.slane %v2444, %v2450
        %v2452 = vcombine.low %v2288, %v2295
        %v2454 = vunpack.c.l.s4 1983009808
        %v2455 = vunpack.c.0.s8 %v2454
        %v2456 = vlaneseq
        %v2457 = vshrl.u32 %v2456, 7
        %v2458 = vsub.s32 %v2455, %v2457
        %v2459 = vrot.slane %v2452, %v2458
        %v2460 = vcombine.low %v2298, %v2299
        %v2462 = vunpack.c.l.s4 1983009808
        %v2463 = vunpack.c.0.s8 %v2462
        %v2464 = vlaneseq
        %v2465 = vshrl.u32 %v2464, 7
        %v2466 = vsub.s32 %v2463, %v2465
        %v2467 = vrot.slane %v2460, %v2466
        %v2468 = vcombine.low %v2443, %v2451
        %v2469 = vcombine.high %v2443, %v2451
        %v2471 = vunpack.c.l.s4 1934713408
        %v2472 = vunpack.c.0.s8 %v2471
        %v2473 = vlaneseq
        %v2474 = vshrl.u32 %v2473, 7
        %v2475 = vsub.s32 %v2472, %v2474
        %v2476 = vrot.slane %v2468, %v2475
        %v2478 = vunpack.c.l.s4 1934713408
        %v2479 = vunpack.c.0.s8 %v2478
        %v2480 = vlaneseq
        %v2481 = vshrl.u32 %v2480, 7
        %v2482 = vsub.s32 %v2479, %v2481
        %v2483 = vrot.slane %v2469, %v2482
        %v2484 = vcombine.low %v2459, %v2467
        %v2485 = vcombine.high %v2459, %v2467
        %v2487 = vunpack.c.l.s4 1934713408
        %v2488 = vunpack.c.0.s8 %v2487
        %v2489 = vlaneseq
        %v2490 = vshrl.u32 %v2489, 7
        %v2491 = vsub.s32 %v2488, %v2490
        %v2492 = vrot.slane %v2484, %v2491
        %v2494 = vunpack.c.l.s4 1934713408
        %v2495 = vunpack.c.0.s8 %v2494
        %v2496 = vlaneseq
        %v2497 = vshrl.u32 %v2496, 7
        %v2498 = vsub.s32 %v2495, %v2497
        %v2499 = vrot.slane %v2485, %v2498
        %v2500 = vcombine.low %v2476, %v2492
        %v2501 = vcombine.high %v2476, %v2492
        %v2502 = vcombine.low %v2483, %v2499
        %v2503 = vcombine.high %v2483, %v2499
        %v2504 = vpack.c.bf16 %v2428, %v2428
        %v2505 = vpack.c.bf16 %v2429, %v2429
        %v2506 = vpack.c.bf16 %v2430, %v2430
        %v2507 = vpack.c.bf16 %v2431, %v2431
        %v2508 = vpack.c.bf16 %v2432, %v2432
        %v2509 = vpack.c.bf16 %v2433, %v2433
        %v2510 = vpack.c.bf16 %v2434, %v2434
        %v2511 = vpack.c.bf16 %v2435, %v2435
        %v2512 = vpack.c.bf16 %v2500, %v2500
        %v2513 = vpack.c.bf16 %v2501, %v2501
        %v2514 = vpack.c.bf16 %v2502, %v2502
        %v2515 = vpack.c.bf16 %v2503, %v2503
        %v2517 = vsel %vm1164, %v2504, 0
        %v2520 = vsel %vm1164, %v2508, 0
        %2522 = vmatprep.subr.bf16.mxu0 0
        %2523 = vmatpush1.bf16.xpose.msra.mxu0 %v2520
        %2524 = vmatprep.subr.bf16.mxu0 0
        %2525 = vmatpush1.bf16.xpose.msra.mxu0 0
        %2526 = vmatprep.subr.bf16.mxu0 0
        %2527 = vmatpush1.bf16.xpose.msra.mxu0 0
        %2528 = vmatprep.subr.bf16.mxu0 0
        %2529 = vmatpush1.bf16.xpose.msra.mxu0 0
        %2530 = vmatprep.subr.bf16.mxu0 0
        %2531 = vmatpush1.bf16.xpose.msra.mxu0 0
        %2532 = vmatprep.subr.bf16.mxu0 0
        %2533 = vmatpush1.bf16.xpose.msra.mxu0 0
        %2534 = vmatprep.subr.bf16.mxu0 0
        %2535 = vmatpush1.bf16.xpose.msra.mxu0 0
        %2536 = vmatprep.subr.bf16.mxu0 0
        %2537 = vmatpush1.bf16.xpose.msra.mxu0 0
        %2538 = vmatprep.subr.bf16.mxu0 0
        %2539 = vmatpush1.bf16.xpose.msra.mxu0 0
        %2540 = vmatprep.subr.bf16.mxu0 0
        %2541 = vmatpush1.bf16.xpose.msra.mxu0 0
        %2542 = vmatprep.subr.bf16.mxu0 0
        %2543 = vmatpush1.bf16.xpose.msra.mxu0 0
        %2544 = vmatprep.subr.bf16.mxu0 0
        %2545 = vmatpush1.bf16.xpose.msra.mxu0 0
        %2546 = vmatprep.subr.bf16.mxu0 0
        %2547 = vmatpush1.bf16.xpose.msra.mxu0 0
        %2548 = vmatprep.subr.bf16.mxu0 0
        %2549 = vmatpush1.bf16.xpose.msra.mxu0 0
        %2550 = vmatprep.subr.bf16.mxu0 0
        %2551 = vmatpush1.bf16.xpose.msra.mxu0 0
        %2552 = vmatprep.subr.bf16.mxu0 0
        %2553 = vmatpush1.bf16.xpose.msra.mxu0 0
        %2554 = vmatprep.mubr.bf16.mxu0 0
        %2555 = vmatmul.mubr.bf16.gmra.mrb[0].mxu0 %v2517
        %v2556 = vpop.f32.mrb[0].mxu0
        %v2557 = vadd.f32 %v610, %v2556
        %v2558 = vpop.f32.mrb[0].mxu0
        %v2559 = vpop.f32.mrb[0].mxu0
        %v2560 = vpop.f32.mrb[0].mxu0
        %2561 = vdwg.mxu0
        %v2563 = vsel %vm1164, %v2505, 0
        %v2566 = vsel %vm1164, %v2509, 0
        %2568 = vmatprep.subr.bf16.mxu0 0
        %2569 = vmatpush1.bf16.xpose.msra.mxu0 %v2566
        %2570 = vmatprep.subr.bf16.mxu0 0
        %2571 = vmatpush1.bf16.xpose.msra.mxu0 0
        %2572 = vmatprep.subr.bf16.mxu0 0
        %2573 = vmatpush1.bf16.xpose.msra.mxu0 0
        %2574 = vmatprep.subr.bf16.mxu0 0
        %2575 = vmatpush1.bf16.xpose.msra.mxu0 0
        %2576 = vmatprep.subr.bf16.mxu0 0
        %2577 = vmatpush1.bf16.xpose.msra.mxu0 0
        %2578 = vmatprep.subr.bf16.mxu0 0
        %2579 = vmatpush1.bf16.xpose.msra.mxu0 0
        %2580 = vmatprep.subr.bf16.mxu0 0
        %2581 = vmatpush1.bf16.xpose.msra.mxu0 0
        %2582 = vmatprep.subr.bf16.mxu0 0
        %2583 = vmatpush1.bf16.xpose.msra.mxu0 0
        %2584 = vmatprep.subr.bf16.mxu0 0
        %2585 = vmatpush1.bf16.xpose.msra.mxu0 0
        %2586 = vmatprep.subr.bf16.mxu0 0
        %2587 = vmatpush1.bf16.xpose.msra.mxu0 0
        %2588 = vmatprep.subr.bf16.mxu0 0
        %2589 = vmatpush1.bf16.xpose.msra.mxu0 0
        %2590 = vmatprep.subr.bf16.mxu0 0
        %2591 = vmatpush1.bf16.xpose.msra.mxu0 0
        %2592 = vmatprep.subr.bf16.mxu0 0
        %2593 = vmatpush1.bf16.xpose.msra.mxu0 0
        %2594 = vmatprep.subr.bf16.mxu0 0
        %2595 = vmatpush1.bf16.xpose.msra.mxu0 0
        %2596 = vmatprep.subr.bf16.mxu0 0
        %2597 = vmatpush1.bf16.xpose.msra.mxu0 0
        %2598 = vmatprep.subr.bf16.mxu0 0
        %2599 = vmatpush1.bf16.xpose.msra.mxu0 0
        %2600 = vmatprep.mubr.bf16.mxu0 0
        %2601 = vmatmul.mubr.bf16.gmra.mrb[0].mxu0 %v2563
        %v2602 = vpop.f32.mrb[0].mxu0
        %v2603 = vadd.f32 %v610, %v2602
        %v2604 = vpop.f32.mrb[0].mxu0
        %v2605 = vpop.f32.mrb[0].mxu0
        %v2606 = vpop.f32.mrb[0].mxu0
        %2607 = vdwg.mxu0
        %v2609 = vsel %vm1164, %v2506, 0
        %v2612 = vsel %vm1164, %v2510, 0
        %2614 = vmatprep.subr.bf16.mxu0 0
        %2615 = vmatpush1.bf16.xpose.msra.mxu0 %v2612
        %2616 = vmatprep.subr.bf16.mxu0 0
        %2617 = vmatpush1.bf16.xpose.msra.mxu0 0
        %2618 = vmatprep.subr.bf16.mxu0 0
        %2619 = vmatpush1.bf16.xpose.msra.mxu0 0
        %2620 = vmatprep.subr.bf16.mxu0 0
        %2621 = vmatpush1.bf16.xpose.msra.mxu0 0
        %2622 = vmatprep.subr.bf16.mxu0 0
        %2623 = vmatpush1.bf16.xpose.msra.mxu0 0
        %2624 = vmatprep.subr.bf16.mxu0 0
        %2625 = vmatpush1.bf16.xpose.msra.mxu0 0
        %2626 = vmatprep.subr.bf16.mxu0 0
        %2627 = vmatpush1.bf16.xpose.msra.mxu0 0
        %2628 = vmatprep.subr.bf16.mxu0 0
        %2629 = vmatpush1.bf16.xpose.msra.mxu0 0
        %2630 = vmatprep.subr.bf16.mxu0 0
        %2631 = vmatpush1.bf16.xpose.msra.mxu0 0
        %2632 = vmatprep.subr.bf16.mxu0 0
        %2633 = vmatpush1.bf16.xpose.msra.mxu0 0
        %2634 = vmatprep.subr.bf16.mxu0 0
        %2635 = vmatpush1.bf16.xpose.msra.mxu0 0
        %2636 = vmatprep.subr.bf16.mxu0 0
        %2637 = vmatpush1.bf16.xpose.msra.mxu0 0
        %2638 = vmatprep.subr.bf16.mxu0 0
        %2639 = vmatpush1.bf16.xpose.msra.mxu0 0
        %2640 = vmatprep.subr.bf16.mxu0 0
        %2641 = vmatpush1.bf16.xpose.msra.mxu0 0
        %2642 = vmatprep.subr.bf16.mxu0 0
        %2643 = vmatpush1.bf16.xpose.msra.mxu0 0
        %2644 = vmatprep.subr.bf16.mxu0 0
        %2645 = vmatpush1.bf16.xpose.msra.mxu0 0
        %2646 = vmatprep.mubr.bf16.mxu0 0
        %2647 = vmatmul.mubr.bf16.gmra.mrb[0].mxu0 %v2609
        %v2648 = vpop.f32.mrb[0].mxu0
        %v2649 = vadd.f32 %v610, %v2648
        %v2650 = vpop.f32.mrb[0].mxu0
        %v2651 = vpop.f32.mrb[0].mxu0
        %v2652 = vpop.f32.mrb[0].mxu0
        %2653 = vdwg.mxu0
        %v2655 = vsel %vm1164, %v2507, 0
        %v2658 = vsel %vm1164, %v2511, 0
        %2660 = vmatprep.subr.bf16.mxu0 0
        %2661 = vmatpush1.bf16.xpose.msra.mxu0 %v2658
        %2662 = vmatprep.subr.bf16.mxu0 0
        %2663 = vmatpush1.bf16.xpose.msra.mxu0 0
        %2664 = vmatprep.subr.bf16.mxu0 0
        %2665 = vmatpush1.bf16.xpose.msra.mxu0 0
        %2666 = vmatprep.subr.bf16.mxu0 0
        %2667 = vmatpush1.bf16.xpose.msra.mxu0 0
        %2668 = vmatprep.subr.bf16.mxu0 0
        %2669 = vmatpush1.bf16.xpose.msra.mxu0 0
        %2670 = vmatprep.subr.bf16.mxu0 0
        %2671 = vmatpush1.bf16.xpose.msra.mxu0 0
        %2672 = vmatprep.subr.bf16.mxu0 0
        %2673 = vmatpush1.bf16.xpose.msra.mxu0 0
        %2674 = vmatprep.subr.bf16.mxu0 0
        %2675 = vmatpush1.bf16.xpose.msra.mxu0 0
        %2676 = vmatprep.subr.bf16.mxu0 0
        %2677 = vmatpush1.bf16.xpose.msra.mxu0 0
        %2678 = vmatprep.subr.bf16.mxu0 0
        %2679 = vmatpush1.bf16.xpose.msra.mxu0 0
        %2680 = vmatprep.subr.bf16.mxu0 0
        %2681 = vmatpush1.bf16.xpose.msra.mxu0 0
        %2682 = vmatprep.subr.bf16.mxu0 0
        %2683 = vmatpush1.bf16.xpose.msra.mxu0 0
        %2684 = vmatprep.subr.bf16.mxu0 0
        %2685 = vmatpush1.bf16.xpose.msra.mxu0 0
        %2686 = vmatprep.subr.bf16.mxu0 0
        %2687 = vmatpush1.bf16.xpose.msra.mxu0 0
        %2688 = vmatprep.subr.bf16.mxu0 0
        %2689 = vmatpush1.bf16.xpose.msra.mxu0 0
        %2690 = vmatprep.subr.bf16.mxu0 0
        %2691 = vmatpush1.bf16.xpose.msra.mxu0 0
        %2692 = vmatprep.mubr.bf16.mxu0 0
        %2693 = vmatmul.mubr.bf16.gmra.mrb[0].mxu0 %v2655
        %v2694 = vpop.f32.mrb[0].mxu0
        %v2695 = vadd.f32 %v610, %v2694
        %v2696 = vpop.f32.mrb[0].mxu0
        %v2697 = vpop.f32.mrb[0].mxu0
        %v2698 = vpop.f32.mrb[0].mxu0
        %2699 = vdwg.mxu0
        %v2700 = vmul.f32 %v2557, 1.442695
        %v2701 = vpow.pop %v2700
        %v2702 = vmul.f32 %v2603, 1.442695
        %v2703 = vpow.pop %v2702
        %v2704 = vmul.f32 %v2649, 1.442695
        %v2705 = vpow.pop %v2704
        %v2706 = vmul.f32 %v2695, 1.442695
        %v2707 = vpow.pop %v2706
        %v2708 = vsel %vm1164, %v2701, 0.0
        %2709 = vadd.xlane.f32.xlu0 %v2708
        %v2710 = vpop.xlane.xlu0 %2709
        %v2711 = vsel %vm1164, %v2703, 0.0
        %2712 = vadd.xlane.f32.xlu0 %v2711
        %v2713 = vpop.xlane.xlu0 %2712
        %v2714 = vsel %vm1164, %v2705, 0.0
        %2715 = vadd.xlane.f32.xlu0 %v2714
        %v2716 = vpop.xlane.xlu0 %2715
        %v2717 = vsel %vm1164, %v2707, 0.0
        %2718 = vadd.xlane.f32.xlu0 %v2717
        %v2719 = vpop.xlane.xlu0 %2718
        %v2720 = vrcp.pop %v2710
        %v2721 = vrcp.pop %v2713
        %v2722 = vrcp.pop %v2716
        %v2723 = vrcp.pop %v2719
        %v2724 = vmul.f32 %v2701, %v2720
        %v2725 = vmul.f32 %v2703, %v2721
        %v2726 = vmul.f32 %v2705, %v2722
        %v2727 = vmul.f32 %v2707, %v2723
        %v2728 = vpack.c.bf16 %v2724, %v2724
        %v2729 = vpack.c.bf16 %v2725, %v2725
        %v2730 = vpack.c.bf16 %v2726, %v2726
        %v2731 = vpack.c.bf16 %v2727, %v2727
        %v2733 = vsel %vm1164, %v2728, 0
        %v2736 = vsel %vm1384, %v2512, 0
        %2738 = vmatprep.subr.bf16.mxu0 0
        %2739 = vmatpush1.bf16.msra.mxu0 %v2736
        %2740 = vmatprep.subr.bf16.mxu0 0
        %2741 = vmatpush1.bf16.msra.mxu0 0
        %2742 = vmatprep.subr.bf16.mxu0 0
        %2743 = vmatpush1.bf16.msra.mxu0 0
        %2744 = vmatprep.subr.bf16.mxu0 0
        %2745 = vmatpush1.bf16.msra.mxu0 0
        %2746 = vmatprep.subr.bf16.mxu0 0
        %2747 = vmatpush1.bf16.msra.mxu0 0
        %2748 = vmatprep.subr.bf16.mxu0 0
        %2749 = vmatpush1.bf16.msra.mxu0 0
        %2750 = vmatprep.subr.bf16.mxu0 0
        %2751 = vmatpush1.bf16.msra.mxu0 0
        %2752 = vmatprep.subr.bf16.mxu0 0
        %2753 = vmatpush1.bf16.msra.mxu0 0
        %2754 = vmatprep.subr.bf16.mxu0 0
        %2755 = vmatpush1.bf16.msra.mxu0 0
        %2756 = vmatprep.subr.bf16.mxu0 0
        %2757 = vmatpush1.bf16.msra.mxu0 0
        %2758 = vmatprep.subr.bf16.mxu0 0
        %2759 = vmatpush1.bf16.msra.mxu0 0
        %2760 = vmatprep.subr.bf16.mxu0 0
        %2761 = vmatpush1.bf16.msra.mxu0 0
        %2762 = vmatprep.subr.bf16.mxu0 0
        %2763 = vmatpush1.bf16.msra.mxu0 0
        %2764 = vmatprep.subr.bf16.mxu0 0
        %2765 = vmatpush1.bf16.msra.mxu0 0
        %2766 = vmatprep.subr.bf16.mxu0 0
        %2767 = vmatpush1.bf16.msra.mxu0 0
        %2768 = vmatprep.subr.bf16.mxu0 0
        %2769 = vmatpush1.bf16.msra.mxu0 0
        %2770 = vmatprep.mubr.bf16.mxu0 0
        %2771 = vmatmul.mubr.bf16.gmra.mrb[0].mxu0 %v2733
        %v2772 = vpop.f32.mrb[0].mxu0
        %v2773 = vadd.f32 0.0, %v2772
        %v2774 = vpop.f32.mrb[0].mxu0
        %v2775 = vpop.f32.mrb[0].mxu0
        %v2776 = vpop.f32.mrb[0].mxu0
        %2777 = vdwg.mxu0
        %v2779 = vsel %vm1164, %v2729, 0
        %v2782 = vsel %vm1384, %v2513, 0
        %2784 = vmatprep.subr.bf16.mxu0 0
        %2785 = vmatpush1.bf16.msra.mxu0 %v2782
        %2786 = vmatprep.subr.bf16.mxu0 0
        %2787 = vmatpush1.bf16.msra.mxu0 0
        %2788 = vmatprep.subr.bf16.mxu0 0
        %2789 = vmatpush1.bf16.msra.mxu0 0
        %2790 = vmatprep.subr.bf16.mxu0 0
        %2791 = vmatpush1.bf16.msra.mxu0 0
        %2792 = vmatprep.subr.bf16.mxu0 0
        %2793 = vmatpush1.bf16.msra.mxu0 0
        %2794 = vmatprep.subr.bf16.mxu0 0
        %2795 = vmatpush1.bf16.msra.mxu0 0
        %2796 = vmatprep.subr.bf16.mxu0 0
        %2797 = vmatpush1.bf16.msra.mxu0 0
        %2798 = vmatprep.subr.bf16.mxu0 0
        %2799 = vmatpush1.bf16.msra.mxu0 0
        %2800 = vmatprep.subr.bf16.mxu0 0
        %2801 = vmatpush1.bf16.msra.mxu0 0
        %2802 = vmatprep.subr.bf16.mxu0 0
        %2803 = vmatpush1.bf16.msra.mxu0 0
        %2804 = vmatprep.subr.bf16.mxu0 0
        %2805 = vmatpush1.bf16.msra.mxu0 0
        %2806 = vmatprep.subr.bf16.mxu0 0
        %2807 = vmatpush1.bf16.msra.mxu0 0
        %2808 = vmatprep.subr.bf16.mxu0 0
        %2809 = vmatpush1.bf16.msra.mxu0 0
        %2810 = vmatprep.subr.bf16.mxu0 0
        %2811 = vmatpush1.bf16.msra.mxu0 0
        %2812 = vmatprep.subr.bf16.mxu0 0
        %2813 = vmatpush1.bf16.msra.mxu0 0
        %2814 = vmatprep.subr.bf16.mxu0 0
        %2815 = vmatpush1.bf16.msra.mxu0 0
        %2816 = vmatprep.mubr.bf16.mxu0 0
        %2817 = vmatmul.mubr.bf16.gmra.mrb[0].mxu0 %v2779
        %v2818 = vpop.f32.mrb[0].mxu0
        %v2819 = vadd.f32 0.0, %v2818
        %v2820 = vpop.f32.mrb[0].mxu0
        %v2821 = vpop.f32.mrb[0].mxu0
        %v2822 = vpop.f32.mrb[0].mxu0
        %2823 = vdwg.mxu0
        %v2825 = vsel %vm1164, %v2730, 0
        %v2828 = vsel %vm1384, %v2514, 0
        %2830 = vmatprep.subr.bf16.mxu0 0
        %2831 = vmatpush1.bf16.msra.mxu0 %v2828
        %2832 = vmatprep.subr.bf16.mxu0 0
        %2833 = vmatpush1.bf16.msra.mxu0 0
        %2834 = vmatprep.subr.bf16.mxu0 0
        %2835 = vmatpush1.bf16.msra.mxu0 0
        %2836 = vmatprep.subr.bf16.mxu0 0
        %2837 = vmatpush1.bf16.msra.mxu0 0
        %2838 = vmatprep.subr.bf16.mxu0 0
        %2839 = vmatpush1.bf16.msra.mxu0 0
        %2840 = vmatprep.subr.bf16.mxu0 0
        %2841 = vmatpush1.bf16.msra.mxu0 0
        %2842 = vmatprep.subr.bf16.mxu0 0
        %2843 = vmatpush1.bf16.msra.mxu0 0
        %2844 = vmatprep.subr.bf16.mxu0 0
        %2845 = vmatpush1.bf16.msra.mxu0 0
        %2846 = vmatprep.subr.bf16.mxu0 0
        %2847 = vmatpush1.bf16.msra.mxu0 0
        %2848 = vmatprep.subr.bf16.mxu0 0
        %2849 = vmatpush1.bf16.msra.mxu0 0
        %2850 = vmatprep.subr.bf16.mxu0 0
        %2851 = vmatpush1.bf16.msra.mxu0 0
        %2852 = vmatprep.subr.bf16.mxu0 0
        %2853 = vmatpush1.bf16.msra.mxu0 0
        %2854 = vmatprep.subr.bf16.mxu0 0
        %2855 = vmatpush1.bf16.msra.mxu0 0
        %2856 = vmatprep.subr.bf16.mxu0 0
        %2857 = vmatpush1.bf16.msra.mxu0 0
        %2858 = vmatprep.subr.bf16.mxu0 0
        %2859 = vmatpush1.bf16.msra.mxu0 0
        %2860 = vmatprep.subr.bf16.mxu0 0
        %2861 = vmatpush1.bf16.msra.mxu0 0
        %2862 = vmatprep.mubr.bf16.mxu0 0
        %2863 = vmatmul.mubr.bf16.gmra.mrb[0].mxu0 %v2825
        %v2864 = vpop.f32.mrb[0].mxu0
        %v2865 = vadd.f32 0.0, %v2864
        %v2866 = vpop.f32.mrb[0].mxu0
        %v2867 = vpop.f32.mrb[0].mxu0
        %v2868 = vpop.f32.mrb[0].mxu0
        %2869 = vdwg.mxu0
        %v2871 = vsel %vm1164, %v2731, 0
        %v2874 = vsel %vm1384, %v2515, 0
        %2876 = vmatprep.subr.bf16.mxu0 0
        %2877 = vmatpush1.bf16.msra.mxu0 %v2874
        %2878 = vmatprep.subr.bf16.mxu0 0
        %2879 = vmatpush1.bf16.msra.mxu0 0
        %2880 = vmatprep.subr.bf16.mxu0 0
        %2881 = vmatpush1.bf16.msra.mxu0 0
        %2882 = vmatprep.subr.bf16.mxu0 0
        %2883 = vmatpush1.bf16.msra.mxu0 0
        %2884 = vmatprep.subr.bf16.mxu0 0
        %2885 = vmatpush1.bf16.msra.mxu0 0
        %2886 = vmatprep.subr.bf16.mxu0 0
        %2887 = vmatpush1.bf16.msra.mxu0 0
        %2888 = vmatprep.subr.bf16.mxu0 0
        %2889 = vmatpush1.bf16.msra.mxu0 0
        %2890 = vmatprep.subr.bf16.mxu0 0
        %2891 = vmatpush1.bf16.msra.mxu0 0
        %2892 = vmatprep.subr.bf16.mxu0 0
        %2893 = vmatpush1.bf16.msra.mxu0 0
        %2894 = vmatprep.subr.bf16.mxu0 0
        %2895 = vmatpush1.bf16.msra.mxu0 0
        %2896 = vmatprep.subr.bf16.mxu0 0
        %2897 = vmatpush1.bf16.msra.mxu0 0
        %2898 = vmatprep.subr.bf16.mxu0 0
        %2899 = vmatpush1.bf16.msra.mxu0 0
        %2900 = vmatprep.subr.bf16.mxu0 0
        %2901 = vmatpush1.bf16.msra.mxu0 0
        %2902 = vmatprep.subr.bf16.mxu0 0
        %2903 = vmatpush1.bf16.msra.mxu0 0
        %2904 = vmatprep.subr.bf16.mxu0 0
        %2905 = vmatpush1.bf16.msra.mxu0 0
        %2906 = vmatprep.subr.bf16.mxu0 0
        %2907 = vmatpush1.bf16.msra.mxu0 0
        %2908 = vmatprep.mubr.bf16.mxu0 0
        %2909 = vmatmul.mubr.bf16.gmra.mrb[0].mxu0 %v2871
        %v2910 = vpop.f32.mrb[0].mxu0
        %v2911 = vadd.f32 0.0, %v2910
        %v2912 = vpop.f32.mrb[0].mxu0
        %v2913 = vpop.f32.mrb[0].mxu0
        %v2914 = vpop.f32.mrb[0].mxu0
        %2915 = vdwg.mxu0
        %v2916 = vpack.c.bf16 %v2773, %v2773
        %v2917 = vpack.c.bf16 %v2819, %v2819
        %v2918 = vpack.c.bf16 %v2865, %v2865
        %v2919 = vpack.c.bf16 %v2911, %v2911
        %s2920 = scalar_lea.vmem %s6, 16
        %v2921 = vld [vmem:[%s2920] sm:$0xf]
        %v2922 = vld [vmem:[%s2920 + $0x4] sm:$0xf]
        %v2923 = vld [vmem:[%s2920 + $0x8] sm:$0xf]
        %v2924 = vld [vmem:[%s2920 + $0xc] sm:$0xf]
        %v2926 = vsel %vm1164, %v2916, 0
        %v2929 = vsel %vm1384, %v2921, 0
        %2931 = vmatprep.subr.bf16.mxu0 0
        %2932 = vmatpush1.bf16.msra.mxu0 %v2929
        %2933 = vmatprep.subr.bf16.mxu0 0
        %2934 = vmatpush1.bf16.msra.mxu0 0
        %2935 = vmatprep.subr.bf16.mxu0 0
        %2936 = vmatpush1.bf16.msra.mxu0 0
        %2937 = vmatprep.subr.bf16.mxu0 0
        %2938 = vmatpush1.bf16.msra.mxu0 0
        %2939 = vmatprep.subr.bf16.mxu0 0
        %2940 = vmatpush1.bf16.msra.mxu0 0
        %2941 = vmatprep.subr.bf16.mxu0 0
        %2942 = vmatpush1.bf16.msra.mxu0 0
        %2943 = vmatprep.subr.bf16.mxu0 0
        %2944 = vmatpush1.bf16.msra.mxu0 0
        %2945 = vmatprep.subr.bf16.mxu0 0
        %2946 = vmatpush1.bf16.msra.mxu0 0
        %2947 = vmatprep.subr.bf16.mxu0 0
        %2948 = vmatpush1.bf16.msra.mxu0 0
        %2949 = vmatprep.subr.bf16.mxu0 0
        %2950 = vmatpush1.bf16.msra.mxu0 0
        %2951 = vmatprep.subr.bf16.mxu0 0
        %2952 = vmatpush1.bf16.msra.mxu0 0
        %2953 = vmatprep.subr.bf16.mxu0 0
        %2954 = vmatpush1.bf16.msra.mxu0 0
        %2955 = vmatprep.subr.bf16.mxu0 0
        %2956 = vmatpush1.bf16.msra.mxu0 0
        %2957 = vmatprep.subr.bf16.mxu0 0
        %2958 = vmatpush1.bf16.msra.mxu0 0
        %2959 = vmatprep.subr.bf16.mxu0 0
        %2960 = vmatpush1.bf16.msra.mxu0 0
        %2961 = vmatprep.subr.bf16.mxu0 0
        %2962 = vmatpush1.bf16.msra.mxu0 0
        %2963 = vmatprep.mubr.bf16.mxu0 0
        %2964 = vmatmul.mubr.bf16.gmra.mrb[0].mxu0 %v2926
        %v2965 = vpop.f32.mrb[0].mxu0
        %v2966 = vadd.f32 0.0, %v2965
        %v2967 = vpop.f32.mrb[0].mxu0
        %v2968 = vpop.f32.mrb[0].mxu0
        %v2969 = vpop.f32.mrb[0].mxu0
        %2970 = vdwg.mxu0
        %v2972 = vsel %vm1164, %v2917, 0
        %v2975 = vsel %vm1384, %v2922, 0
        %2977 = vmatprep.subr.bf16.mxu0 0
        %2978 = vmatpush1.bf16.msra.mxu0 %v2975
        %2979 = vmatprep.subr.bf16.mxu0 0
        %2980 = vmatpush1.bf16.msra.mxu0 0
        %2981 = vmatprep.subr.bf16.mxu0 0
        %2982 = vmatpush1.bf16.msra.mxu0 0
        %2983 = vmatprep.subr.bf16.mxu0 0
        %2984 = vmatpush1.bf16.msra.mxu0 0
        %2985 = vmatprep.subr.bf16.mxu0 0
        %2986 = vmatpush1.bf16.msra.mxu0 0
        %2987 = vmatprep.subr.bf16.mxu0 0
        %2988 = vmatpush1.bf16.msra.mxu0 0
        %2989 = vmatprep.subr.bf16.mxu0 0
        %2990 = vmatpush1.bf16.msra.mxu0 0
        %2991 = vmatprep.subr.bf16.mxu0 0
        %2992 = vmatpush1.bf16.msra.mxu0 0
        %2993 = vmatprep.subr.bf16.mxu0 0
        %2994 = vmatpush1.bf16.msra.mxu0 0
        %2995 = vmatprep.subr.bf16.mxu0 0
        %2996 = vmatpush1.bf16.msra.mxu0 0
        %2997 = vmatprep.subr.bf16.mxu0 0
        %2998 = vmatpush1.bf16.msra.mxu0 0
        %2999 = vmatprep.subr.bf16.mxu0 0
        %3000 = vmatpush1.bf16.msra.mxu0 0
        %3001 = vmatprep.subr.bf16.mxu0 0
        %3002 = vmatpush1.bf16.msra.mxu0 0
        %3003 = vmatprep.subr.bf16.mxu0 0
        %3004 = vmatpush1.bf16.msra.mxu0 0
        %3005 = vmatprep.subr.bf16.mxu0 0
        %3006 = vmatpush1.bf16.msra.mxu0 0
        %3007 = vmatprep.subr.bf16.mxu0 0
        %3008 = vmatpush1.bf16.msra.mxu0 0
        %3009 = vmatprep.mubr.bf16.mxu0 0
        %3010 = vmatmul.mubr.bf16.gmra.mrb[0].mxu0 %v2972
        %v3011 = vpop.f32.mrb[0].mxu0
        %v3012 = vadd.f32 0.0, %v3011
        %v3013 = vpop.f32.mrb[0].mxu0
        %v3014 = vpop.f32.mrb[0].mxu0
        %v3015 = vpop.f32.mrb[0].mxu0
        %3016 = vdwg.mxu0
        %v3018 = vsel %vm1164, %v2918, 0
        %v3021 = vsel %vm1384, %v2923, 0
        %3023 = vmatprep.subr.bf16.mxu0 0
        %3024 = vmatpush1.bf16.msra.mxu0 %v3021
        %3025 = vmatprep.subr.bf16.mxu0 0
        %3026 = vmatpush1.bf16.msra.mxu0 0
        %3027 = vmatprep.subr.bf16.mxu0 0
        %3028 = vmatpush1.bf16.msra.mxu0 0
        %3029 = vmatprep.subr.bf16.mxu0 0
        %3030 = vmatpush1.bf16.msra.mxu0 0
        %3031 = vmatprep.subr.bf16.mxu0 0
        %3032 = vmatpush1.bf16.msra.mxu0 0
        %3033 = vmatprep.subr.bf16.mxu0 0
        %3034 = vmatpush1.bf16.msra.mxu0 0
        %3035 = vmatprep.subr.bf16.mxu0 0
        %3036 = vmatpush1.bf16.msra.mxu0 0
        %3037 = vmatprep.subr.bf16.mxu0 0
        %3038 = vmatpush1.bf16.msra.mxu0 0
        %3039 = vmatprep.subr.bf16.mxu0 0
        %3040 = vmatpush1.bf16.msra.mxu0 0
        %3041 = vmatprep.subr.bf16.mxu0 0
        %3042 = vmatpush1.bf16.msra.mxu0 0
        %3043 = vmatprep.subr.bf16.mxu0 0
        %3044 = vmatpush1.bf16.msra.mxu0 0
        %3045 = vmatprep.subr.bf16.mxu0 0
        %3046 = vmatpush1.bf16.msra.mxu0 0
        %3047 = vmatprep.subr.bf16.mxu0 0
        %3048 = vmatpush1.bf16.msra.mxu0 0
        %3049 = vmatprep.subr.bf16.mxu0 0
        %3050 = vmatpush1.bf16.msra.mxu0 0
        %3051 = vmatprep.subr.bf16.mxu0 0
        %3052 = vmatpush1.bf16.msra.mxu0 0
        %3053 = vmatprep.subr.bf16.mxu0 0
        %3054 = vmatpush1.bf16.msra.mxu0 0
        %3055 = vmatprep.mubr.bf16.mxu0 0
        %3056 = vmatmul.mubr.bf16.gmra.mrb[0].mxu0 %v3018
        %v3057 = vpop.f32.mrb[0].mxu0
        %v3058 = vadd.f32 0.0, %v3057
        %v3059 = vpop.f32.mrb[0].mxu0
        %v3060 = vpop.f32.mrb[0].mxu0
        %v3061 = vpop.f32.mrb[0].mxu0
        %3062 = vdwg.mxu0
        %v3064 = vsel %vm1164, %v2919, 0
        %v3067 = vsel %vm1384, %v2924, 0
        %3069 = vmatprep.subr.bf16.mxu0 0
        %3070 = vmatpush1.bf16.msra.mxu0 %v3067
        %3071 = vmatprep.subr.bf16.mxu0 0
        %3072 = vmatpush1.bf16.msra.mxu0 0
        %3073 = vmatprep.subr.bf16.mxu0 0
        %3074 = vmatpush1.bf16.msra.mxu0 0
        %3075 = vmatprep.subr.bf16.mxu0 0
        %3076 = vmatpush1.bf16.msra.mxu0 0
        %3077 = vmatprep.subr.bf16.mxu0 0
        %3078 = vmatpush1.bf16.msra.mxu0 0
        %3079 = vmatprep.subr.bf16.mxu0 0
        %3080 = vmatpush1.bf16.msra.mxu0 0
        %3081 = vmatprep.subr.bf16.mxu0 0
        %3082 = vmatpush1.bf16.msra.mxu0 0
        %3083 = vmatprep.subr.bf16.mxu0 0
        %3084 = vmatpush1.bf16.msra.mxu0 0
        %3085 = vmatprep.subr.bf16.mxu0 0
        %3086 = vmatpush1.bf16.msra.mxu0 0
        %3087 = vmatprep.subr.bf16.mxu0 0
        %3088 = vmatpush1.bf16.msra.mxu0 0
        %3089 = vmatprep.subr.bf16.mxu0 0
        %3090 = vmatpush1.bf16.msra.mxu0 0
        %3091 = vmatprep.subr.bf16.mxu0 0
        %3092 = vmatpush1.bf16.msra.mxu0 0
        %3093 = vmatprep.subr.bf16.mxu0 0
        %3094 = vmatpush1.bf16.msra.mxu0 0
        %3095 = vmatprep.subr.bf16.mxu0 0
        %3096 = vmatpush1.bf16.msra.mxu0 0
        %3097 = vmatprep.subr.bf16.mxu0 0
        %3098 = vmatpush1.bf16.msra.mxu0 0
        %3099 = vmatprep.subr.bf16.mxu0 0
        %3100 = vmatpush1.bf16.msra.mxu0 0
        %3101 = vmatprep.mubr.bf16.mxu0 0
        %3102 = vmatmul.mubr.bf16.gmra.mrb[0].mxu0 %v3064
        %v3103 = vpop.f32.mrb[0].mxu0
        %v3104 = vadd.f32 0.0, %v3103
        %v3105 = vpop.f32.mrb[0].mxu0
        %v3106 = vpop.f32.mrb[0].mxu0
        %v3107 = vpop.f32.mrb[0].mxu0
        %3108 = vdwg.mxu0
        %v3109 = vsel %vm614, %v2966, 0.0
        %v3110 = vsel %vm614, %v3012, 0.0
        %v3111 = vadd.f32 %v3109, %v3110
        %v3112 = vsel %vm614, %v3058, 0.0
        %v3113 = vadd.f32 %v3111, %v3112
        %v3114 = vsel %vm614, %v3104, 0.0
        %v3115 = vadd.f32 %v3113, %v3114
        %s3116 = scalar_lea.vmem %s7, 1
        %v3117 = vld [vmem:[%s3116] sm:$0x1]
        %v3119 = vlaneseq
        %v3120 = vshrl.u32 %v3119, 7
        %v3121 = vsub.s32 0, %v3120
        %v3122 = vrot.slane %v3117, %v3121
        %v3124 = vadd.f32 %v3115, %v3122
        %v3125 = vadd.f32 %v1992, %v3124
        %s3126 = scalar_lea.vmem %s8, 1
        %v3127 = vld [vmem:[%s3126] sm:$0x1]
        %s3128 = scalar_lea.vmem %s9, 1
        %v3129 = vld [vmem:[%s3128] sm:$0x1]
        %v3130 = vsel %vm614, %v3125, 0.0
        %3131 = vadd.xlane.f32.xlu0 %v3130
        %v3132 = vpop.xlane.xlu0 %3131
        %v3133 = vmul.f32 %v3132, %v618
        %v3134 = vsub.f32 %v3125, %v3133
        %v3135 = vmul.f32 %v3134, %v3134
        %v3136 = vsel %vm614, %v3135, 0.0
        %3137 = vadd.xlane.f32.xlu0 %v3136
        %v3138 = vpop.xlane.xlu0 %3137
        %v3139 = vmul.f32 %v3138, %v618
        %v3140 = vadd.f32 %v3139, 1e-12
        %v3141 = vrsqrt.pop %v3140
        %v3142 = vmul.f32 %v3134, %v3141
        %v3144 = vlaneseq
        %v3145 = vshrl.u32 %v3144, 7
        %v3146 = vsub.s32 0, %v3145
        %v3147 = vrot.slane %v3127, %v3146
        %v3149 = vmul.f32 %v3142, %v3147
        %v3151 = vlaneseq
        %v3152 = vshrl.u32 %v3151, 7
        %v3153 = vsub.s32 0, %v3152
        %v3154 = vrot.slane %v3129, %v3153
        %v3156 = vadd.f32 %v3149, %v3154
        %v3157 = vpack.c.bf16 %v3156, %v3156
        %s3158 = scalar_lea.vmem %s10, 16
        %v3159 = vld [vmem:[%s3158] sm:$0xf]
        %v3160 = vld [vmem:[%s3158 + $0x4] sm:$0xf]
        %v3161 = vld [vmem:[%s3158 + $0x8] sm:$0xf]
        %v3162 = vld [vmem:[%s3158 + $0xc] sm:$0xf]
        %s3163 = scalar_lea.vmem %s11, 1
        %v3164 = vld [vmem:[%s3163] sm:$0x1]
        %v3166 = vlaneseq
        %v3167 = vshrl.u32 %v3166, 7
        %v3168 = vsub.s32 0, %v3167
        %v3169 = vrot.slane %v3164, %v3168
        %v3175 = vunpack.c.l.b16 %v3159
        %v3176 = vunpack.c.l.b16 %v3160
        %v3177 = vunpack.c.l.b16 %v3161
        %v3178 = vunpack.c.l.b16 %v3162
        %v3179 = vpack.c.b16 %v3176, %v3175
        %v3180 = vpack.c.b16 %v3178, %v3177
        %v3184 = vsel %vm614, %v3157, 0
        %3186 = vmatprep.subr.bf16.mxu0 0
        %3187 = vmatpush1.bf16.msra.mxu0 %v3179
        %3188 = vmatprep.subr.bf16.mxu0 0
        %3189 = vmatpush1.bf16.msra.mxu0 %v3180
        %3190 = vmatprep.subr.bf16.mxu0 0
        %3191 = vmatpush1.bf16.msra.mxu0 0
        %3192 = vmatprep.subr.bf16.mxu0 0
        %3193 = vmatpush1.bf16.msra.mxu0 0
        %3194 = vmatprep.subr.bf16.mxu0 0
        %3195 = vmatpush1.bf16.msra.mxu0 0
        %3196 = vmatprep.subr.bf16.mxu0 0
        %3197 = vmatpush1.bf16.msra.mxu0 0
        %3198 = vmatprep.subr.bf16.mxu0 0
        %3199 = vmatpush1.bf16.msra.mxu0 0
        %3200 = vmatprep.subr.bf16.mxu0 0
        %3201 = vmatpush1.bf16.msra.mxu0 0
        %3202 = vmatprep.subr.bf16.mxu0 0
        %3203 = vmatpush1.bf16.msra.mxu0 0
        %3204 = vmatprep.subr.bf16.mxu0 0
        %3205 = vmatpush1.bf16.msra.mxu0 0
        %3206 = vmatprep.subr.bf16.mxu0 0
        %3207 = vmatpush1.bf16.msra.mxu0 0
        %3208 = vmatprep.subr.bf16.mxu0 0
        %3209 = vmatpush1.bf16.msra.mxu0 0
        %3210 = vmatprep.subr.bf16.mxu0 0
        %3211 = vmatpush1.bf16.msra.mxu0 0
        %3212 = vmatprep.subr.bf16.mxu0 0
        %3213 = vmatpush1.bf16.msra.mxu0 0
        %3214 = vmatprep.subr.bf16.mxu0 0
        %3215 = vmatpush1.bf16.msra.mxu0 0
        %3216 = vmatprep.subr.bf16.mxu0 0
        %3217 = vmatpush1.bf16.msra.mxu0 0
        %3218 = vmatprep.mubr.bf16.mxu0 0
        %3219 = vmatmul.mubr.bf16.gmra.mrb[0].mxu0 %v3184
        %v3220 = vpop.f32.mrb[0].mxu0
        %v3221 = vadd.f32 %v3169, %v3220
        %v3222 = vpop.f32.mrb[0].mxu0
        %v3223 = vpop.f32.mrb[0].mxu0
        %v3224 = vpop.f32.mrb[0].mxu0
        %3225 = vdwg.mxu0
        %v3226 = vmul.f32 %v3221, %v3221
        %v3227 = vmul.f32 %v3221, %v3226
        %v3228 = vmul.f32 %v3227, 0.044715
        %v3229 = vadd.f32 %v3221, %v3228
        %v3230 = vmul.f32 %v3229, 0.7978846
        %v3231 = vtanh.pop %v3230
        %v3232 = vadd.f32 %v3231, 1.0
        %v3233 = vmul.f32 %v3232, 0.5
        %v3234 = vmul.f32 %v3221, %v3233
        %v3235 = vpack.c.bf16 %v3234, %v3234
        %s3236 = scalar_lea.vmem %s12, 32
        %v3237 = vld [vmem:[%s3236] sm:$0xf]
        %v3238 = vld [vmem:[%s3236 + $0x4] sm:$0xf]
        %v3239 = vld [vmem:[%s3236 + $0x8] sm:$0xf]
        %v3240 = vld [vmem:[%s3236 + $0xc] sm:$0xf]
        %v3241 = vld [vmem:[%s3236 + $0x10] sm:$0xf]
        %v3242 = vld [vmem:[%s3236 + $0x14] sm:$0xf]
        %v3243 = vld [vmem:[%s3236 + $0x18] sm:$0xf]
        %v3244 = vld [vmem:[%s3236 + $0x1c] sm:$0xf]
        %s3245 = scalar_lea.vmem %s13, 1
        %v3246 = vld [vmem:[%s3245] sm:$0x1]
        %v3248 = vlaneseq
        %v3249 = vshrl.u32 %v3248, 7
        %v3250 = vsub.s32 0, %v3249
        %v3251 = vrot.slane %v3246, %v3250
        %v3261 = vunpack.c.l.b16 %v3237
        %v3262 = vunpack.c.l.b16 %v3238
        %v3263 = vunpack.c.l.b16 %v3239
        %v3264 = vunpack.c.l.b16 %v3240
        %v3265 = vunpack.c.l.b16 %v3241
        %v3266 = vunpack.c.l.b16 %v3242
        %v3267 = vunpack.c.l.b16 %v3243
        %v3268 = vunpack.c.l.b16 %v3244
        %v3269 = vpack.c.b16 %v3262, %v3261
        %v3270 = vpack.c.b16 %v3264, %v3263
        %v3271 = vpack.c.b16 %v3266, %v3265
        %v3272 = vpack.c.b16 %v3268, %v3267
        %v3278 = vsel %vm1919, %v3235, 0
        %3280 = vmatprep.subr.bf16.mxu0 0
        %3281 = vmatpush1.bf16.msra.mxu0 %v3269
        %3282 = vmatprep.subr.bf16.mxu0 0
        %3283 = vmatpush1.bf16.msra.mxu0 %v3270
        %3284 = vmatprep.subr.bf16.mxu0 0
        %3285 = vmatpush1.bf16.msra.mxu0 %v3271
        %3286 = vmatprep.subr.bf16.mxu0 0
        %3287 = vmatpush1.bf16.msra.mxu0 %v3272
        %3288 = vmatprep.subr.bf16.mxu0 0
        %3289 = vmatpush1.bf16.msra.mxu0 0
        %3290 = vmatprep.subr.bf16.mxu0 0
        %3291 = vmatpush1.bf16.msra.mxu0 0
        %3292 = vmatprep.subr.bf16.mxu0 0
        %3293 = vmatpush1.bf16.msra.mxu0 0
        %3294 = vmatprep.subr.bf16.mxu0 0
        %3295 = vmatpush1.bf16.msra.mxu0 0
        %3296 = vmatprep.subr.bf16.mxu0 0
        %3297 = vmatpush1.bf16.msra.mxu0 0
        %3298 = vmatprep.subr.bf16.mxu0 0
        %3299 = vmatpush1.bf16.msra.mxu0 0
        %3300 = vmatprep.subr.bf16.mxu0 0
        %3301 = vmatpush1.bf16.msra.mxu0 0
        %3302 = vmatprep.subr.bf16.mxu0 0
        %3303 = vmatpush1.bf16.msra.mxu0 0
        %3304 = vmatprep.subr.bf16.mxu0 0
        %3305 = vmatpush1.bf16.msra.mxu0 0
        %3306 = vmatprep.subr.bf16.mxu0 0
        %3307 = vmatpush1.bf16.msra.mxu0 0
        %3308 = vmatprep.subr.bf16.mxu0 0
        %3309 = vmatpush1.bf16.msra.mxu0 0
        %3310 = vmatprep.subr.bf16.mxu0 0
        %3311 = vmatpush1.bf16.msra.mxu0 0
        %3312 = vmatprep.mubr.bf16.mxu0 0
        %3313 = vmatmul.mubr.bf16.gmra.mrb[0].mxu0 %v3278
        %v3314 = vpop.f32.mrb[0].mxu0
        %v3315 = vadd.f32 %v3251, %v3314
        %v3316 = vpop.f32.mrb[0].mxu0
        %v3317 = vpop.f32.mrb[0].mxu0
        %v3318 = vpop.f32.mrb[0].mxu0
        %3319 = vdwg.mxu0
        %v3320 = vadd.f32 %v3156, %v3315
        %s3321 = scalar_lea.vmem %s14, 1
        %v3322 = vld [vmem:[%s3321] sm:$0x1]
        %s3323 = scalar_lea.vmem %s15, 1
        %v3324 = vld [vmem:[%s3323] sm:$0x1]
        %v3325 = vsel %vm614, %v3320, 0.0
        %3326 = vadd.xlane.f32.xlu0 %v3325
        %v3327 = vpop.xlane.xlu0 %3326
        %v3328 = vmul.f32 %v3327, %v618
        %v3329 = vsub.f32 %v3320, %v3328
        %v3330 = vmul.f32 %v3329, %v3329
        %v3331 = vsel %vm614, %v3330, 0.0
        %3332 = vadd.xlane.f32.xlu0 %v3331
        %v3333 = vpop.xlane.xlu0 %3332
        %v3334 = vmul.f32 %v3333, %v618
        %v3335 = vadd.f32 %v3334, 1e-12
        %v3336 = vrsqrt.pop %v3335
        %v3337 = vmul.f32 %v3329, %v3336
        %v3339 = vlaneseq
        %v3340 = vshrl.u32 %v3339, 7
        %v3341 = vsub.s32 0, %v3340
        %v3342 = vrot.slane %v3322, %v3341
        %v3344 = vmul.f32 %v3337, %v3342
        %v3346 = vlaneseq
        %v3347 = vshrl.u32 %v3346, 7
        %v3348 = vsub.s32 0, %v3347
        %v3349 = vrot.slane %v3324, %v3348
        %v3351 = vadd.f32 %v3344, %v3349
        %v3352 = vpack.c.bf16 %v3351, %v3351
        %v3353 = vld [vmem:[%s16] sm:$0xf]
        %v3354 = vld [vmem:[%s16 + $0x4] sm:$0xf]
        %v3355 = vld [vmem:[%s16 + $0x8] sm:$0xf]
        %v3356 = vld [vmem:[%s16 + $0xc] sm:$0xf]
        %v3357 = vld [vmem:[%s17] sm:$0x1]
        %v3362 = vunpack.c.l.b16 %v3353
        %v3363 = vunpack.c.l.b16 %v3354
        %v3364 = vunpack.c.l.b16 %v3355
        %v3365 = vunpack.c.l.b16 %v3356
        %v3366 = vpack.c.b16 %v3363, %v3362
        %v3367 = vpack.c.b16 %v3365, %v3364
        %v3371 = vsel %vm614, %v3352, 0
        %3373 = vmatprep.subr.bf16.mxu0 0
        %3374 = vmatpush1.bf16.msra.mxu0 %v3366
        %3375 = vmatprep.subr.bf16.mxu0 0
        %3376 = vmatpush1.bf16.msra.mxu0 %v3367
        %3377 = vmatprep.subr.bf16.mxu0 0
        %3378 = vmatpush1.bf16.msra.mxu0 0
        %3379 = vmatprep.subr.bf16.mxu0 0
        %3380 = vmatpush1.bf16.msra.mxu0 0
        %3381 = vmatprep.subr.bf16.mxu0 0
        %3382 = vmatpush1.bf16.msra.mxu0 0
        %3383 = vmatprep.subr.bf16.mxu0 0
        %3384 = vmatpush1.bf16.msra.mxu0 0
        %3385 = vmatprep.subr.bf16.mxu0 0
        %3386 = vmatpush1.bf16.msra.mxu0 0
        %3387 = vmatprep.subr.bf16.mxu0 0
        %3388 = vmatpush1.bf16.msra.mxu0 0
        %3389 = vmatprep.subr.bf16.mxu0 0
        %3390 = vmatpush1.bf16.msra.mxu0 0
        %3391 = vmatprep.subr.bf16.mxu0 0
        %3392 = vmatpush1.bf16.msra.mxu0 0
        %3393 = vmatprep.subr.bf16.mxu0 0
        %3394 = vmatpush1.bf16.msra.mxu0 0
        %3395 = vmatprep.subr.bf16.mxu0 0
        %3396 = vmatpush1.bf16.msra.mxu0 0
        %3397 = vmatprep.subr.bf16.mxu0 0
        %3398 = vmatpush1.bf16.msra.mxu0 0
        %3399 = vmatprep.subr.bf16.mxu0 0
        %3400 = vmatpush1.bf16.msra.mxu0 0
        %3401 = vmatprep.subr.bf16.mxu0 0
        %3402 = vmatpush1.bf16.msra.mxu0 0
        %3403 = vmatprep.subr.bf16.mxu0 0
        %3404 = vmatpush1.bf16.msra.mxu0 0
        %3405 = vmatprep.mubr.bf16.mxu0 0
        %3406 = vmatmul.mubr.bf16.gmra.mrb[0].mxu0 %v3371
        %v3407 = vpop.f32.mrb[0].mxu0
        %v3408 = vadd.f32 %v3357, %v3407
        %v3409 = vpop.f32.mrb[0].mxu0
        %v3410 = vpop.f32.mrb[0].mxu0
        %v3411 = vpop.f32.mrb[0].mxu0
        %3412 = vdwg.mxu0
        %v3413 = vtanh.pop %v3408
        %v3414 = vpack.c.bf16 %v3413, %v3413
        %v3415 = vld [vmem:[%s18] sm:$0xf]
        %v3416 = vld [vmem:[%s18 + $0x4] sm:$0xf]
        %v3417 = vld [vmem:[%s18 + $0x8] sm:$0xf]
        %v3418 = vld [vmem:[%s18 + $0xc] sm:$0xf]
        %v3419 = vld [vmem:[%s19] sm:$0x1]
        %v3424 = vunpack.c.l.b16 %v3415
        %v3425 = vunpack.c.l.b16 %v3416
        %v3426 = vunpack.c.l.b16 %v3417
        %v3427 = vunpack.c.l.b16 %v3418
        %v3428 = vpack.c.b16 %v3425, %v3424
        %v3429 = vpack.c.b16 %v3427, %v3426
        %v3433 = vsel %vm614, %v3414, 0
        %3435 = vmatprep.subr.bf16.mxu0 0
        %3436 = vmatpush1.bf16.msra.mxu0 %v3428
        %3437 = vmatprep.subr.bf16.mxu0 0
        %3438 = vmatpush1.bf16.msra.mxu0 %v3429
        %3439 = vmatprep.subr.bf16.mxu0 0
        %3440 = vmatpush1.bf16.msra.mxu0 0
        %3441 = vmatprep.subr.bf16.mxu0 0
        %3442 = vmatpush1.bf16.msra.mxu0 0
        %3443 = vmatprep.subr.bf16.mxu0 0
        %3444 = vmatpush1.bf16.msra.mxu0 0
        %3445 = vmatprep.subr.bf16.mxu0 0
        %3446 = vmatpush1.bf16.msra.mxu0 0
        %3447 = vmatprep.subr.bf16.mxu0 0
        %3448 = vmatpush1.bf16.msra.mxu0 0
        %3449 = vmatprep.subr.bf16.mxu0 0
        %3450 = vmatpush1.bf16.msra.mxu0 0
        %3451 = vmatprep.subr.bf16.mxu0 0
        %3452 = vmatpush1.bf16.msra.mxu0 0
        %3453 = vmatprep.subr.bf16.mxu0 0
        %3454 = vmatpush1.bf16.msra.mxu0 0
        %3455 = vmatprep.subr.bf16.mxu0 0
        %3456 = vmatpush1.bf16.msra.mxu0 0
        %3457 = vmatprep.subr.bf16.mxu0 0
        %3458 = vmatpush1.bf16.msra.mxu0 0
        %3459 = vmatprep.subr.bf16.mxu0 0
        %3460 = vmatpush1.bf16.msra.mxu0 0
        %3461 = vmatprep.subr.bf16.mxu0 0
        %3462 = vmatpush1.bf16.msra.mxu0 0
        %3463 = vmatprep.subr.bf16.mxu0 0
        %3464 = vmatpush1.bf16.msra.mxu0 0
        %3465 = vmatprep.subr.bf16.mxu0 0
        %3466 = vmatpush1.bf16.msra.mxu0 0
        %3467 = vmatprep.mubr.bf16.mxu0 0
        %3468 = vmatmul.mubr.bf16.gmra.mrb[0].mxu0 %v3433
        %v3469 = vpop.f32.mrb[0].mxu0
        %v3470 = vadd.f32 %v3419, %v3469
        %v3471 = vpop.f32.mrb[0].mxu0
        %v3472 = vpop.f32.mrb[0].mxu0
        %v3473 = vpop.f32.mrb[0].mxu0
        %3474 = vdwg.mxu0
        %vm3475 = vcmask 8192
        %3476 = vst.msk [vmem:[%s599] sm:$0x1] %vm3475, %v3470
        %s3477 = sand.u32 %s452, 1
        %s3478 = scalar_lea.sflag [#allocation5], %s3477
        %s3479 = sand.u32 %s452, 1
        %s3480 = scalar_lea.vmem [#allocation4], %s3479
        // Predicated region
        $region97: #{bert_classifier_forward.1} parent=95 // pred_check
          %p3481 = pneg %p462
        $region98: #{bert_classifier_forward.1} parent=95 // pred_check_branch
          %3483 = sbr.rel (%p3481) target = $region100
        $region99: #{bert_classifier_forward.1} parent=95 // pred_region
          %s3485 = ssub.s32 16, 16
          %3486 = vsyncadd %s3478, %s3485
          %s3487 = smul.addr %s40, 16
          %s3488 = scalar_lea.hbm %s20, %s3487
          %s3490 = sshll.u32 %s3480, 4
          %s3491 = int_to_ptr.vmem [resolvable:$true] %s3490
          %3493 = dma.vmem_to_hbm [thread:$0]  %s3491, 16, %s3488, %s3478
        $region100: #{bert_classifier_forward.1} parent=95 // pred_fallthru
          _
      $region96: #{bert_classifier_forward.1} parent=5 // pred_fallthru
        _
      %p3494 = scmp.le.s32.totalorder 2, %s35
      // Predicated region
      $region101: #{bert_classifier_forward.1} parent=5 // pred_check
        %p3495 = pneg %p3494
      $region102: #{bert_classifier_forward.1} parent=5 // pred_check_branch
        %3497 = sbr.rel (%p3495) target = $region104
      $region103: #{bert_classifier_forward.1} parent=5 // pred_region
        %s3498 = ssub.s32 %s35, 2
        // Predicated region
        $region105: #{bert_classifier_forward.1} parent=103 // pred_check
          %p3499 = pneg %p468
        $region106: #{bert_classifier_forward.1} parent=103 // pred_check_branch
          %3501 = sbr.rel (%p3499) target = $region108
        $region107: #{bert_classifier_forward.1} parent=103 // pred_region
          %s3502 = sand.u32 %s453, 1
          %s3503 = scalar_lea.sflag [#allocation5], %s3502
          %s3504 = sand.u32 %s453, 1
          %s3505 = scalar_lea.vmem [#allocation4], %s3504
          %3506 = dma.done %s3503, 16
        $region108: #{bert_classifier_forward.1} parent=103 // pred_fallthru
          _
      $region104: #{bert_classifier_forward.1} parent=5 // pred_fallthru
        _
    $region6: #{bert_classifier_forward.1} parent=1 // loop_footer
      %s39 = sadd.s32 1, %s35
    $region7: #{bert_classifier_forward.1} parent=1 // loop_footer_branch
      %34 = sbr.rel target = $region3
    $region8: #{bert_classifier_forward.1} parent=1 // loop_exit
      _
    %3507 = vsyncpa [#allocation5], 1
    %s3508 = scalar_lea.sflag [#allocation5], 1
    %3509 = vsyncpa %s3508, 1

</llo_original>
